<compile_context>
chip_gen: v6e
topology: v6e:2x2x1
jax: 0.10.0
libtpu: 0.0.40
codegen_flags: <defaults>
</compile_context>

<pallas_src>
from functools import partial
from typing import List, NamedTuple, Optional

import jax
import jax.numpy as jnp
from jax import lax
from jax.experimental import pallas as pl
from jax.experimental.pallas import tpu as pltpu


class AstarOutput(NamedTuple):
    histories: jax.Array
    paths: jax.Array
    intermediate_results: Optional[List[dict]] = None


def _astar_kernel(cost_ref, start_ref, goal_ref, obst_ref, row_ref, col_ref,
                  hist_ref, path_ref,
                  open_ref, g_ref, par_ref, hw_ref,
                  *, g_ratio, t_max, tb_factor, width, steps_per_check):
    f32 = jnp.float32
    i32 = jnp.int32

    B, HW = cost_ref.shape
    W = width
    nbits = max((HW - 1).bit_length(), 1)
    idx_mask = (1 << nbits) - 1
    key_max = jnp.int32(0x7FFFFFFF)

    row = row_ref[...]                                   # (1, HW) f32 row index
    col = col_ref[...]                                   # (1, HW) f32 col index
    fidx = lax.broadcasted_iota(i32, (1, HW), 1)         # (1, HW) flat cell index

    goal = goal_ref[...]
    cost = cost_ref[...]

    # goal cell index per sample (one-time reduce)
    goal_idx = jnp.min(jnp.where(goal > 0.5, fidx, HW - 1),
                       axis=-1, keepdims=True)           # (B, 1) i32

    # ---- heuristic (get_heuristic) + cost, scaled by (1 - g_ratio); invariant ----
    goal_r = jnp.sum(row * goal, axis=-1, keepdims=True)
    goal_c = jnp.sum(col * goal, axis=-1, keepdims=True)
    dx = jnp.abs(row - goal_r)
    dy = jnp.abs(col - goal_c)
    h = dx + dy - jnp.minimum(dx, dy) + tb_factor * jnp.sqrt(dx * dx + dy * dy) + cost
    hw_ref[...] = (1.0 - g_ratio) * h

    # ---- VMEM-resident state init (output refs double as state) ----
    open_ref[...] = start_ref[...]
    hist_ref[...] = jnp.zeros((B, HW), f32)
    g_ref[...] = jnp.zeros((B, HW), f32)
    par_ref[...] = jnp.broadcast_to(goal_idx, (B, HW))

    pow2 = (W & (W - 1)) == 0
    shift = W.bit_length() - 1

    def step(tv, dv):
        # One A* expansion step.  Ref writes are predicated on `active`, so the
        # (at most K-1) steps traced after the solve / after t_max are no-ops,
        # which keeps the reference's break semantics exact.
        active = jnp.logical_and(dv == 0, tv < t_max)    # (1,1) bool, stays vector

        open_m = open_ref[...]
        hist = hist_ref[...]
        g = g_ref[...]
        parents = par_ref[...]
        hw = hw_ref[...]
        costv = cost_ref[...]
        obst = obst_ref[...]

        # node selection: single packed argmin reduce over open cells
        # (== argmax(exp(-f/sqrt(W)) * open) of the reference, exp is monotone).
        f = g_ratio * g + hw                              # f >= 0 for valid inputs
        fbits = pltpu.bitcast(f, i32)
        key = jnp.bitwise_or(jnp.bitwise_and(fbits, jnp.int32(~idx_mask)), fidx)
        key = jnp.where(open_m > 0.5, key, key_max)
        min_key = jnp.min(key, axis=-1, keepdims=True)    # (B,1)  -- reduce #1
        sel_idx = jnp.bitwise_and(min_key, jnp.int32(idx_mask))
        sel_idx = jnp.minimum(sel_idx, HW - 1)            # guard: empty open set

        selected = fidx == sel_idx                        # (B,HW) one-hot
        sel_f = selected.astype(f32)
        is_unsolved = (sel_idx != goal_idx).astype(f32)   # (B,1)

        hist_n = jnp.maximum(hist, sel_f)
        open_n = jnp.maximum(open_m - is_unsolved * sel_f, 0.0)

        # expand(selected): 3x3 index window around the selected cell (pure VPU).
        if pow2:
            sel_r = (sel_idx >> shift).astype(f32)
            sel_c = jnp.bitwise_and(sel_idx, W - 1).astype(f32)
        else:
            sf = sel_idx.astype(f32)
            q = jnp.floor(sf / float(W))
            q = q - (q * float(W) > sf).astype(f32)       # exact div fixup
            sel_r = q
            sel_c = sf - q * float(W)
        near = jnp.logical_and(jnp.abs(row - sel_r) <= 1.0,
                               jnp.abs(col - sel_c) <= 1.0)
        nbr_raw = jnp.logical_and(near, jnp.logical_not(selected)).astype(f32)
        nbr = nbr_raw * obst

        # g2 = expand((g+cost)*selected) == (g+cost)[selected] * expand(selected)
        # TODO(synk): a per-sample scalar VMEM gather would drop this last reduce;
        # kept as a one-hot reduce-sum for lowering robustness.
        gc_sel = jnp.sum((g + costv) * sel_f, axis=-1, keepdims=True)   # reduce #2
        g2 = gc_sel * nbr_raw

        idx = ((1.0 - open_n) * (1.0 - hist_n)
               + open_n * (g > g2).astype(f32)) * nbr
        g_n = g2 * idx + g * (1.0 - idx)
        open_n = jnp.maximum(open_n, idx)
        par_n = jnp.where(idx > 0.5, sel_idx, parents)

        # predicated in-place state update (no per-step vector->scalar sync)
        open_ref[...] = jnp.where(active, open_n, open_m)
        hist_ref[...] = jnp.where(active, hist_n, hist)
        g_ref[...] = jnp.where(active, g_n, g)
        par_ref[...] = jnp.where(active, par_n, parents)

        solved_now = jnp.sum(is_unsolved, axis=0, keepdims=True) < 0.5   # (1,1)
        dv = jnp.maximum(dv, jnp.logical_and(active, solved_now).astype(i32))
        tv = tv + active.astype(i32)
        return tv, dv

    def cond(carry):
        tv, dv = carry
        go = jnp.logical_and(tv < t_max, dv == 0)
        return jnp.sum(go.astype(i32)) > 0                # one v->s sync per block

    def body(carry):
        tv, dv = carry
        for _ in range(steps_per_check):                  # trace-time unrolled
            tv, dv = step(tv, dv)
        return tv, dv

    tv, _ = lax.while_loop(cond, body,
                           (jnp.zeros((1, 1), i32), jnp.zeros((1, 1), i32)))

    # ---- backtrack: walk parents from the goal for exactly current_t steps ----
    # TODO(synk): a scalar pointer-chase (per-sample dynamic loads) would be cheaper
    # on big maps; kept vectorized here for lowering robustness.
    t_final = tv - 1                                      # == torch's `t` at break
    goal_b = goal > 0.5
    path_ref[...] = goal_b.astype(i32)
    loc0 = jnp.sum(jnp.where(goal_b, par_ref[...], 0), axis=-1, keepdims=True)

    def bt_cond(carry):
        s, _ = carry
        return jnp.sum((s < t_final).astype(i32)) > 0

    def bt_body(carry):
        s, loc = carry
        onehot = fidx == loc
        path_ref[...] = jnp.where(onehot, 1, path_ref[...])
        loc = jnp.sum(jnp.where(onehot, par_ref[...], 0), axis=-1, keepdims=True)
        return s + 1, loc

    lax.while_loop(bt_cond, bt_body, (jnp.zeros((1, 1), i32), loc0))


def differentiable_astar(cost_maps, start_maps, goal_maps, obstacles_maps,
                         g_ratio: float = 0.5, Tmax: float = 1.0,
                         training: bool = False, steps_per_check: int = 8):
    assert cost_maps.ndim == 4 and start_maps.ndim == 4
    assert goal_maps.ndim == 4 and obstacles_maps.ndim == 4
    B, _, H, W = cost_maps.shape
    HW = H * W
    f32 = jnp.float32

    cost = cost_maps[:, 0].reshape(B, HW).astype(f32)
    start = start_maps[:, 0].reshape(B, HW).astype(f32)
    goal = goal_maps[:, 0].reshape(B, HW).astype(f32)
    obst = obstacles_maps[:, 0].reshape(B, HW).astype(f32)

    # Pad the batch to a multiple of 8 so every f32 sublane is used.  Padding rows
    # are degenerate always-solved problems (start == goal at cell 0, no traversable
    # neighbors), so they are solved at step 0 forever and never delay the global
    # early exit nor perturb the real samples.
    B_pad = max(8, -(-B // 8) * 8)
    pad = B_pad - B
    if pad:
        onehot0 = jnp.zeros((pad, HW), f32).at[:, 0].set(1.0)
        cost = jnp.concatenate([cost, jnp.ones((pad, HW), f32)], axis=0)
        start = jnp.concatenate([start, onehot0], axis=0)
        goal = jnp.concatenate([goal, onehot0], axis=0)
        obst = jnp.concatenate([obst, jnp.zeros((pad, HW), f32)], axis=0)

    cells = jnp.arange(HW, dtype=jnp.int32)
    row_map = (cells // W).astype(f32)[None, :]           # (1, HW)
    col_map = (cells % W).astype(f32)[None, :]            # (1, HW)

    # eval-mode semantics of the nn.Module: Tmax_steps = int(1.0 * size * size)
    t_max = int((Tmax if training else 1.0) * W * W)

    kernel = partial(_astar_kernel, g_ratio=float(g_ratio), t_max=t_max,
                     tb_factor=0.001, width=W,
                     steps_per_check=int(max(1, steps_per_check)))

    vmem = pl.BlockSpec(memory_space=pltpu.MemorySpace.VMEM)
    # ~16 full maps resident (inputs + outputs + state + temps); keep headroom.
    map_bytes = B_pad * HW * 4
    vmem_limit = int(min(max(16 * map_bytes + (4 << 20), 32 << 20), 128 << 20))

    hist, path = pl.pallas_call(
        kernel,
        out_shape=(jax.ShapeDtypeStruct((B_pad, HW), f32),
                   jax.ShapeDtypeStruct((B_pad, HW), jnp.int32)),
        in_specs=[vmem] * 6,
        out_specs=(vmem, vmem),
        scratch_shapes=[pltpu.VMEM((B_pad, HW), f32),        # open set
                        pltpu.VMEM((B_pad, HW), f32),        # g
                        pltpu.VMEM((B_pad, HW), jnp.int32),  # parents
                        pltpu.VMEM((B_pad, HW), f32)],       # (1-g_ratio)*(h+cost)
        compiler_params=pltpu.CompilerParams(vmem_limit_bytes=vmem_limit),
    )(cost, start, goal, obst, row_map, col_map)

    hist = hist[:B].reshape(B, 1, H, W)
    path = path[:B].reshape(B, 1, H, W)
    # path dtype is int32 (torch returns int64; int64 is not TPU-friendly).
    # TODO(synk): store_intermediate_results (python list of per-step dicts) has
    # no clean Pallas equivalent and is not supported.
    return AstarOutput(hist, path, None)


if __name__ == "__main__":
    key = jax.random.PRNGKey(0)
    B, H, W = 2, 16, 16

    cost_maps = jax.random.uniform(key, (B, 1, H, W), jnp.float32, 1.0, 2.0)

    start_maps = jnp.zeros((B, 1, H, W), jnp.float32)
    start_maps = start_maps.at[0, 0, 1, 1].set(1.0)
    start_maps = start_maps.at[1, 0, 2, 12].set(1.0)

    goal_maps = jnp.zeros((B, 1, H, W), jnp.float32)
    goal_maps = goal_maps.at[0, 0, H - 2, W - 2].set(1.0)
    goal_maps = goal_maps.at[1, 0, H - 3, 2].set(1.0)

    obstacles_maps = jnp.ones((B, 1, H, W), jnp.float32)

    out = differentiable_astar(cost_maps, start_maps, goal_maps, obstacles_maps)
    jax.block_until_ready((out.histories, out.paths))

    assert out.histories.shape == (B, 1, H, W)
    assert out.paths.shape == (B, 1, H, W)
    # sanity: the start cell was expanded and both goal cells are on their paths
    assert float(out.histories[0, 0, 1, 1]) == 1.0
    assert int(out.paths[0, 0, H - 2, W - 2]) == 1
    assert int(out.paths[1, 0, H - 3, 2]) == 1
    print("KERNEL_OK")
</pallas_src>

<mosaic_0001>
module attributes {stable_mosaic.version = 11 : i64} {
  func.func @_astar_kernel(%arg0: memref<8x256xf32, #tpu.memory_space<vmem>>, %arg1: memref<8x256xf32, #tpu.memory_space<vmem>>, %arg2: memref<8x256xf32, #tpu.memory_space<vmem>>, %arg3: memref<8x256xf32, #tpu.memory_space<vmem>>, %arg4: memref<1x256xf32, #tpu.memory_space<vmem>>, %arg5: memref<1x256xf32, #tpu.memory_space<vmem>>, %arg6: memref<8x256xf32, #tpu.memory_space<vmem>>, %arg7: memref<8x256xi32, #tpu.memory_space<vmem>>, %arg8: memref<8x256xf32, #tpu.memory_space<vmem>>, %arg9: memref<8x256xf32, #tpu.memory_space<vmem>>, %arg10: memref<8x256xi32, #tpu.memory_space<vmem>>, %arg11: memref<8x256xf32, #tpu.memory_space<vmem>>) attributes {dimension_semantics = [], scalar_prefetch = 0 : i64, scratch_operands = 4 : i64, tpu.core_type = #tpu.core_type<tc>} {
    %c0 = arith.constant 0 : index
    %c0_0 = arith.constant 0 : index
    %0 = vector.load %arg4[%c0, %c0_0] : memref<1x256xf32, #tpu.memory_space<vmem>>, vector<1x256xf32>
    %c0_1 = arith.constant 0 : index
    %c0_2 = arith.constant 0 : index
    %1 = vector.load %arg5[%c0_1, %c0_2] : memref<1x256xf32, #tpu.memory_space<vmem>>, vector<1x256xf32>
    %2 = tpu.iota {dimensions = array<i32: 1>} : vector<1x256xi32>
    %c0_3 = arith.constant 0 : index
    %c0_4 = arith.constant 0 : index
    %3 = vector.load %arg2[%c0_3, %c0_4] : memref<8x256xf32, #tpu.memory_space<vmem>>, vector<8x256xf32>
    %c0_5 = arith.constant 0 : index
    %c0_6 = arith.constant 0 : index
    %4 = vector.load %arg0[%c0_5, %c0_6] : memref<8x256xf32, #tpu.memory_space<vmem>>, vector<8x256xf32>
    %cst = arith.constant 5.000000e-01 : f32
    %5 = vector.broadcast %cst : f32 to vector<8x256xf32>
    %6 = arith.cmpf ogt, %3, %5 : vector<8x256xf32>
    %c255_i32 = arith.constant 255 : i32
    %7 = vector.shape_cast %2 : vector<1x256xi32> to vector<1x256xi32>
    %8 = vector.broadcast %7 : vector<1x256xi32> to vector<8x256xi32>
    %9 = vector.broadcast %c255_i32 : i32 to vector<8x256xi32>
    %10 = arith.select %6, %8, %9 : vector<8x256xi1>, vector<8x256xi32>
    %cst_7 = arith.constant dense<2147483647> : vector<8xi32>
    %11 = vector.multi_reduction <minsi>, %10, %cst_7 [1] : vector<8x256xi32> to vector<8xi32>
    %12 = vector.shape_cast %11 : vector<8xi32> to vector<8x1xi32>
    %13 = vector.broadcast %0 : vector<1x256xf32> to vector<8x256xf32>
    %14 = arith.mulf %13, %3 : vector<8x256xf32>
    %cst_8 = arith.constant dense<0.000000e+00> : vector<8xf32>
    %15 = vector.multi_reduction <add>, %14, %cst_8 [1] : vector<8x256xf32> to vector<8xf32>
    %16 = vector.shape_cast %15 : vector<8xf32> to vector<8x1xf32>
    %17 = vector.broadcast %1 : vector<1x256xf32> to vector<8x256xf32>
    %18 = arith.mulf %17, %3 : vector<8x256xf32>
    %cst_9 = arith.constant dense<0.000000e+00> : vector<8xf32>
    %19 = vector.multi_reduction <add>, %18, %cst_9 [1] : vector<8x256xf32> to vector<8xf32>
    %20 = vector.shape_cast %19 : vector<8xf32> to vector<8x1xf32>
    %21 = vector.broadcast %0 : vector<1x256xf32> to vector<8x256xf32>
    %22 = vector.broadcast %16 : vector<8x1xf32> to vector<8x256xf32>
    %23 = arith.subf %21, %22 : vector<8x256xf32>
    %24 = math.absf %23 : vector<8x256xf32>
    %25 = vector.broadcast %1 : vector<1x256xf32> to vector<8x256xf32>
    %26 = vector.broadcast %20 : vector<8x1xf32> to vector<8x256xf32>
    %27 = arith.subf %25, %26 : vector<8x256xf32>
    %28 = math.absf %27 : vector<8x256xf32>
    %29 = arith.addf %24, %28 : vector<8x256xf32>
    %30 = arith.minimumf %24, %28 : vector<8x256xf32>
    %31 = arith.subf %29, %30 : vector<8x256xf32>
    %32 = arith.mulf %24, %24 : vector<8x256xf32>
    %33 = arith.mulf %28, %28 : vector<8x256xf32>
    %34 = arith.addf %32, %33 : vector<8x256xf32>
    %35 = math.sqrt %34 : vector<8x256xf32>
    %cst_10 = arith.constant 1.000000e-03 : f32
    %36 = vector.broadcast %cst_10 : f32 to vector<8x256xf32>
    %37 = arith.mulf %36, %35 : vector<8x256xf32>
    %38 = arith.addf %31, %37 : vector<8x256xf32>
    %39 = arith.addf %38, %4 : vector<8x256xf32>
    %cst_11 = arith.constant 5.000000e-01 : f32
    %40 = vector.broadcast %cst_11 : f32 to vector<8x256xf32>
    %41 = arith.mulf %40, %39 : vector<8x256xf32>
    %c0_12 = arith.constant 0 : index
    %c0_13 = arith.constant 0 : index
    %42 = vector.load %arg11[%c0_12, %c0_13] : memref<8x256xf32, #tpu.memory_space<vmem>>, vector<8x256xf32>
    tpu.vector_store %arg11[%c0_12, %c0_13], %41 {strides = array<i32>} : memref<8x256xf32, #tpu.memory_space<vmem>>, vector<8x256xf32>,
    %c0_14 = arith.constant 0 : index
    %c0_15 = arith.constant 0 : index
    %43 = vector.load %arg1[%c0_14, %c0_15] : memref<8x256xf32, #tpu.memory_space<vmem>>, vector<8x256xf32>
    %c0_16 = arith.constant 0 : index
    %c0_17 = arith.constant 0 : index
    %44 = vector.load %arg8[%c0_16, %c0_17] : memref<8x256xf32, #tpu.memory_space<vmem>>, vector<8x256xf32>
    tpu.vector_store %arg8[%c0_16, %c0_17], %43 {strides = array<i32>} : memref<8x256xf32, #tpu.memory_space<vmem>>, vector<8x256xf32>,
    %cst_18 = arith.constant 0.000000e+00 : f32
    %45 = vector.broadcast %cst_18 : f32 to vector<8x256xf32>
    %c0_19 = arith.constant 0 : index
    %c0_20 = arith.constant 0 : index
    %46 = vector.load %arg6[%c0_19, %c0_20] : memref<8x256xf32, #tpu.memory_space<vmem>>, vector<8x256xf32>
    tpu.vector_store %arg6[%c0_19, %c0_20], %45 {strides = array<i32>} : memref<8x256xf32, #tpu.memory_space<vmem>>, vector<8x256xf32>,
    %cst_21 = arith.constant 0.000000e+00 : f32
    %47 = vector.broadcast %cst_21 : f32 to vector<8x256xf32>
    %c0_22 = arith.constant 0 : index
    %c0_23 = arith.constant 0 : index
    %48 = vector.load %arg9[%c0_22, %c0_23] : memref<8x256xf32, #tpu.memory_space<vmem>>, vector<8x256xf32>
    tpu.vector_store %arg9[%c0_22, %c0_23], %47 {strides = array<i32>} : memref<8x256xf32, #tpu.memory_space<vmem>>, vector<8x256xf32>,
    %49 = vector.shape_cast %12 : vector<8x1xi32> to vector<8x1xi32>
    %50 = vector.broadcast %49 : vector<8x1xi32> to vector<8x256xi32>
    %c0_24 = arith.constant 0 : index
    %c0_25 = arith.constant 0 : index
    %51 = vector.load %arg10[%c0_24, %c0_25] : memref<8x256xi32, #tpu.memory_space<vmem>>, vector<8x256xi32>
    tpu.vector_store %arg10[%c0_24, %c0_25], %50 {strides = array<i32>} : memref<8x256xi32, #tpu.memory_space<vmem>>, vector<8x256xi32>,
    %c0_i32 = arith.constant 0 : i32
    %52 = vector.broadcast %c0_i32 : i32 to vector<1x1xi32>
    %c0_i32_26 = arith.constant 0 : i32
    %53 = vector.broadcast %c0_i32_26 : i32 to vector<1x1xi32>
    %c2147483647_i32 = arith.constant 2147483647 : i32
    %54:2 = scf.while (%arg12 = %52, %arg13 = %53) : (vector<1x1xi32>, vector<1x1xi32>) -> (vector<1x1xi32>, vector<1x1xi32>) {
      %c256_i32 = arith.constant 256 : i32
      %68 = vector.broadcast %c256_i32 : i32 to vector<1x1xi32>
      %69 = arith.cmpi slt, %arg12, %68 : vector<1x1xi32>
      %c0_i32_35 = arith.constant 0 : i32
      %70 = vector.broadcast %c0_i32_35 : i32 to vector<1x1xi32>
      %71 = arith.cmpi eq, %arg13, %70 : vector<1x1xi32>
      %72 = arith.andi %69, %71 : vector<1x1xi1>
      %73 = arith.extui %72 : vector<1x1xi1> to vector<1x1xi32>
      %74 = vector.shape_cast %73 : vector<1x1xi32> to vector<1x1x1xi32>
      %cst_36 = arith.constant dense<0> : vector<1xi32>
      %75 = vector.multi_reduction <add>, %74, %cst_36 [1, 2] : vector<1x1x1xi32> to vector<1xi32>
      %76 = vector.shape_cast %75 : vector<1xi32> to vector<1x1x1xi32>
      %77 = vector.extract %76[0, 0, 0] : i32 from vector<1x1x1xi32>
      %c0_i32_37 = arith.constant 0 : i32
      %78 = arith.cmpi sgt, %77, %c0_i32_37 : i32
      scf.condition(%78) %arg12, %arg13 : vector<1x1xi32>, vector<1x1xi32>
    } do {
    ^bb0(%arg12: vector<1x1xi32>, %arg13: vector<1x1xi32>):
      %c0_i32_35 = arith.constant 0 : i32
      %68 = vector.broadcast %c0_i32_35 : i32 to vector<1x1xi32>
      %69 = arith.cmpi eq, %arg13, %68 : vector<1x1xi32>
      %c256_i32 = arith.constant 256 : i32
      %70 = vector.broadcast %c256_i32 : i32 to vector<1x1xi32>
      %71 = arith.cmpi slt, %arg12, %70 : vector<1x1xi32>
      %72 = arith.andi %69, %71 : vector<1x1xi1>
      %c0_36 = arith.constant 0 : index
      %c0_37 = arith.constant 0 : index
      %73 = vector.load %arg8[%c0_36, %c0_37] : memref<8x256xf32, #tpu.memory_space<vmem>>, vector<8x256xf32>
      %c0_38 = arith.constant 0 : index
      %c0_39 = arith.constant 0 : index
      %74 = vector.load %arg6[%c0_38, %c0_39] : memref<8x256xf32, #tpu.memory_space<vmem>>, vector<8x256xf32>
      %c0_40 = arith.constant 0 : index
      %c0_41 = arith.constant 0 : index
      %75 = vector.load %arg9[%c0_40, %c0_41] : memref<8x256xf32, #tpu.memory_space<vmem>>, vector<8x256xf32>
      %c0_42 = arith.constant 0 : index
      %c0_43 = arith.constant 0 : index
      %76 = vector.load %arg10[%c0_42, %c0_43] : memref<8x256xi32, #tpu.memory_space<vmem>>, vector<8x256xi32>
      %c0_44 = arith.constant 0 : index
      %c0_45 = arith.constant 0 : index
      %77 = vector.load %arg11[%c0_44, %c0_45] : memref<8x256xf32, #tpu.memory_space<vmem>>, vector<8x256xf32>
      %c0_46 = arith.constant 0 : index
      %c0_47 = arith.constant 0 : index
      %78 = vector.load %arg0[%c0_46, %c0_47] : memref<8x256xf32, #tpu.memory_space<vmem>>, vector<8x256xf32>
      %c0_48 = arith.constant 0 : index
      %c0_49 = arith.constant 0 : index
      %79 = vector.load %arg3[%c0_48, %c0_49] : memref<8x256xf32, #tpu.memory_space<vmem>>, vector<8x256xf32>
      %cst_50 = arith.constant 5.000000e-01 : f32
      %80 = vector.broadcast %cst_50 : f32 to vector<8x256xf32>
      %81 = arith.mulf %80, %75 : vector<8x256xf32>
      %82 = arith.addf %81, %77 : vector<8x256xf32>
      %83 = tpu.bitcast %82 : vector<8x256xf32> -> vector<8x256xi32>
      %c-256_i32 = arith.constant -256 : i32
      %84 = vector.broadcast %c-256_i32 : i32 to vector<8x256xi32>
      %85 = arith.andi %83, %84 : vector<8x256xi32>
      %86 = vector.broadcast %2 : vector<1x256xi32> to vector<8x256xi32>
      %87 = arith.ori %85, %86 : vector<8x256xi32>
      %cst_51 = arith.constant 5.000000e-01 : f32
      %88 = vector.broadcast %cst_51 : f32 to vector<8x256xf32>
      %89 = arith.cmpf ogt, %73, %88 : vector<8x256xf32>
      %90 = vector.broadcast %c2147483647_i32 : i32 to vector<8x256xi32>
      %91 = arith.select %89, %87, %90 : vector<8x256xi1>, vector<8x256xi32>
      %cst_52 = arith.constant dense<2147483647> : vector<8xi32>
      %92 = vector.multi_reduction <minsi>, %91, %cst_52 [1] : vector<8x256xi32> to vector<8xi32>
      %93 = vector.shape_cast %92 : vector<8xi32> to vector<8x1xi32>
      %c255_i32_53 = arith.constant 255 : i32
      %94 = vector.broadcast %c255_i32_53 : i32 to vector<8x1xi32>
      %95 = arith.andi %93, %94 : vector<8x1xi32>
      %c255_i32_54 = arith.constant 255 : i32
      %96 = vector.broadcast %c255_i32_54 : i32 to vector<8x1xi32>
      %97 = arith.minsi %95, %96 : vector<8x1xi32>
      %98 = vector.broadcast %2 : vector<1x256xi32> to vector<8x256xi32>
      %99 = vector.broadcast %97 : vector<8x1xi32> to vector<8x256xi32>
      %100 = arith.cmpi eq, %98, %99 : vector<8x256xi32>
      %101 = arith.extui %100 : vector<8x256xi1> to vector<8x256xi32>
      %102 = arith.sitofp %101 : vector<8x256xi32> to vector<8x256xf32>
      %103 = arith.cmpi ne, %97, %12 : vector<8x1xi32>
      %104 = arith.extui %103 : vector<8x1xi1> to vector<8x1xi32>
      %105 = arith.sitofp %104 : vector<8x1xi32> to vector<8x1xf32>
      %106 = arith.maximumf %74, %102 : vector<8x256xf32>
      %107 = vector.broadcast %105 : vector<8x1xf32> to vector<8x256xf32>
      %108 = arith.mulf %107, %102 : vector<8x256xf32>
      %109 = arith.subf %73, %108 : vector<8x256xf32>
      %cst_55 = arith.constant 0.000000e+00 : f32
      %110 = vector.broadcast %cst_55 : f32 to vector<8x256xf32>
      %111 = arith.maximumf %109, %110 : vector<8x256xf32>
      %c4_i32 = arith.constant 4 : i32
      %112 = vector.broadcast %c4_i32 : i32 to vector<8x1xi32>
      %113 = arith.shrsi %97, %112 : vector<8x1xi32>
      %114 = arith.sitofp %113 : vector<8x1xi32> to vector<8x1xf32>
      %c15_i32 = arith.constant 15 : i32
      %115 = vector.broadcast %c15_i32 : i32 to vector<8x1xi32>
      %116 = arith.andi %97, %115 : vector<8x1xi32>
      %117 = arith.sitofp %116 : vector<8x1xi32> to vector<8x1xf32>
      %118 = vector.broadcast %0 : vector<1x256xf32> to vector<8x256xf32>
      %119 = vector.broadcast %114 : vector<8x1xf32> to vector<8x256xf32>
      %120 = arith.subf %118, %119 : vector<8x256xf32>
      %121 = math.absf %120 : vector<8x256xf32>
      %cst_56 = arith.constant 1.000000e+00 : f32
      %122 = vector.broadcast %cst_56 : f32 to vector<8x256xf32>
      %123 = arith.cmpf ole, %121, %122 : vector<8x256xf32>
      %124 = vector.broadcast %1 : vector<1x256xf32> to vector<8x256xf32>
      %125 = vector.broadcast %117 : vector<8x1xf32> to vector<8x256xf32>
      %126 = arith.subf %124, %125 : vector<8x256xf32>
      %127 = math.absf %126 : vector<8x256xf32>
      %cst_57 = arith.constant 1.000000e+00 : f32
      %128 = vector.broadcast %cst_57 : f32 to vector<8x256xf32>
      %129 = arith.cmpf ole, %127, %128 : vector<8x256xf32>
      %130 = arith.andi %123, %129 : vector<8x256xi1>
      %cst_58 = arith.constant dense<true> : vector<8x256xi1>
      %131 = arith.xori %100, %cst_58 : vector<8x256xi1>
      %132 = arith.andi %130, %131 : vector<8x256xi1>
      %133 = arith.extui %132 : vector<8x256xi1> to vector<8x256xi32>
      %134 = arith.sitofp %133 : vector<8x256xi32> to vector<8x256xf32>
      %135 = arith.mulf %134, %79 : vector<8x256xf32>
      %136 = arith.addf %75, %78 : vector<8x256xf32>
      %137 = arith.mulf %136, %102 : vector<8x256xf32>
      %cst_59 = arith.constant dense<0.000000e+00> : vector<8xf32>
      %138 = vector.multi_reduction <add>, %137, %cst_59 [1] : vector<8x256xf32> to vector<8xf32>
      %139 = vector.shape_cast %138 : vector<8xf32> to vector<8x1xf32>
      %140 = vector.broadcast %139 : vector<8x1xf32> to vector<8x256xf32>
      %141 = arith.mulf %140, %134 : vector<8x256xf32>
      %cst_60 = arith.constant 1.000000e+00 : f32
      %142 = vector.broadcast %cst_60 : f32 to vector<8x256xf32>
      %143 = arith.subf %142, %111 : vector<8x256xf32>
      %cst_61 = arith.constant 1.000000e+00 : f32
      %144 = vector.broadcast %cst_61 : f32 to vector<8x256xf32>
      %145 = arith.subf %144, %106 : vector<8x256xf32>
      %146 = arith.mulf %143, %145 : vector<8x256xf32>
      %147 = arith.cmpf ogt, %75, %141 : vector<8x256xf32>
      %148 = arith.extui %147 : vector<8x256xi1> to vector<8x256xi32>
      %149 = arith.sitofp %148 : vector<8x256xi32> to vector<8x256xf32>
      %150 = arith.mulf %111, %149 : vector<8x256xf32>
      %151 = arith.addf %146, %150 : vector<8x256xf32>
      %152 = arith.mulf %151, %135 : vector<8x256xf32>
      %153 = arith.mulf %141, %152 : vector<8x256xf32>
      %cst_62 = arith.constant 1.000000e+00 : f32
      %154 = vector.broadcast %cst_62 : f32 to vector<8x256xf32>
      %155 = arith.subf %154, %152 : vector<8x256xf32>
      %156 = arith.mulf %75, %155 : vector<8x256xf32>
      %157 = arith.addf %153, %156 : vector<8x256xf32>
      %158 = arith.maximumf %111, %152 : vector<8x256xf32>
      %cst_63 = arith.constant 5.000000e-01 : f32
      %159 = vector.broadcast %cst_63 : f32 to vector<8x256xf32>
      %160 = arith.cmpf ogt, %152, %159 : vector<8x256xf32>
      %161 = vector.shape_cast %97 : vector<8x1xi32> to vector<8x1xi32>
      %162 = vector.broadcast %161 : vector<8x1xi32> to vector<8x256xi32>
      %163 = arith.select %160, %162, %76 : vector<8x256xi1>, vector<8x256xi32>
      %164 = vector.shape_cast %72 : vector<1x1xi1> to vector<1x1xi1>
      %165 = vector.broadcast %164 : vector<1x1xi1> to vector<8x256xi1>
      %166 = arith.select %165, %158, %73 : vector<8x256xi1>, vector<8x256xf32>
      %c0_64 = arith.constant 0 : index
      %c0_65 = arith.constant 0 : index
      %167 = vector.load %arg8[%c0_64, %c0_65] : memref<8x256xf32, #tpu.memory_space<vmem>>, vector<8x256xf32>
      tpu.vector_store %arg8[%c0_64, %c0_65], %166 {strides = array<i32>} : memref<8x256xf32, #tpu.memory_space<vmem>>, vector<8x256xf32>,
      %168 = vector.shape_cast %72 : vector<1x1xi1> to vector<1x1xi1>
      %169 = vector.broadcast %168 : vector<1x1xi1> to vector<8x256xi1>
      %170 = arith.select %169, %106, %74 : vector<8x256xi1>, vector<8x256xf32>
      %c0_66 = arith.constant 0 : index
      %c0_67 = arith.constant 0 : index
      %171 = vector.load %arg6[%c0_66, %c0_67] : memref<8x256xf32, #tpu.memory_space<vmem>>, vector<8x256xf32>
      tpu.vector_store %arg6[%c0_66, %c0_67], %170 {strides = array<i32>} : memref<8x256xf32, #tpu.memory_space<vmem>>, vector<8x256xf32>,
      %172 = vector.shape_cast %72 : vector<1x1xi1> to vector<1x1xi1>
      %173 = vector.broadcast %172 : vector<1x1xi1> to vector<8x256xi1>
      %174 = arith.select %173, %157, %75 : vector<8x256xi1>, vector<8x256xf32>
      %c0_68 = arith.constant 0 : index
      %c0_69 = arith.constant 0 : index
      %175 = vector.load %arg9[%c0_68, %c0_69] : memref<8x256xf32, #tpu.memory_space<vmem>>, vector<8x256xf32>
      tpu.vector_store %arg9[%c0_68, %c0_69], %174 {strides = array<i32>} : memref<8x256xf32, #tpu.memory_space<vmem>>, vector<8x256xf32>,
      %176 = vector.shape_cast %72 : vector<1x1xi1> to vector<1x1xi1>
      %177 = vector.broadcast %176 : vector<1x1xi1> to vector<8x256xi1>
      %178 = arith.select %177, %163, %76 : vector<8x256xi1>, vector<8x256xi32>
      %c0_70 = arith.constant 0 : index
      %c0_71 = arith.constant 0 : index
      %179 = vector.load %arg10[%c0_70, %c0_71] : memref<8x256xi32, #tpu.memory_space<vmem>>, vector<8x256xi32>
      tpu.vector_store %arg10[%c0_70, %c0_71], %178 {strides = array<i32>} : memref<8x256xi32, #tpu.memory_space<vmem>>, vector<8x256xi32>,
      %cst_72 = arith.constant dense<0.000000e+00> : vector<1xf32>
      %180 = vector.multi_reduction <add>, %105, %cst_72 [0] : vector<8x1xf32> to vector<1xf32>
      %181 = vector.shape_cast %180 : vector<1xf32> to vector<1x1xf32>
      %cst_73 = arith.constant 5.000000e-01 : f32
      %182 = vector.broadcast %cst_73 : f32 to vector<1x1xf32>
      %183 = arith.cmpf olt, %181, %182 : vector<1x1xf32>
      %184 = arith.andi %72, %183 : vector<1x1xi1>
      %185 = arith.extui %184 : vector<1x1xi1> to vector<1x1xi32>
      %186 = arith.maxsi %arg13, %185 : vector<1x1xi32>
      %187 = arith.extui %72 : vector<1x1xi1> to vector<1x1xi32>
      %188 = arith.addi %arg12, %187 : vector<1x1xi32>
      %c0_i32_74 = arith.constant 0 : i32
      %189 = vector.broadcast %c0_i32_74 : i32 to vector<1x1xi32>
      %190 = arith.cmpi eq, %186, %189 : vector<1x1xi32>
      %c256_i32_75 = arith.constant 256 : i32
      %191 = vector.broadcast %c256_i32_75 : i32 to vector<1x1xi32>
      %192 = arith.cmpi slt, %188, %191 : vector<1x1xi32>
      %193 = arith.andi %190, %192 : vector<1x1xi1>
      %c0_76 = arith.constant 0 : index
      %c0_77 = arith.constant 0 : index
      %194 = vector.load %arg8[%c0_76, %c0_77] : memref<8x256xf32, #tpu.memory_space<vmem>>, vector<8x256xf32>
      %c0_78 = arith.constant 0 : index
      %c0_79 = arith.constant 0 : index
      %195 = vector.load %arg6[%c0_78, %c0_79] : memref<8x256xf32, #tpu.memory_space<vmem>>, vector<8x256xf32>
      %c0_80 = arith.constant 0 : index
      %c0_81 = arith.constant 0 : index
      %196 = vector.load %arg9[%c0_80, %c0_81] : memref<8x256xf32, #tpu.memory_space<vmem>>, vector<8x256xf32>
      %c0_82 = arith.constant 0 : index
      %c0_83 = arith.constant 0 : index
      %197 = vector.load %arg10[%c0_82, %c0_83] : memref<8x256xi32, #tpu.memory_space<vmem>>, vector<8x256xi32>
      %c0_84 = arith.constant 0 : index
      %c0_85 = arith.constant 0 : index
      %198 = vector.load %arg11[%c0_84, %c0_85] : memref<8x256xf32, #tpu.memory_space<vmem>>, vector<8x256xf32>
      %c0_86 = arith.constant 0 : index
      %c0_87 = arith.constant 0 : index
      %199 = vector.load %arg0[%c0_86, %c0_87] : memref<8x256xf32, #tpu.memory_space<vmem>>, vector<8x256xf32>
      %c0_88 = arith.constant 0 : index
      %c0_89 = arith.constant 0 : index
      %200 = vector.load %arg3[%c0_88, %c0_89] : memref<8x256xf32, #tpu.memory_space<vmem>>, vector<8x256xf32>
      %cst_90 = arith.constant 5.000000e-01 : f32
      %201 = vector.broadcast %cst_90 : f32 to vector<8x256xf32>
      %202 = arith.mulf %201, %196 : vector<8x256xf32>
      %203 = arith.addf %202, %198 : vector<8x256xf32>
      %204 = tpu.bitcast %203 : vector<8x256xf32> -> vector<8x256xi32>
      %c-256_i32_91 = arith.constant -256 : i32
      %205 = vector.broadcast %c-256_i32_91 : i32 to vector<8x256xi32>
      %206 = arith.andi %204, %205 : vector<8x256xi32>
      %207 = vector.broadcast %2 : vector<1x256xi32> to vector<8x256xi32>
      %208 = arith.ori %206, %207 : vector<8x256xi32>
      %cst_92 = arith.constant 5.000000e-01 : f32
      %209 = vector.broadcast %cst_92 : f32 to vector<8x256xf32>
      %210 = arith.cmpf ogt, %194, %209 : vector<8x256xf32>
      %211 = vector.broadcast %c2147483647_i32 : i32 to vector<8x256xi32>
      %212 = arith.select %210, %208, %211 : vector<8x256xi1>, vector<8x256xi32>
      %cst_93 = arith.constant dense<2147483647> : vector<8xi32>
      %213 = vector.multi_reduction <minsi>, %212, %cst_93 [1] : vector<8x256xi32> to vector<8xi32>
      %214 = vector.shape_cast %213 : vector<8xi32> to vector<8x1xi32>
      %c255_i32_94 = arith.constant 255 : i32
      %215 = vector.broadcast %c255_i32_94 : i32 to vector<8x1xi32>
      %216 = arith.andi %214, %215 : vector<8x1xi32>
      %c255_i32_95 = arith.constant 255 : i32
      %217 = vector.broadcast %c255_i32_95 : i32 to vector<8x1xi32>
      %218 = arith.minsi %216, %217 : vector<8x1xi32>
      %219 = vector.broadcast %2 : vector<1x256xi32> to vector<8x256xi32>
      %220 = vector.broadcast %218 : vector<8x1xi32> to vector<8x256xi32>
      %221 = arith.cmpi eq, %219, %220 : vector<8x256xi32>
      %222 = arith.extui %221 : vector<8x256xi1> to vector<8x256xi32>
      %223 = arith.sitofp %222 : vector<8x256xi32> to vector<8x256xf32>
      %224 = arith.cmpi ne, %218, %12 : vector<8x1xi32>
      %225 = arith.extui %224 : vector<8x1xi1> to vector<8x1xi32>
      %226 = arith.sitofp %225 : vector<8x1xi32> to vector<8x1xf32>
      %227 = arith.maximumf %195, %223 : vector<8x256xf32>
      %228 = vector.broadcast %226 : vector<8x1xf32> to vector<8x256xf32>
      %229 = arith.mulf %228, %223 : vector<8x256xf32>
      %230 = arith.subf %194, %229 : vector<8x256xf32>
      %cst_96 = arith.constant 0.000000e+00 : f32
      %231 = vector.broadcast %cst_96 : f32 to vector<8x256xf32>
      %232 = arith.maximumf %230, %231 : vector<8x256xf32>
      %c4_i32_97 = arith.constant 4 : i32
      %233 = vector.broadcast %c4_i32_97 : i32 to vector<8x1xi32>
      %234 = arith.shrsi %218, %233 : vector<8x1xi32>
      %235 = arith.sitofp %234 : vector<8x1xi32> to vector<8x1xf32>
      %c15_i32_98 = arith.constant 15 : i32
      %236 = vector.broadcast %c15_i32_98 : i32 to vector<8x1xi32>
      %237 = arith.andi %218, %236 : vector<8x1xi32>
      %238 = arith.sitofp %237 : vector<8x1xi32> to vector<8x1xf32>
      %239 = vector.broadcast %0 : vector<1x256xf32> to vector<8x256xf32>
      %240 = vector.broadcast %235 : vector<8x1xf32> to vector<8x256xf32>
      %241 = arith.subf %239, %240 : vector<8x256xf32>
      %242 = math.absf %241 : vector<8x256xf32>
      %cst_99 = arith.constant 1.000000e+00 : f32
      %243 = vector.broadcast %cst_99 : f32 to vector<8x256xf32>
      %244 = arith.cmpf ole, %242, %243 : vector<8x256xf32>
      %245 = vector.broadcast %1 : vector<1x256xf32> to vector<8x256xf32>
      %246 = vector.broadcast %238 : vector<8x1xf32> to vector<8x256xf32>
      %247 = arith.subf %245, %246 : vector<8x256xf32>
      %248 = math.absf %247 : vector<8x256xf32>
      %cst_100 = arith.constant 1.000000e+00 : f32
      %249 = vector.broadcast %cst_100 : f32 to vector<8x256xf32>
      %250 = arith.cmpf ole, %248, %249 : vector<8x256xf32>
      %251 = arith.andi %244, %250 : vector<8x256xi1>
      %cst_101 = arith.constant dense<true> : vector<8x256xi1>
      %252 = arith.xori %221, %cst_101 : vector<8x256xi1>
      %253 = arith.andi %251, %252 : vector<8x256xi1>
      %254 = arith.extui %253 : vector<8x256xi1> to vector<8x256xi32>
      %255 = arith.sitofp %254 : vector<8x256xi32> to vector<8x256xf32>
      %256 = arith.mulf %255, %200 : vector<8x256xf32>
      %257 = arith.addf %196, %199 : vector<8x256xf32>
      %258 = arith.mulf %257, %223 : vector<8x256xf32>
      %cst_102 = arith.constant dense<0.000000e+00> : vector<8xf32>
      %259 = vector.multi_reduction <add>, %258, %cst_102 [1] : vector<8x256xf32> to vector<8xf32>
      %260 = vector.shape_cast %259 : vector<8xf32> to vector<8x1xf32>
      %261 = vector.broadcast %260 : vector<8x1xf32> to vector<8x256xf32>
      %262 = arith.mulf %261, %255 : vector<8x256xf32>
      %cst_103 = arith.constant 1.000000e+00 : f32
      %263 = vector.broadcast %cst_103 : f32 to vector<8x256xf32>
      %264 = arith.subf %263, %232 : vector<8x256xf32>
      %cst_104 = arith.constant 1.000000e+00 : f32
      %265 = vector.broadcast %cst_104 : f32 to vector<8x256xf32>
      %266 = arith.subf %265, %227 : vector<8x256xf32>
      %267 = arith.mulf %264, %266 : vector<8x256xf32>
      %268 = arith.cmpf ogt, %196, %262 : vector<8x256xf32>
      %269 = arith.extui %268 : vector<8x256xi1> to vector<8x256xi32>
      %270 = arith.sitofp %269 : vector<8x256xi32> to vector<8x256xf32>
      %271 = arith.mulf %232, %270 : vector<8x256xf32>
      %272 = arith.addf %267, %271 : vector<8x256xf32>
      %273 = arith.mulf %272, %256 : vector<8x256xf32>
      %274 = arith.mulf %262, %273 : vector<8x256xf32>
      %cst_105 = arith.constant 1.000000e+00 : f32
      %275 = vector.broadcast %cst_105 : f32 to vector<8x256xf32>
      %276 = arith.subf %275, %273 : vector<8x256xf32>
      %277 = arith.mulf %196, %276 : vector<8x256xf32>
      %278 = arith.addf %274, %277 : vector<8x256xf32>
      %279 = arith.maximumf %232, %273 : vector<8x256xf32>
      %cst_106 = arith.constant 5.000000e-01 : f32
      %280 = vector.broadcast %cst_106 : f32 to vector<8x256xf32>
      %281 = arith.cmpf ogt, %273, %280 : vector<8x256xf32>
      %282 = vector.shape_cast %218 : vector<8x1xi32> to vector<8x1xi32>
      %283 = vector.broadcast %282 : vector<8x1xi32> to vector<8x256xi32>
      %284 = arith.select %281, %283, %197 : vector<8x256xi1>, vector<8x256xi32>
      %285 = vector.shape_cast %193 : vector<1x1xi1> to vector<1x1xi1>
      %286 = vector.broadcast %285 : vector<1x1xi1> to vector<8x256xi1>
      %287 = arith.select %286, %279, %194 : vector<8x256xi1>, vector<8x256xf32>
      %c0_107 = arith.constant 0 : index
      %c0_108 = arith.constant 0 : index
      %288 = vector.load %arg8[%c0_107, %c0_108] : memref<8x256xf32, #tpu.memory_space<vmem>>, vector<8x256xf32>
      tpu.vector_store %arg8[%c0_107, %c0_108], %287 {strides = array<i32>} : memref<8x256xf32, #tpu.memory_space<vmem>>, vector<8x256xf32>,
      %289 = vector.shape_cast %193 : vector<1x1xi1> to vector<1x1xi1>
      %290 = vector.broadcast %289 : vector<1x1xi1> to vector<8x256xi1>
      %291 = arith.select %290, %227, %195 : vector<8x256xi1>, vector<8x256xf32>
      %c0_109 = arith.constant 0 : index
      %c0_110 = arith.constant 0 : index
      %292 = vector.load %arg6[%c0_109, %c0_110] : memref<8x256xf32, #tpu.memory_space<vmem>>, vector<8x256xf32>
      tpu.vector_store %arg6[%c0_109, %c0_110], %291 {strides = array<i32>} : memref<8x256xf32, #tpu.memory_space<vmem>>, vector<8x256xf32>,
      %293 = vector.shape_cast %193 : vector<1x1xi1> to vector<1x1xi1>
      %294 = vector.broadcast %293 : vector<1x1xi1> to vector<8x256xi1>
      %295 = arith.select %294, %278, %196 : vector<8x256xi1>, vector<8x256xf32>
      %c0_111 = arith.constant 0 : index
      %c0_112 = arith.constant 0 : index
      %296 = vector.load %arg9[%c0_111, %c0_112] : memref<8x256xf32, #tpu.memory_space<vmem>>, vector<8x256xf32>
      tpu.vector_store %arg9[%c0_111, %c0_112], %295 {strides = array<i32>} : memref<8x256xf32, #tpu.memory_space<vmem>>, vector<8x256xf32>,
      %297 = vector.shape_cast %193 : vector<1x1xi1> to vector<1x1xi1>
      %298 = vector.broadcast %297 : vector<1x1xi1> to vector<8x256xi1>
      %299 = arith.select %298, %284, %197 : vector<8x256xi1>, vector<8x256xi32>
      %c0_113 = arith.constant 0 : index
      %c0_114 = arith.constant 0 : index
      %300 = vector.load %arg10[%c0_113, %c0_114] : memref<8x256xi32, #tpu.memory_space<vmem>>, vector<8x256xi32>
      tpu.vector_store %arg10[%c0_113, %c0_114], %299 {strides = array<i32>} : memref<8x256xi32, #tpu.memory_space<vmem>>, vector<8x256xi32>,
      %cst_115 = arith.constant dense<0.000000e+00> : vector<1xf32>
      %301 = vector.multi_reduction <add>, %226, %cst_115 [0] : vector<8x1xf32> to vector<1xf32>
      %302 = vector.shape_cast %301 : vector<1xf32> to vector<1x1xf32>
      %cst_116 = arith.constant 5.000000e-01 : f32
      %303 = vector.broadcast %cst_116 : f32 to vector<1x1xf32>
      %304 = arith.cmpf olt, %302, %303 : vector<1x1xf32>
      %305 = arith.andi %193, %304 : vector<1x1xi1>
      %306 = arith.extui %305 : vector<1x1xi1> to vector<1x1xi32>
      %307 = arith.maxsi %186, %306 : vector<1x1xi32>
      %308 = arith.extui %193 : vector<1x1xi1> to vector<1x1xi32>
      %309 = arith.addi %188, %308 : vector<1x1xi32>
      %c0_i32_117 = arith.constant 0 : i32
      %310 = vector.broadcast %c0_i32_117 : i32 to vector<1x1xi32>
      %311 = arith.cmpi eq, %307, %310 : vector<1x1xi32>
      %c256_i32_118 = arith.constant 256 : i32
      %312 = vector.broadcast %c256_i32_118 : i32 to vector<1x1xi32>
      %313 = arith.cmpi slt, %309, %312 : vector<1x1xi32>
      %314 = arith.andi %311, %313 : vector<1x1xi1>
      %c0_119 = arith.constant 0 : index
      %c0_120 = arith.constant 0 : index
      %315 = vector.load %arg8[%c0_119, %c0_120] : memref<8x256xf32, #tpu.memory_space<vmem>>, vector<8x256xf32>
      %c0_121 = arith.constant 0 : index
      %c0_122 = arith.constant 0 : index
      %316 = vector.load %arg6[%c0_121, %c0_122] : memref<8x256xf32, #tpu.memory_space<vmem>>, vector<8x256xf32>
      %c0_123 = arith.constant 0 : index
      %c0_124 = arith.constant 0 : index
      %317 = vector.load %arg9[%c0_123, %c0_124] : memref<8x256xf32, #tpu.memory_space<vmem>>, vector<8x256xf32>
      %c0_125 = arith.constant 0 : index
      %c0_126 = arith.constant 0 : index
      %318 = vector.load %arg10[%c0_125, %c0_126] : memref<8x256xi32, #tpu.memory_space<vmem>>, vector<8x256xi32>
      %c0_127 = arith.constant 0 : index
      %c0_128 = arith.constant 0 : index
      %319 = vector.load %arg11[%c0_127, %c0_128] : memref<8x256xf32, #tpu.memory_space<vmem>>, vector<8x256xf32>
      %c0_129 = arith.constant 0 : index
      %c0_130 = arith.constant 0 : index
      %320 = vector.load %arg0[%c0_129, %c0_130] : memref<8x256xf32, #tpu.memory_space<vmem>>, vector<8x256xf32>
      %c0_131 = arith.constant 0 : index
      %c0_132 = arith.constant 0 : index
      %321 = vector.load %arg3[%c0_131, %c0_132] : memref<8x256xf32, #tpu.memory_space<vmem>>, vector<8x256xf32>
      %cst_133 = arith.constant 5.000000e-01 : f32
      %322 = vector.broadcast %cst_133 : f32 to vector<8x256xf32>
      %323 = arith.mulf %322, %317 : vector<8x256xf32>
      %324 = arith.addf %323, %319 : vector<8x256xf32>
      %325 = tpu.bitcast %324 : vector<8x256xf32> -> vector<8x256xi32>
      %c-256_i32_134 = arith.constant -256 : i32
      %326 = vector.broadcast %c-256_i32_134 : i32 to vector<8x256xi32>
      %327 = arith.andi %325, %326 : vector<8x256xi32>
      %328 = vector.broadcast %2 : vector<1x256xi32> to vector<8x256xi32>
      %329 = arith.ori %327, %328 : vector<8x256xi32>
      %cst_135 = arith.constant 5.000000e-01 : f32
      %330 = vector.broadcast %cst_135 : f32 to vector<8x256xf32>
      %331 = arith.cmpf ogt, %315, %330 : vector<8x256xf32>
      %332 = vector.broadcast %c2147483647_i32 : i32 to vector<8x256xi32>
      %333 = arith.select %331, %329, %332 : vector<8x256xi1>, vector<8x256xi32>
      %cst_136 = arith.constant dense<2147483647> : vector<8xi32>
      %334 = vector.multi_reduction <minsi>, %333, %cst_136 [1] : vector<8x256xi32> to vector<8xi32>
      %335 = vector.shape_cast %334 : vector<8xi32> to vector<8x1xi32>
      %c255_i32_137 = arith.constant 255 : i32
      %336 = vector.broadcast %c255_i32_137 : i32 to vector<8x1xi32>
      %337 = arith.andi %335, %336 : vector<8x1xi32>
      %c255_i32_138 = arith.constant 255 : i32
      %338 = vector.broadcast %c255_i32_138 : i32 to vector<8x1xi32>
      %339 = arith.minsi %337, %338 : vector<8x1xi32>
      %340 = vector.broadcast %2 : vector<1x256xi32> to vector<8x256xi32>
      %341 = vector.broadcast %339 : vector<8x1xi32> to vector<8x256xi32>
      %342 = arith.cmpi eq, %340, %341 : vector<8x256xi32>
      %343 = arith.extui %342 : vector<8x256xi1> to vector<8x256xi32>
      %344 = arith.sitofp %343 : vector<8x256xi32> to vector<8x256xf32>
      %345 = arith.cmpi ne, %339, %12 : vector<8x1xi32>
      %346 = arith.extui %345 : vector<8x1xi1> to vector<8x1xi32>
      %347 = arith.sitofp %346 : vector<8x1xi32> to vector<8x1xf32>
      %348 = arith.maximumf %316, %344 : vector<8x256xf32>
      %349 = vector.broadcast %347 : vector<8x1xf32> to vector<8x256xf32>
      %350 = arith.mulf %349, %344 : vector<8x256xf32>
      %351 = arith.subf %315, %350 : vector<8x256xf32>
      %cst_139 = arith.constant 0.000000e+00 : f32
      %352 = vector.broadcast %cst_139 : f32 to vector<8x256xf32>
      %353 = arith.maximumf %351, %352 : vector<8x256xf32>
      %c4_i32_140 = arith.constant 4 : i32
      %354 = vector.broadcast %c4_i32_140 : i32 to vector<8x1xi32>
      %355 = arith.shrsi %339, %354 : vector<8x1xi32>
      %356 = arith.sitofp %355 : vector<8x1xi32> to vector<8x1xf32>
      %c15_i32_141 = arith.constant 15 : i32
      %357 = vector.broadcast %c15_i32_141 : i32 to vector<8x1xi32>
      %358 = arith.andi %339, %357 : vector<8x1xi32>
      %359 = arith.sitofp %358 : vector<8x1xi32> to vector<8x1xf32>
      %360 = vector.broadcast %0 : vector<1x256xf32> to vector<8x256xf32>
      %361 = vector.broadcast %356 : vector<8x1xf32> to vector<8x256xf32>
      %362 = arith.subf %360, %361 : vector<8x256xf32>
      %363 = math.absf %362 : vector<8x256xf32>
      %cst_142 = arith.constant 1.000000e+00 : f32
      %364 = vector.broadcast %cst_142 : f32 to vector<8x256xf32>
      %365 = arith.cmpf ole, %363, %364 : vector<8x256xf32>
      %366 = vector.broadcast %1 : vector<1x256xf32> to vector<8x256xf32>
      %367 = vector.broadcast %359 : vector<8x1xf32> to vector<8x256xf32>
      %368 = arith.subf %366, %367 : vector<8x256xf32>
      %369 = math.absf %368 : vector<8x256xf32>
      %cst_143 = arith.constant 1.000000e+00 : f32
      %370 = vector.broadcast %cst_143 : f32 to vector<8x256xf32>
      %371 = arith.cmpf ole, %369, %370 : vector<8x256xf32>
      %372 = arith.andi %365, %371 : vector<8x256xi1>
      %cst_144 = arith.constant dense<true> : vector<8x256xi1>
      %373 = arith.xori %342, %cst_144 : vector<8x256xi1>
      %374 = arith.andi %372, %373 : vector<8x256xi1>
      %375 = arith.extui %374 : vector<8x256xi1> to vector<8x256xi32>
      %376 = arith.sitofp %375 : vector<8x256xi32> to vector<8x256xf32>
      %377 = arith.mulf %376, %321 : vector<8x256xf32>
      %378 = arith.addf %317, %320 : vector<8x256xf32>
      %379 = arith.mulf %378, %344 : vector<8x256xf32>
      %cst_145 = arith.constant dense<0.000000e+00> : vector<8xf32>
      %380 = vector.multi_reduction <add>, %379, %cst_145 [1] : vector<8x256xf32> to vector<8xf32>
      %381 = vector.shape_cast %380 : vector<8xf32> to vector<8x1xf32>
      %382 = vector.broadcast %381 : vector<8x1xf32> to vector<8x256xf32>
      %383 = arith.mulf %382, %376 : vector<8x256xf32>
      %cst_146 = arith.constant 1.000000e+00 : f32
      %384 = vector.broadcast %cst_146 : f32 to vector<8x256xf32>
      %385 = arith.subf %384, %353 : vector<8x256xf32>
      %cst_147 = arith.constant 1.000000e+00 : f32
      %386 = vector.broadcast %cst_147 : f32 to vector<8x256xf32>
      %387 = arith.subf %386, %348 : vector<8x256xf32>
      %388 = arith.mulf %385, %387 : vector<8x256xf32>
      %389 = arith.cmpf ogt, %317, %383 : vector<8x256xf32>
      %390 = arith.extui %389 : vector<8x256xi1> to vector<8x256xi32>
      %391 = arith.sitofp %390 : vector<8x256xi32> to vector<8x256xf32>
      %392 = arith.mulf %353, %391 : vector<8x256xf32>
      %393 = arith.addf %388, %392 : vector<8x256xf32>
      %394 = arith.mulf %393, %377 : vector<8x256xf32>
      %395 = arith.mulf %383, %394 : vector<8x256xf32>
      %cst_148 = arith.constant 1.000000e+00 : f32
      %396 = vector.broadcast %cst_148 : f32 to vector<8x256xf32>
      %397 = arith.subf %396, %394 : vector<8x256xf32>
      %398 = arith.mulf %317, %397 : vector<8x256xf32>
      %399 = arith.addf %395, %398 : vector<8x256xf32>
      %400 = arith.maximumf %353, %394 : vector<8x256xf32>
      %cst_149 = arith.constant 5.000000e-01 : f32
      %401 = vector.broadcast %cst_149 : f32 to vector<8x256xf32>
      %402 = arith.cmpf ogt, %394, %401 : vector<8x256xf32>
      %403 = vector.shape_cast %339 : vector<8x1xi32> to vector<8x1xi32>
      %404 = vector.broadcast %403 : vector<8x1xi32> to vector<8x256xi32>
      %405 = arith.select %402, %404, %318 : vector<8x256xi1>, vector<8x256xi32>
      %406 = vector.shape_cast %314 : vector<1x1xi1> to vector<1x1xi1>
      %407 = vector.broadcast %406 : vector<1x1xi1> to vector<8x256xi1>
      %408 = arith.select %407, %400, %315 : vector<8x256xi1>, vector<8x256xf32>
      %c0_150 = arith.constant 0 : index
      %c0_151 = arith.constant 0 : index
      %409 = vector.load %arg8[%c0_150, %c0_151] : memref<8x256xf32, #tpu.memory_space<vmem>>, vector<8x256xf32>
      tpu.vector_store %arg8[%c0_150, %c0_151], %408 {strides = array<i32>} : memref<8x256xf32, #tpu.memory_space<vmem>>, vector<8x256xf32>,
      %410 = vector.shape_cast %314 : vector<1x1xi1> to vector<1x1xi1>
      %411 = vector.broadcast %410 : vector<1x1xi1> to vector<8x256xi1>
      %412 = arith.select %411, %348, %316 : vector<8x256xi1>, vector<8x256xf32>
      %c0_152 = arith.constant 0 : index
      %c0_153 = arith.constant 0 : index
      %413 = vector.load %arg6[%c0_152, %c0_153] : memref<8x256xf32, #tpu.memory_space<vmem>>, vector<8x256xf32>
      tpu.vector_store %arg6[%c0_152, %c0_153], %412 {strides = array<i32>} : memref<8x256xf32, #tpu.memory_space<vmem>>, vector<8x256xf32>,
      %414 = vector.shape_cast %314 : vector<1x1xi1> to vector<1x1xi1>
      %415 = vector.broadcast %414 : vector<1x1xi1> to vector<8x256xi1>
      %416 = arith.select %415, %399, %317 : vector<8x256xi1>, vector<8x256xf32>
      %c0_154 = arith.constant 0 : index
      %c0_155 = arith.constant 0 : index
      %417 = vector.load %arg9[%c0_154, %c0_155] : memref<8x256xf32, #tpu.memory_space<vmem>>, vector<8x256xf32>
      tpu.vector_store %arg9[%c0_154, %c0_155], %416 {strides = array<i32>} : memref<8x256xf32, #tpu.memory_space<vmem>>, vector<8x256xf32>,
      %418 = vector.shape_cast %314 : vector<1x1xi1> to vector<1x1xi1>
      %419 = vector.broadcast %418 : vector<1x1xi1> to vector<8x256xi1>
      %420 = arith.select %419, %405, %318 : vector<8x256xi1>, vector<8x256xi32>
      %c0_156 = arith.constant 0 : index
      %c0_157 = arith.constant 0 : index
      %421 = vector.load %arg10[%c0_156, %c0_157] : memref<8x256xi32, #tpu.memory_space<vmem>>, vector<8x256xi32>
      tpu.vector_store %arg10[%c0_156, %c0_157], %420 {strides = array<i32>} : memref<8x256xi32, #tpu.memory_space<vmem>>, vector<8x256xi32>,
      %cst_158 = arith.constant dense<0.000000e+00> : vector<1xf32>
      %422 = vector.multi_reduction <add>, %347, %cst_158 [0] : vector<8x1xf32> to vector<1xf32>
      %423 = vector.shape_cast %422 : vector<1xf32> to vector<1x1xf32>
      %cst_159 = arith.constant 5.000000e-01 : f32
      %424 = vector.broadcast %cst_159 : f32 to vector<1x1xf32>
      %425 = arith.cmpf olt, %423, %424 : vector<1x1xf32>
      %426 = arith.andi %314, %425 : vector<1x1xi1>
      %427 = arith.extui %426 : vector<1x1xi1> to vector<1x1xi32>
      %428 = arith.maxsi %307, %427 : vector<1x1xi32>
      %429 = arith.extui %314 : vector<1x1xi1> to vector<1x1xi32>
      %430 = arith.addi %309, %429 : vector<1x1xi32>
      %c0_i32_160 = arith.constant 0 : i32
      %431 = vector.broadcast %c0_i32_160 : i32 to vector<1x1xi32>
      %432 = arith.cmpi eq, %428, %431 : vector<1x1xi32>
      %c256_i32_161 = arith.constant 256 : i32
      %433 = vector.broadcast %c256_i32_161 : i32 to vector<1x1xi32>
      %434 = arith.cmpi slt, %430, %433 : vector<1x1xi32>
      %435 = arith.andi %432, %434 : vector<1x1xi1>
      %c0_162 = arith.constant 0 : index
      %c0_163 = arith.constant 0 : index
      %436 = vector.load %arg8[%c0_162, %c0_163] : memref<8x256xf32, #tpu.memory_space<vmem>>, vector<8x256xf32>
      %c0_164 = arith.constant 0 : index
      %c0_165 = arith.constant 0 : index
      %437 = vector.load %arg6[%c0_164, %c0_165] : memref<8x256xf32, #tpu.memory_space<vmem>>, vector<8x256xf32>
      %c0_166 = arith.constant 0 : index
      %c0_167 = arith.constant 0 : index
      %438 = vector.load %arg9[%c0_166, %c0_167] : memref<8x256xf32, #tpu.memory_space<vmem>>, vector<8x256xf32>
      %c0_168 = arith.constant 0 : index
      %c0_169 = arith.constant 0 : index
      %439 = vector.load %arg10[%c0_168, %c0_169] : memref<8x256xi32, #tpu.memory_space<vmem>>, vector<8x256xi32>
      %c0_170 = arith.constant 0 : index
      %c0_171 = arith.constant 0 : index
      %440 = vector.load %arg11[%c0_170, %c0_171] : memref<8x256xf32, #tpu.memory_space<vmem>>, vector<8x256xf32>
      %c0_172 = arith.constant 0 : index
      %c0_173 = arith.constant 0 : index
      %441 = vector.load %arg0[%c0_172, %c0_173] : memref<8x256xf32, #tpu.memory_space<vmem>>, vector<8x256xf32>
      %c0_174 = arith.constant 0 : index
      %c0_175 = arith.constant 0 : index
      %442 = vector.load %arg3[%c0_174, %c0_175] : memref<8x256xf32, #tpu.memory_space<vmem>>, vector<8x256xf32>
      %cst_176 = arith.constant 5.000000e-01 : f32
      %443 = vector.broadcast %cst_176 : f32 to vector<8x256xf32>
      %444 = arith.mulf %443, %438 : vector<8x256xf32>
      %445 = arith.addf %444, %440 : vector<8x256xf32>
      %446 = tpu.bitcast %445 : vector<8x256xf32> -> vector<8x256xi32>
      %c-256_i32_177 = arith.constant -256 : i32
      %447 = vector.broadcast %c-256_i32_177 : i32 to vector<8x256xi32>
      %448 = arith.andi %446, %447 : vector<8x256xi32>
      %449 = vector.broadcast %2 : vector<1x256xi32> to vector<8x256xi32>
      %450 = arith.ori %448, %449 : vector<8x256xi32>
      %cst_178 = arith.constant 5.000000e-01 : f32
      %451 = vector.broadcast %cst_178 : f32 to vector<8x256xf32>
      %452 = arith.cmpf ogt, %436, %451 : vector<8x256xf32>
      %453 = vector.broadcast %c2147483647_i32 : i32 to vector<8x256xi32>
      %454 = arith.select %452, %450, %453 : vector<8x256xi1>, vector<8x256xi32>
      %cst_179 = arith.constant dense<2147483647> : vector<8xi32>
      %455 = vector.multi_reduction <minsi>, %454, %cst_179 [1] : vector<8x256xi32> to vector<8xi32>
      %456 = vector.shape_cast %455 : vector<8xi32> to vector<8x1xi32>
      %c255_i32_180 = arith.constant 255 : i32
      %457 = vector.broadcast %c255_i32_180 : i32 to vector<8x1xi32>
      %458 = arith.andi %456, %457 : vector<8x1xi32>
      %c255_i32_181 = arith.constant 255 : i32
      %459 = vector.broadcast %c255_i32_181 : i32 to vector<8x1xi32>
      %460 = arith.minsi %458, %459 : vector<8x1xi32>
      %461 = vector.broadcast %2 : vector<1x256xi32> to vector<8x256xi32>
      %462 = vector.broadcast %460 : vector<8x1xi32> to vector<8x256xi32>
      %463 = arith.cmpi eq, %461, %462 : vector<8x256xi32>
      %464 = arith.extui %463 : vector<8x256xi1> to vector<8x256xi32>
      %465 = arith.sitofp %464 : vector<8x256xi32> to vector<8x256xf32>
      %466 = arith.cmpi ne, %460, %12 : vector<8x1xi32>
      %467 = arith.extui %466 : vector<8x1xi1> to vector<8x1xi32>
      %468 = arith.sitofp %467 : vector<8x1xi32> to vector<8x1xf32>
      %469 = arith.maximumf %437, %465 : vector<8x256xf32>
      %470 = vector.broadcast %468 : vector<8x1xf32> to vector<8x256xf32>
      %471 = arith.mulf %470, %465 : vector<8x256xf32>
      %472 = arith.subf %436, %471 : vector<8x256xf32>
      %cst_182 = arith.constant 0.000000e+00 : f32
      %473 = vector.broadcast %cst_182 : f32 to vector<8x256xf32>
      %474 = arith.maximumf %472, %473 : vector<8x256xf32>
      %c4_i32_183 = arith.constant 4 : i32
      %475 = vector.broadcast %c4_i32_183 : i32 to vector<8x1xi32>
      %476 = arith.shrsi %460, %475 : vector<8x1xi32>
      %477 = arith.sitofp %476 : vector<8x1xi32> to vector<8x1xf32>
      %c15_i32_184 = arith.constant 15 : i32
      %478 = vector.broadcast %c15_i32_184 : i32 to vector<8x1xi32>
      %479 = arith.andi %460, %478 : vector<8x1xi32>
      %480 = arith.sitofp %479 : vector<8x1xi32> to vector<8x1xf32>
      %481 = vector.broadcast %0 : vector<1x256xf32> to vector<8x256xf32>
      %482 = vector.broadcast %477 : vector<8x1xf32> to vector<8x256xf32>
      %483 = arith.subf %481, %482 : vector<8x256xf32>
      %484 = math.absf %483 : vector<8x256xf32>
      %cst_185 = arith.constant 1.000000e+00 : f32
      %485 = vector.broadcast %cst_185 : f32 to vector<8x256xf32>
      %486 = arith.cmpf ole, %484, %485 : vector<8x256xf32>
      %487 = vector.broadcast %1 : vector<1x256xf32> to vector<8x256xf32>
      %488 = vector.broadcast %480 : vector<8x1xf32> to vector<8x256xf32>
      %489 = arith.subf %487, %488 : vector<8x256xf32>
      %490 = math.absf %489 : vector<8x256xf32>
      %cst_186 = arith.constant 1.000000e+00 : f32
      %491 = vector.broadcast %cst_186 : f32 to vector<8x256xf32>
      %492 = arith.cmpf ole, %490, %491 : vector<8x256xf32>
      %493 = arith.andi %486, %492 : vector<8x256xi1>
      %cst_187 = arith.constant dense<true> : vector<8x256xi1>
      %494 = arith.xori %463, %cst_187 : vector<8x256xi1>
      %495 = arith.andi %493, %494 : vector<8x256xi1>
      %496 = arith.extui %495 : vector<8x256xi1> to vector<8x256xi32>
      %497 = arith.sitofp %496 : vector<8x256xi32> to vector<8x256xf32>
      %498 = arith.mulf %497, %442 : vector<8x256xf32>
      %499 = arith.addf %438, %441 : vector<8x256xf32>
      %500 = arith.mulf %499, %465 : vector<8x256xf32>
      %cst_188 = arith.constant dense<0.000000e+00> : vector<8xf32>
      %501 = vector.multi_reduction <add>, %500, %cst_188 [1] : vector<8x256xf32> to vector<8xf32>
      %502 = vector.shape_cast %501 : vector<8xf32> to vector<8x1xf32>
      %503 = vector.broadcast %502 : vector<8x1xf32> to vector<8x256xf32>
      %504 = arith.mulf %503, %497 : vector<8x256xf32>
      %cst_189 = arith.constant 1.000000e+00 : f32
      %505 = vector.broadcast %cst_189 : f32 to vector<8x256xf32>
      %506 = arith.subf %505, %474 : vector<8x256xf32>
      %cst_190 = arith.constant 1.000000e+00 : f32
      %507 = vector.broadcast %cst_190 : f32 to vector<8x256xf32>
      %508 = arith.subf %507, %469 : vector<8x256xf32>
      %509 = arith.mulf %506, %508 : vector<8x256xf32>
      %510 = arith.cmpf ogt, %438, %504 : vector<8x256xf32>
      %511 = arith.extui %510 : vector<8x256xi1> to vector<8x256xi32>
      %512 = arith.sitofp %511 : vector<8x256xi32> to vector<8x256xf32>
      %513 = arith.mulf %474, %512 : vector<8x256xf32>
      %514 = arith.addf %509, %513 : vector<8x256xf32>
      %515 = arith.mulf %514, %498 : vector<8x256xf32>
      %516 = arith.mulf %504, %515 : vector<8x256xf32>
      %cst_191 = arith.constant 1.000000e+00 : f32
      %517 = vector.broadcast %cst_191 : f32 to vector<8x256xf32>
      %518 = arith.subf %517, %515 : vector<8x256xf32>
      %519 = arith.mulf %438, %518 : vector<8x256xf32>
      %520 = arith.addf %516, %519 : vector<8x256xf32>
      %521 = arith.maximumf %474, %515 : vector<8x256xf32>
      %cst_192 = arith.constant 5.000000e-01 : f32
      %522 = vector.broadcast %cst_192 : f32 to vector<8x256xf32>
      %523 = arith.cmpf ogt, %515, %522 : vector<8x256xf32>
      %524 = vector.shape_cast %460 : vector<8x1xi32> to vector<8x1xi32>
      %525 = vector.broadcast %524 : vector<8x1xi32> to vector<8x256xi32>
      %526 = arith.select %523, %525, %439 : vector<8x256xi1>, vector<8x256xi32>
      %527 = vector.shape_cast %435 : vector<1x1xi1> to vector<1x1xi1>
      %528 = vector.broadcast %527 : vector<1x1xi1> to vector<8x256xi1>
      %529 = arith.select %528, %521, %436 : vector<8x256xi1>, vector<8x256xf32>
      %c0_193 = arith.constant 0 : index
      %c0_194 = arith.constant 0 : index
      %530 = vector.load %arg8[%c0_193, %c0_194] : memref<8x256xf32, #tpu.memory_space<vmem>>, vector<8x256xf32>
      tpu.vector_store %arg8[%c0_193, %c0_194], %529 {strides = array<i32>} : memref<8x256xf32, #tpu.memory_space<vmem>>, vector<8x256xf32>,
      %531 = vector.shape_cast %435 : vector<1x1xi1> to vector<1x1xi1>
      %532 = vector.broadcast %531 : vector<1x1xi1> to vector<8x256xi1>
      %533 = arith.select %532, %469, %437 : vector<8x256xi1>, vector<8x256xf32>
      %c0_195 = arith.constant 0 : index
      %c0_196 = arith.constant 0 : index
      %534 = vector.load %arg6[%c0_195, %c0_196] : memref<8x256xf32, #tpu.memory_space<vmem>>, vector<8x256xf32>
      tpu.vector_store %arg6[%c0_195, %c0_196], %533 {strides = array<i32>} : memref<8x256xf32, #tpu.memory_space<vmem>>, vector<8x256xf32>,
      %535 = vector.shape_cast %435 : vector<1x1xi1> to vector<1x1xi1>
      %536 = vector.broadcast %535 : vector<1x1xi1> to vector<8x256xi1>
      %537 = arith.select %536, %520, %438 : vector<8x256xi1>, vector<8x256xf32>
      %c0_197 = arith.constant 0 : index
      %c0_198 = arith.constant 0 : index
      %538 = vector.load %arg9[%c0_197, %c0_198] : memref<8x256xf32, #tpu.memory_space<vmem>>, vector<8x256xf32>
      tpu.vector_store %arg9[%c0_197, %c0_198], %537 {strides = array<i32>} : memref<8x256xf32, #tpu.memory_space<vmem>>, vector<8x256xf32>,
      %539 = vector.shape_cast %435 : vector<1x1xi1> to vector<1x1xi1>
      %540 = vector.broadcast %539 : vector<1x1xi1> to vector<8x256xi1>
      %541 = arith.select %540, %526, %439 : vector<8x256xi1>, vector<8x256xi32>
      %c0_199 = arith.constant 0 : index
      %c0_200 = arith.constant 0 : index
      %542 = vector.load %arg10[%c0_199, %c0_200] : memref<8x256xi32, #tpu.memory_space<vmem>>, vector<8x256xi32>
      tpu.vector_store %arg10[%c0_199, %c0_200], %541 {strides = array<i32>} : memref<8x256xi32, #tpu.memory_space<vmem>>, vector<8x256xi32>,
      %cst_201 = arith.constant dense<0.000000e+00> : vector<1xf32>
      %543 = vector.multi_reduction <add>, %468, %cst_201 [0] : vector<8x1xf32> to vector<1xf32>
      %544 = vector.shape_cast %543 : vector<1xf32> to vector<1x1xf32>
      %cst_202 = arith.constant 5.000000e-01 : f32
      %545 = vector.broadcast %cst_202 : f32 to vector<1x1xf32>
      %546 = arith.cmpf olt, %544, %545 : vector<1x1xf32>
      %547 = arith.andi %435, %546 : vector<1x1xi1>
      %548 = arith.extui %547 : vector<1x1xi1> to vector<1x1xi32>
      %549 = arith.maxsi %428, %548 : vector<1x1xi32>
      %550 = arith.extui %435 : vector<1x1xi1> to vector<1x1xi32>
      %551 = arith.addi %430, %550 : vector<1x1xi32>
      %c0_i32_203 = arith.constant 0 : i32
      %552 = vector.broadcast %c0_i32_203 : i32 to vector<1x1xi32>
      %553 = arith.cmpi eq, %549, %552 : vector<1x1xi32>
      %c256_i32_204 = arith.constant 256 : i32
      %554 = vector.broadcast %c256_i32_204 : i32 to vector<1x1xi32>
      %555 = arith.cmpi slt, %551, %554 : vector<1x1xi32>
      %556 = arith.andi %553, %555 : vector<1x1xi1>
      %c0_205 = arith.constant 0 : index
      %c0_206 = arith.constant 0 : index
      %557 = vector.load %arg8[%c0_205, %c0_206] : memref<8x256xf32, #tpu.memory_space<vmem>>, vector<8x256xf32>
      %c0_207 = arith.constant 0 : index
      %c0_208 = arith.constant 0 : index
      %558 = vector.load %arg6[%c0_207, %c0_208] : memref<8x256xf32, #tpu.memory_space<vmem>>, vector<8x256xf32>
      %c0_209 = arith.constant 0 : index
      %c0_210 = arith.constant 0 : index
      %559 = vector.load %arg9[%c0_209, %c0_210] : memref<8x256xf32, #tpu.memory_space<vmem>>, vector<8x256xf32>
      %c0_211 = arith.constant 0 : index
      %c0_212 = arith.constant 0 : index
      %560 = vector.load %arg10[%c0_211, %c0_212] : memref<8x256xi32, #tpu.memory_space<vmem>>, vector<8x256xi32>
      %c0_213 = arith.constant 0 : index
      %c0_214 = arith.constant 0 : index
      %561 = vector.load %arg11[%c0_213, %c0_214] : memref<8x256xf32, #tpu.memory_space<vmem>>, vector<8x256xf32>
      %c0_215 = arith.constant 0 : index
      %c0_216 = arith.constant 0 : index
      %562 = vector.load %arg0[%c0_215, %c0_216] : memref<8x256xf32, #tpu.memory_space<vmem>>, vector<8x256xf32>
      %c0_217 = arith.constant 0 : index
      %c0_218 = arith.constant 0 : index
      %563 = vector.load %arg3[%c0_217, %c0_218] : memref<8x256xf32, #tpu.memory_space<vmem>>, vector<8x256xf32>
      %cst_219 = arith.constant 5.000000e-01 : f32
      %564 = vector.broadcast %cst_219 : f32 to vector<8x256xf32>
      %565 = arith.mulf %564, %559 : vector<8x256xf32>
      %566 = arith.addf %565, %561 : vector<8x256xf32>
      %567 = tpu.bitcast %566 : vector<8x256xf32> -> vector<8x256xi32>
      %c-256_i32_220 = arith.constant -256 : i32
      %568 = vector.broadcast %c-256_i32_220 : i32 to vector<8x256xi32>
      %569 = arith.andi %567, %568 : vector<8x256xi32>
      %570 = vector.broadcast %2 : vector<1x256xi32> to vector<8x256xi32>
      %571 = arith.ori %569, %570 : vector<8x256xi32>
      %cst_221 = arith.constant 5.000000e-01 : f32
      %572 = vector.broadcast %cst_221 : f32 to vector<8x256xf32>
      %573 = arith.cmpf ogt, %557, %572 : vector<8x256xf32>
      %574 = vector.broadcast %c2147483647_i32 : i32 to vector<8x256xi32>
      %575 = arith.select %573, %571, %574 : vector<8x256xi1>, vector<8x256xi32>
      %cst_222 = arith.constant dense<2147483647> : vector<8xi32>
      %576 = vector.multi_reduction <minsi>, %575, %cst_222 [1] : vector<8x256xi32> to vector<8xi32>
      %577 = vector.shape_cast %576 : vector<8xi32> to vector<8x1xi32>
      %c255_i32_223 = arith.constant 255 : i32
      %578 = vector.broadcast %c255_i32_223 : i32 to vector<8x1xi32>
      %579 = arith.andi %577, %578 : vector<8x1xi32>
      %c255_i32_224 = arith.constant 255 : i32
      %580 = vector.broadcast %c255_i32_224 : i32 to vector<8x1xi32>
      %581 = arith.minsi %579, %580 : vector<8x1xi32>
      %582 = vector.broadcast %2 : vector<1x256xi32> to vector<8x256xi32>
      %583 = vector.broadcast %581 : vector<8x1xi32> to vector<8x256xi32>
      %584 = arith.cmpi eq, %582, %583 : vector<8x256xi32>
      %585 = arith.extui %584 : vector<8x256xi1> to vector<8x256xi32>
      %586 = arith.sitofp %585 : vector<8x256xi32> to vector<8x256xf32>
      %587 = arith.cmpi ne, %581, %12 : vector<8x1xi32>
      %588 = arith.extui %587 : vector<8x1xi1> to vector<8x1xi32>
      %589 = arith.sitofp %588 : vector<8x1xi32> to vector<8x1xf32>
      %590 = arith.maximumf %558, %586 : vector<8x256xf32>
      %591 = vector.broadcast %589 : vector<8x1xf32> to vector<8x256xf32>
      %592 = arith.mulf %591, %586 : vector<8x256xf32>
      %593 = arith.subf %557, %592 : vector<8x256xf32>
      %cst_225 = arith.constant 0.000000e+00 : f32
      %594 = vector.broadcast %cst_225 : f32 to vector<8x256xf32>
      %595 = arith.maximumf %593, %594 : vector<8x256xf32>
      %c4_i32_226 = arith.constant 4 : i32
      %596 = vector.broadcast %c4_i32_226 : i32 to vector<8x1xi32>
      %597 = arith.shrsi %581, %596 : vector<8x1xi32>
      %598 = arith.sitofp %597 : vector<8x1xi32> to vector<8x1xf32>
      %c15_i32_227 = arith.constant 15 : i32
      %599 = vector.broadcast %c15_i32_227 : i32 to vector<8x1xi32>
      %600 = arith.andi %581, %599 : vector<8x1xi32>
      %601 = arith.sitofp %600 : vector<8x1xi32> to vector<8x1xf32>
      %602 = vector.broadcast %0 : vector<1x256xf32> to vector<8x256xf32>
      %603 = vector.broadcast %598 : vector<8x1xf32> to vector<8x256xf32>
      %604 = arith.subf %602, %603 : vector<8x256xf32>
      %605 = math.absf %604 : vector<8x256xf32>
      %cst_228 = arith.constant 1.000000e+00 : f32
      %606 = vector.broadcast %cst_228 : f32 to vector<8x256xf32>
      %607 = arith.cmpf ole, %605, %606 : vector<8x256xf32>
      %608 = vector.broadcast %1 : vector<1x256xf32> to vector<8x256xf32>
      %609 = vector.broadcast %601 : vector<8x1xf32> to vector<8x256xf32>
      %610 = arith.subf %608, %609 : vector<8x256xf32>
      %611 = math.absf %610 : vector<8x256xf32>
      %cst_229 = arith.constant 1.000000e+00 : f32
      %612 = vector.broadcast %cst_229 : f32 to vector<8x256xf32>
      %613 = arith.cmpf ole, %611, %612 : vector<8x256xf32>
      %614 = arith.andi %607, %613 : vector<8x256xi1>
      %cst_230 = arith.constant dense<true> : vector<8x256xi1>
      %615 = arith.xori %584, %cst_230 : vector<8x256xi1>
      %616 = arith.andi %614, %615 : vector<8x256xi1>
      %617 = arith.extui %616 : vector<8x256xi1> to vector<8x256xi32>
      %618 = arith.sitofp %617 : vector<8x256xi32> to vector<8x256xf32>
      %619 = arith.mulf %618, %563 : vector<8x256xf32>
      %620 = arith.addf %559, %562 : vector<8x256xf32>
      %621 = arith.mulf %620, %586 : vector<8x256xf32>
      %cst_231 = arith.constant dense<0.000000e+00> : vector<8xf32>
      %622 = vector.multi_reduction <add>, %621, %cst_231 [1] : vector<8x256xf32> to vector<8xf32>
      %623 = vector.shape_cast %622 : vector<8xf32> to vector<8x1xf32>
      %624 = vector.broadcast %623 : vector<8x1xf32> to vector<8x256xf32>
      %625 = arith.mulf %624, %618 : vector<8x256xf32>
      %cst_232 = arith.constant 1.000000e+00 : f32
      %626 = vector.broadcast %cst_232 : f32 to vector<8x256xf32>
      %627 = arith.subf %626, %595 : vector<8x256xf32>
      %cst_233 = arith.constant 1.000000e+00 : f32
      %628 = vector.broadcast %cst_233 : f32 to vector<8x256xf32>
      %629 = arith.subf %628, %590 : vector<8x256xf32>
      %630 = arith.mulf %627, %629 : vector<8x256xf32>
      %631 = arith.cmpf ogt, %559, %625 : vector<8x256xf32>
      %632 = arith.extui %631 : vector<8x256xi1> to vector<8x256xi32>
      %633 = arith.sitofp %632 : vector<8x256xi32> to vector<8x256xf32>
      %634 = arith.mulf %595, %633 : vector<8x256xf32>
      %635 = arith.addf %630, %634 : vector<8x256xf32>
      %636 = arith.mulf %635, %619 : vector<8x256xf32>
      %637 = arith.mulf %625, %636 : vector<8x256xf32>
      %cst_234 = arith.constant 1.000000e+00 : f32
      %638 = vector.broadcast %cst_234 : f32 to vector<8x256xf32>
      %639 = arith.subf %638, %636 : vector<8x256xf32>
      %640 = arith.mulf %559, %639 : vector<8x256xf32>
      %641 = arith.addf %637, %640 : vector<8x256xf32>
      %642 = arith.maximumf %595, %636 : vector<8x256xf32>
      %cst_235 = arith.constant 5.000000e-01 : f32
      %643 = vector.broadcast %cst_235 : f32 to vector<8x256xf32>
      %644 = arith.cmpf ogt, %636, %643 : vector<8x256xf32>
      %645 = vector.shape_cast %581 : vector<8x1xi32> to vector<8x1xi32>
      %646 = vector.broadcast %645 : vector<8x1xi32> to vector<8x256xi32>
      %647 = arith.select %644, %646, %560 : vector<8x256xi1>, vector<8x256xi32>
      %648 = vector.shape_cast %556 : vector<1x1xi1> to vector<1x1xi1>
      %649 = vector.broadcast %648 : vector<1x1xi1> to vector<8x256xi1>
      %650 = arith.select %649, %642, %557 : vector<8x256xi1>, vector<8x256xf32>
      %c0_236 = arith.constant 0 : index
      %c0_237 = arith.constant 0 : index
      %651 = vector.load %arg8[%c0_236, %c0_237] : memref<8x256xf32, #tpu.memory_space<vmem>>, vector<8x256xf32>
      tpu.vector_store %arg8[%c0_236, %c0_237], %650 {strides = array<i32>} : memref<8x256xf32, #tpu.memory_space<vmem>>, vector<8x256xf32>,
      %652 = vector.shape_cast %556 : vector<1x1xi1> to vector<1x1xi1>
      %653 = vector.broadcast %652 : vector<1x1xi1> to vector<8x256xi1>
      %654 = arith.select %653, %590, %558 : vector<8x256xi1>, vector<8x256xf32>
      %c0_238 = arith.constant 0 : index
      %c0_239 = arith.constant 0 : index
      %655 = vector.load %arg6[%c0_238, %c0_239] : memref<8x256xf32, #tpu.memory_space<vmem>>, vector<8x256xf32>
      tpu.vector_store %arg6[%c0_238, %c0_239], %654 {strides = array<i32>} : memref<8x256xf32, #tpu.memory_space<vmem>>, vector<8x256xf32>,
      %656 = vector.shape_cast %556 : vector<1x1xi1> to vector<1x1xi1>
      %657 = vector.broadcast %656 : vector<1x1xi1> to vector<8x256xi1>
      %658 = arith.select %657, %641, %559 : vector<8x256xi1>, vector<8x256xf32>
      %c0_240 = arith.constant 0 : index
      %c0_241 = arith.constant 0 : index
      %659 = vector.load %arg9[%c0_240, %c0_241] : memref<8x256xf32, #tpu.memory_space<vmem>>, vector<8x256xf32>
      tpu.vector_store %arg9[%c0_240, %c0_241], %658 {strides = array<i32>} : memref<8x256xf32, #tpu.memory_space<vmem>>, vector<8x256xf32>,
      %660 = vector.shape_cast %556 : vector<1x1xi1> to vector<1x1xi1>
      %661 = vector.broadcast %660 : vector<1x1xi1> to vector<8x256xi1>
      %662 = arith.select %661, %647, %560 : vector<8x256xi1>, vector<8x256xi32>
      %c0_242 = arith.constant 0 : index
      %c0_243 = arith.constant 0 : index
      %663 = vector.load %arg10[%c0_242, %c0_243] : memref<8x256xi32, #tpu.memory_space<vmem>>, vector<8x256xi32>
      tpu.vector_store %arg10[%c0_242, %c0_243], %662 {strides = array<i32>} : memref<8x256xi32, #tpu.memory_space<vmem>>, vector<8x256xi32>,
      %cst_244 = arith.constant dense<0.000000e+00> : vector<1xf32>
      %664 = vector.multi_reduction <add>, %589, %cst_244 [0] : vector<8x1xf32> to vector<1xf32>
      %665 = vector.shape_cast %664 : vector<1xf32> to vector<1x1xf32>
      %cst_245 = arith.constant 5.000000e-01 : f32
      %666 = vector.broadcast %cst_245 : f32 to vector<1x1xf32>
      %667 = arith.cmpf olt, %665, %666 : vector<1x1xf32>
      %668 = arith.andi %556, %667 : vector<1x1xi1>
      %669 = arith.extui %668 : vector<1x1xi1> to vector<1x1xi32>
      %670 = arith.maxsi %549, %669 : vector<1x1xi32>
      %671 = arith.extui %556 : vector<1x1xi1> to vector<1x1xi32>
      %672 = arith.addi %551, %671 : vector<1x1xi32>
      %c0_i32_246 = arith.constant 0 : i32
      %673 = vector.broadcast %c0_i32_246 : i32 to vector<1x1xi32>
      %674 = arith.cmpi eq, %670, %673 : vector<1x1xi32>
      %c256_i32_247 = arith.constant 256 : i32
      %675 = vector.broadcast %c256_i32_247 : i32 to vector<1x1xi32>
      %676 = arith.cmpi slt, %672, %675 : vector<1x1xi32>
      %677 = arith.andi %674, %676 : vector<1x1xi1>
      %c0_248 = arith.constant 0 : index
      %c0_249 = arith.constant 0 : index
      %678 = vector.load %arg8[%c0_248, %c0_249] : memref<8x256xf32, #tpu.memory_space<vmem>>, vector<8x256xf32>
      %c0_250 = arith.constant 0 : index
      %c0_251 = arith.constant 0 : index
      %679 = vector.load %arg6[%c0_250, %c0_251] : memref<8x256xf32, #tpu.memory_space<vmem>>, vector<8x256xf32>
      %c0_252 = arith.constant 0 : index
      %c0_253 = arith.constant 0 : index
      %680 = vector.load %arg9[%c0_252, %c0_253] : memref<8x256xf32, #tpu.memory_space<vmem>>, vector<8x256xf32>
      %c0_254 = arith.constant 0 : index
      %c0_255 = arith.constant 0 : index
      %681 = vector.load %arg10[%c0_254, %c0_255] : memref<8x256xi32, #tpu.memory_space<vmem>>, vector<8x256xi32>
      %c0_256 = arith.constant 0 : index
      %c0_257 = arith.constant 0 : index
      %682 = vector.load %arg11[%c0_256, %c0_257] : memref<8x256xf32, #tpu.memory_space<vmem>>, vector<8x256xf32>
      %c0_258 = arith.constant 0 : index
      %c0_259 = arith.constant 0 : index
      %683 = vector.load %arg0[%c0_258, %c0_259] : memref<8x256xf32, #tpu.memory_space<vmem>>, vector<8x256xf32>
      %c0_260 = arith.constant 0 : index
      %c0_261 = arith.constant 0 : index
      %684 = vector.load %arg3[%c0_260, %c0_261] : memref<8x256xf32, #tpu.memory_space<vmem>>, vector<8x256xf32>
      %cst_262 = arith.constant 5.000000e-01 : f32
      %685 = vector.broadcast %cst_262 : f32 to vector<8x256xf32>
      %686 = arith.mulf %685, %680 : vector<8x256xf32>
      %687 = arith.addf %686, %682 : vector<8x256xf32>
      %688 = tpu.bitcast %687 : vector<8x256xf32> -> vector<8x256xi32>
      %c-256_i32_263 = arith.constant -256 : i32
      %689 = vector.broadcast %c-256_i32_263 : i32 to vector<8x256xi32>
      %690 = arith.andi %688, %689 : vector<8x256xi32>
      %691 = vector.broadcast %2 : vector<1x256xi32> to vector<8x256xi32>
      %692 = arith.ori %690, %691 : vector<8x256xi32>
      %cst_264 = arith.constant 5.000000e-01 : f32
      %693 = vector.broadcast %cst_264 : f32 to vector<8x256xf32>
      %694 = arith.cmpf ogt, %678, %693 : vector<8x256xf32>
      %695 = vector.broadcast %c2147483647_i32 : i32 to vector<8x256xi32>
      %696 = arith.select %694, %692, %695 : vector<8x256xi1>, vector<8x256xi32>
      %cst_265 = arith.constant dense<2147483647> : vector<8xi32>
      %697 = vector.multi_reduction <minsi>, %696, %cst_265 [1] : vector<8x256xi32> to vector<8xi32>
      %698 = vector.shape_cast %697 : vector<8xi32> to vector<8x1xi32>
      %c255_i32_266 = arith.constant 255 : i32
      %699 = vector.broadcast %c255_i32_266 : i32 to vector<8x1xi32>
      %700 = arith.andi %698, %699 : vector<8x1xi32>
      %c255_i32_267 = arith.constant 255 : i32
      %701 = vector.broadcast %c255_i32_267 : i32 to vector<8x1xi32>
      %702 = arith.minsi %700, %701 : vector<8x1xi32>
      %703 = vector.broadcast %2 : vector<1x256xi32> to vector<8x256xi32>
      %704 = vector.broadcast %702 : vector<8x1xi32> to vector<8x256xi32>
      %705 = arith.cmpi eq, %703, %704 : vector<8x256xi32>
      %706 = arith.extui %705 : vector<8x256xi1> to vector<8x256xi32>
      %707 = arith.sitofp %706 : vector<8x256xi32> to vector<8x256xf32>
      %708 = arith.cmpi ne, %702, %12 : vector<8x1xi32>
      %709 = arith.extui %708 : vector<8x1xi1> to vector<8x1xi32>
      %710 = arith.sitofp %709 : vector<8x1xi32> to vector<8x1xf32>
      %711 = arith.maximumf %679, %707 : vector<8x256xf32>
      %712 = vector.broadcast %710 : vector<8x1xf32> to vector<8x256xf32>
      %713 = arith.mulf %712, %707 : vector<8x256xf32>
      %714 = arith.subf %678, %713 : vector<8x256xf32>
      %cst_268 = arith.constant 0.000000e+00 : f32
      %715 = vector.broadcast %cst_268 : f32 to vector<8x256xf32>
      %716 = arith.maximumf %714, %715 : vector<8x256xf32>
      %c4_i32_269 = arith.constant 4 : i32
      %717 = vector.broadcast %c4_i32_269 : i32 to vector<8x1xi32>
      %718 = arith.shrsi %702, %717 : vector<8x1xi32>
      %719 = arith.sitofp %718 : vector<8x1xi32> to vector<8x1xf32>
      %c15_i32_270 = arith.constant 15 : i32
      %720 = vector.broadcast %c15_i32_270 : i32 to vector<8x1xi32>
      %721 = arith.andi %702, %720 : vector<8x1xi32>
      %722 = arith.sitofp %721 : vector<8x1xi32> to vector<8x1xf32>
      %723 = vector.broadcast %0 : vector<1x256xf32> to vector<8x256xf32>
      %724 = vector.broadcast %719 : vector<8x1xf32> to vector<8x256xf32>
      %725 = arith.subf %723, %724 : vector<8x256xf32>
      %726 = math.absf %725 : vector<8x256xf32>
      %cst_271 = arith.constant 1.000000e+00 : f32
      %727 = vector.broadcast %cst_271 : f32 to vector<8x256xf32>
      %728 = arith.cmpf ole, %726, %727 : vector<8x256xf32>
      %729 = vector.broadcast %1 : vector<1x256xf32> to vector<8x256xf32>
      %730 = vector.broadcast %722 : vector<8x1xf32> to vector<8x256xf32>
      %731 = arith.subf %729, %730 : vector<8x256xf32>
      %732 = math.absf %731 : vector<8x256xf32>
      %cst_272 = arith.constant 1.000000e+00 : f32
      %733 = vector.broadcast %cst_272 : f32 to vector<8x256xf32>
      %734 = arith.cmpf ole, %732, %733 : vector<8x256xf32>
      %735 = arith.andi %728, %734 : vector<8x256xi1>
      %cst_273 = arith.constant dense<true> : vector<8x256xi1>
      %736 = arith.xori %705, %cst_273 : vector<8x256xi1>
      %737 = arith.andi %735, %736 : vector<8x256xi1>
      %738 = arith.extui %737 : vector<8x256xi1> to vector<8x256xi32>
      %739 = arith.sitofp %738 : vector<8x256xi32> to vector<8x256xf32>
      %740 = arith.mulf %739, %684 : vector<8x256xf32>
      %741 = arith.addf %680, %683 : vector<8x256xf32>
      %742 = arith.mulf %741, %707 : vector<8x256xf32>
      %cst_274 = arith.constant dense<0.000000e+00> : vector<8xf32>
      %743 = vector.multi_reduction <add>, %742, %cst_274 [1] : vector<8x256xf32> to vector<8xf32>
      %744 = vector.shape_cast %743 : vector<8xf32> to vector<8x1xf32>
      %745 = vector.broadcast %744 : vector<8x1xf32> to vector<8x256xf32>
      %746 = arith.mulf %745, %739 : vector<8x256xf32>
      %cst_275 = arith.constant 1.000000e+00 : f32
      %747 = vector.broadcast %cst_275 : f32 to vector<8x256xf32>
      %748 = arith.subf %747, %716 : vector<8x256xf32>
      %cst_276 = arith.constant 1.000000e+00 : f32
      %749 = vector.broadcast %cst_276 : f32 to vector<8x256xf32>
      %750 = arith.subf %749, %711 : vector<8x256xf32>
      %751 = arith.mulf %748, %750 : vector<8x256xf32>
      %752 = arith.cmpf ogt, %680, %746 : vector<8x256xf32>
      %753 = arith.extui %752 : vector<8x256xi1> to vector<8x256xi32>
      %754 = arith.sitofp %753 : vector<8x256xi32> to vector<8x256xf32>
      %755 = arith.mulf %716, %754 : vector<8x256xf32>
      %756 = arith.addf %751, %755 : vector<8x256xf32>
      %757 = arith.mulf %756, %740 : vector<8x256xf32>
      %758 = arith.mulf %746, %757 : vector<8x256xf32>
      %cst_277 = arith.constant 1.000000e+00 : f32
      %759 = vector.broadcast %cst_277 : f32 to vector<8x256xf32>
      %760 = arith.subf %759, %757 : vector<8x256xf32>
      %761 = arith.mulf %680, %760 : vector<8x256xf32>
      %762 = arith.addf %758, %761 : vector<8x256xf32>
      %763 = arith.maximumf %716, %757 : vector<8x256xf32>
      %cst_278 = arith.constant 5.000000e-01 : f32
      %764 = vector.broadcast %cst_278 : f32 to vector<8x256xf32>
      %765 = arith.cmpf ogt, %757, %764 : vector<8x256xf32>
      %766 = vector.shape_cast %702 : vector<8x1xi32> to vector<8x1xi32>
      %767 = vector.broadcast %766 : vector<8x1xi32> to vector<8x256xi32>
      %768 = arith.select %765, %767, %681 : vector<8x256xi1>, vector<8x256xi32>
      %769 = vector.shape_cast %677 : vector<1x1xi1> to vector<1x1xi1>
      %770 = vector.broadcast %769 : vector<1x1xi1> to vector<8x256xi1>
      %771 = arith.select %770, %763, %678 : vector<8x256xi1>, vector<8x256xf32>
      %c0_279 = arith.constant 0 : index
      %c0_280 = arith.constant 0 : index
      %772 = vector.load %arg8[%c0_279, %c0_280] : memref<8x256xf32, #tpu.memory_space<vmem>>, vector<8x256xf32>
      tpu.vector_store %arg8[%c0_279, %c0_280], %771 {strides = array<i32>} : memref<8x256xf32, #tpu.memory_space<vmem>>, vector<8x256xf32>,
      %773 = vector.shape_cast %677 : vector<1x1xi1> to vector<1x1xi1>
      %774 = vector.broadcast %773 : vector<1x1xi1> to vector<8x256xi1>
      %775 = arith.select %774, %711, %679 : vector<8x256xi1>, vector<8x256xf32>
      %c0_281 = arith.constant 0 : index
      %c0_282 = arith.constant 0 : index
      %776 = vector.load %arg6[%c0_281, %c0_282] : memref<8x256xf32, #tpu.memory_space<vmem>>, vector<8x256xf32>
      tpu.vector_store %arg6[%c0_281, %c0_282], %775 {strides = array<i32>} : memref<8x256xf32, #tpu.memory_space<vmem>>, vector<8x256xf32>,
      %777 = vector.shape_cast %677 : vector<1x1xi1> to vector<1x1xi1>
      %778 = vector.broadcast %777 : vector<1x1xi1> to vector<8x256xi1>
      %779 = arith.select %778, %762, %680 : vector<8x256xi1>, vector<8x256xf32>
      %c0_283 = arith.constant 0 : index
      %c0_284 = arith.constant 0 : index
      %780 = vector.load %arg9[%c0_283, %c0_284] : memref<8x256xf32, #tpu.memory_space<vmem>>, vector<8x256xf32>
      tpu.vector_store %arg9[%c0_283, %c0_284], %779 {strides = array<i32>} : memref<8x256xf32, #tpu.memory_space<vmem>>, vector<8x256xf32>,
      %781 = vector.shape_cast %677 : vector<1x1xi1> to vector<1x1xi1>
      %782 = vector.broadcast %781 : vector<1x1xi1> to vector<8x256xi1>
      %783 = arith.select %782, %768, %681 : vector<8x256xi1>, vector<8x256xi32>
      %c0_285 = arith.constant 0 : index
      %c0_286 = arith.constant 0 : index
      %784 = vector.load %arg10[%c0_285, %c0_286] : memref<8x256xi32, #tpu.memory_space<vmem>>, vector<8x256xi32>
      tpu.vector_store %arg10[%c0_285, %c0_286], %783 {strides = array<i32>} : memref<8x256xi32, #tpu.memory_space<vmem>>, vector<8x256xi32>,
      %cst_287 = arith.constant dense<0.000000e+00> : vector<1xf32>
      %785 = vector.multi_reduction <add>, %710, %cst_287 [0] : vector<8x1xf32> to vector<1xf32>
      %786 = vector.shape_cast %785 : vector<1xf32> to vector<1x1xf32>
      %cst_288 = arith.constant 5.000000e-01 : f32
      %787 = vector.broadcast %cst_288 : f32 to vector<1x1xf32>
      %788 = arith.cmpf olt, %786, %787 : vector<1x1xf32>
      %789 = arith.andi %677, %788 : vector<1x1xi1>
      %790 = arith.extui %789 : vector<1x1xi1> to vector<1x1xi32>
      %791 = arith.maxsi %670, %790 : vector<1x1xi32>
      %792 = arith.extui %677 : vector<1x1xi1> to vector<1x1xi32>
      %793 = arith.addi %672, %792 : vector<1x1xi32>
      %c0_i32_289 = arith.constant 0 : i32
      %794 = vector.broadcast %c0_i32_289 : i32 to vector<1x1xi32>
      %795 = arith.cmpi eq, %791, %794 : vector<1x1xi32>
      %c256_i32_290 = arith.constant 256 : i32
      %796 = vector.broadcast %c256_i32_290 : i32 to vector<1x1xi32>
      %797 = arith.cmpi slt, %793, %796 : vector<1x1xi32>
      %798 = arith.andi %795, %797 : vector<1x1xi1>
      %c0_291 = arith.constant 0 : index
      %c0_292 = arith.constant 0 : index
      %799 = vector.load %arg8[%c0_291, %c0_292] : memref<8x256xf32, #tpu.memory_space<vmem>>, vector<8x256xf32>
      %c0_293 = arith.constant 0 : index
      %c0_294 = arith.constant 0 : index
      %800 = vector.load %arg6[%c0_293, %c0_294] : memref<8x256xf32, #tpu.memory_space<vmem>>, vector<8x256xf32>
      %c0_295 = arith.constant 0 : index
      %c0_296 = arith.constant 0 : index
      %801 = vector.load %arg9[%c0_295, %c0_296] : memref<8x256xf32, #tpu.memory_space<vmem>>, vector<8x256xf32>
      %c0_297 = arith.constant 0 : index
      %c0_298 = arith.constant 0 : index
      %802 = vector.load %arg10[%c0_297, %c0_298] : memref<8x256xi32, #tpu.memory_space<vmem>>, vector<8x256xi32>
      %c0_299 = arith.constant 0 : index
      %c0_300 = arith.constant 0 : index
      %803 = vector.load %arg11[%c0_299, %c0_300] : memref<8x256xf32, #tpu.memory_space<vmem>>, vector<8x256xf32>
      %c0_301 = arith.constant 0 : index
      %c0_302 = arith.constant 0 : index
      %804 = vector.load %arg0[%c0_301, %c0_302] : memref<8x256xf32, #tpu.memory_space<vmem>>, vector<8x256xf32>
      %c0_303 = arith.constant 0 : index
      %c0_304 = arith.constant 0 : index
      %805 = vector.load %arg3[%c0_303, %c0_304] : memref<8x256xf32, #tpu.memory_space<vmem>>, vector<8x256xf32>
      %cst_305 = arith.constant 5.000000e-01 : f32
      %806 = vector.broadcast %cst_305 : f32 to vector<8x256xf32>
      %807 = arith.mulf %806, %801 : vector<8x256xf32>
      %808 = arith.addf %807, %803 : vector<8x256xf32>
      %809 = tpu.bitcast %808 : vector<8x256xf32> -> vector<8x256xi32>
      %c-256_i32_306 = arith.constant -256 : i32
      %810 = vector.broadcast %c-256_i32_306 : i32 to vector<8x256xi32>
      %811 = arith.andi %809, %810 : vector<8x256xi32>
      %812 = vector.broadcast %2 : vector<1x256xi32> to vector<8x256xi32>
      %813 = arith.ori %811, %812 : vector<8x256xi32>
      %cst_307 = arith.constant 5.000000e-01 : f32
      %814 = vector.broadcast %cst_307 : f32 to vector<8x256xf32>
      %815 = arith.cmpf ogt, %799, %814 : vector<8x256xf32>
      %816 = vector.broadcast %c2147483647_i32 : i32 to vector<8x256xi32>
      %817 = arith.select %815, %813, %816 : vector<8x256xi1>, vector<8x256xi32>
      %cst_308 = arith.constant dense<2147483647> : vector<8xi32>
      %818 = vector.multi_reduction <minsi>, %817, %cst_308 [1] : vector<8x256xi32> to vector<8xi32>
      %819 = vector.shape_cast %818 : vector<8xi32> to vector<8x1xi32>
      %c255_i32_309 = arith.constant 255 : i32
      %820 = vector.broadcast %c255_i32_309 : i32 to vector<8x1xi32>
      %821 = arith.andi %819, %820 : vector<8x1xi32>
      %c255_i32_310 = arith.constant 255 : i32
      %822 = vector.broadcast %c255_i32_310 : i32 to vector<8x1xi32>
      %823 = arith.minsi %821, %822 : vector<8x1xi32>
      %824 = vector.broadcast %2 : vector<1x256xi32> to vector<8x256xi32>
      %825 = vector.broadcast %823 : vector<8x1xi32> to vector<8x256xi32>
      %826 = arith.cmpi eq, %824, %825 : vector<8x256xi32>
      %827 = arith.extui %826 : vector<8x256xi1> to vector<8x256xi32>
      %828 = arith.sitofp %827 : vector<8x256xi32> to vector<8x256xf32>
      %829 = arith.cmpi ne, %823, %12 : vector<8x1xi32>
      %830 = arith.extui %829 : vector<8x1xi1> to vector<8x1xi32>
      %831 = arith.sitofp %830 : vector<8x1xi32> to vector<8x1xf32>
      %832 = arith.maximumf %800, %828 : vector<8x256xf32>
      %833 = vector.broadcast %831 : vector<8x1xf32> to vector<8x256xf32>
      %834 = arith.mulf %833, %828 : vector<8x256xf32>
      %835 = arith.subf %799, %834 : vector<8x256xf32>
      %cst_311 = arith.constant 0.000000e+00 : f32
      %836 = vector.broadcast %cst_311 : f32 to vector<8x256xf32>
      %837 = arith.maximumf %835, %836 : vector<8x256xf32>
      %c4_i32_312 = arith.constant 4 : i32
      %838 = vector.broadcast %c4_i32_312 : i32 to vector<8x1xi32>
      %839 = arith.shrsi %823, %838 : vector<8x1xi32>
      %840 = arith.sitofp %839 : vector<8x1xi32> to vector<8x1xf32>
      %c15_i32_313 = arith.constant 15 : i32
      %841 = vector.broadcast %c15_i32_313 : i32 to vector<8x1xi32>
      %842 = arith.andi %823, %841 : vector<8x1xi32>
      %843 = arith.sitofp %842 : vector<8x1xi32> to vector<8x1xf32>
      %844 = vector.broadcast %0 : vector<1x256xf32> to vector<8x256xf32>
      %845 = vector.broadcast %840 : vector<8x1xf32> to vector<8x256xf32>
      %846 = arith.subf %844, %845 : vector<8x256xf32>
      %847 = math.absf %846 : vector<8x256xf32>
      %cst_314 = arith.constant 1.000000e+00 : f32
      %848 = vector.broadcast %cst_314 : f32 to vector<8x256xf32>
      %849 = arith.cmpf ole, %847, %848 : vector<8x256xf32>
      %850 = vector.broadcast %1 : vector<1x256xf32> to vector<8x256xf32>
      %851 = vector.broadcast %843 : vector<8x1xf32> to vector<8x256xf32>
      %852 = arith.subf %850, %851 : vector<8x256xf32>
      %853 = math.absf %852 : vector<8x256xf32>
      %cst_315 = arith.constant 1.000000e+00 : f32
      %854 = vector.broadcast %cst_315 : f32 to vector<8x256xf32>
      %855 = arith.cmpf ole, %853, %854 : vector<8x256xf32>
      %856 = arith.andi %849, %855 : vector<8x256xi1>
      %cst_316 = arith.constant dense<true> : vector<8x256xi1>
      %857 = arith.xori %826, %cst_316 : vector<8x256xi1>
      %858 = arith.andi %856, %857 : vector<8x256xi1>
      %859 = arith.extui %858 : vector<8x256xi1> to vector<8x256xi32>
      %860 = arith.sitofp %859 : vector<8x256xi32> to vector<8x256xf32>
      %861 = arith.mulf %860, %805 : vector<8x256xf32>
      %862 = arith.addf %801, %804 : vector<8x256xf32>
      %863 = arith.mulf %862, %828 : vector<8x256xf32>
      %cst_317 = arith.constant dense<0.000000e+00> : vector<8xf32>
      %864 = vector.multi_reduction <add>, %863, %cst_317 [1] : vector<8x256xf32> to vector<8xf32>
      %865 = vector.shape_cast %864 : vector<8xf32> to vector<8x1xf32>
      %866 = vector.broadcast %865 : vector<8x1xf32> to vector<8x256xf32>
      %867 = arith.mulf %866, %860 : vector<8x256xf32>
      %cst_318 = arith.constant 1.000000e+00 : f32
      %868 = vector.broadcast %cst_318 : f32 to vector<8x256xf32>
      %869 = arith.subf %868, %837 : vector<8x256xf32>
      %cst_319 = arith.constant 1.000000e+00 : f32
      %870 = vector.broadcast %cst_319 : f32 to vector<8x256xf32>
      %871 = arith.subf %870, %832 : vector<8x256xf32>
      %872 = arith.mulf %869, %871 : vector<8x256xf32>
      %873 = arith.cmpf ogt, %801, %867 : vector<8x256xf32>
      %874 = arith.extui %873 : vector<8x256xi1> to vector<8x256xi32>
      %875 = arith.sitofp %874 : vector<8x256xi32> to vector<8x256xf32>
      %876 = arith.mulf %837, %875 : vector<8x256xf32>
      %877 = arith.addf %872, %876 : vector<8x256xf32>
      %878 = arith.mulf %877, %861 : vector<8x256xf32>
      %879 = arith.mulf %867, %878 : vector<8x256xf32>
      %cst_320 = arith.constant 1.000000e+00 : f32
      %880 = vector.broadcast %cst_320 : f32 to vector<8x256xf32>
      %881 = arith.subf %880, %878 : vector<8x256xf32>
      %882 = arith.mulf %801, %881 : vector<8x256xf32>
      %883 = arith.addf %879, %882 : vector<8x256xf32>
      %884 = arith.maximumf %837, %878 : vector<8x256xf32>
      %cst_321 = arith.constant 5.000000e-01 : f32
      %885 = vector.broadcast %cst_321 : f32 to vector<8x256xf32>
      %886 = arith.cmpf ogt, %878, %885 : vector<8x256xf32>
      %887 = vector.shape_cast %823 : vector<8x1xi32> to vector<8x1xi32>
      %888 = vector.broadcast %887 : vector<8x1xi32> to vector<8x256xi32>
      %889 = arith.select %886, %888, %802 : vector<8x256xi1>, vector<8x256xi32>
      %890 = vector.shape_cast %798 : vector<1x1xi1> to vector<1x1xi1>
      %891 = vector.broadcast %890 : vector<1x1xi1> to vector<8x256xi1>
      %892 = arith.select %891, %884, %799 : vector<8x256xi1>, vector<8x256xf32>
      %c0_322 = arith.constant 0 : index
      %c0_323 = arith.constant 0 : index
      %893 = vector.load %arg8[%c0_322, %c0_323] : memref<8x256xf32, #tpu.memory_space<vmem>>, vector<8x256xf32>
      tpu.vector_store %arg8[%c0_322, %c0_323], %892 {strides = array<i32>} : memref<8x256xf32, #tpu.memory_space<vmem>>, vector<8x256xf32>,
      %894 = vector.shape_cast %798 : vector<1x1xi1> to vector<1x1xi1>
      %895 = vector.broadcast %894 : vector<1x1xi1> to vector<8x256xi1>
      %896 = arith.select %895, %832, %800 : vector<8x256xi1>, vector<8x256xf32>
      %c0_324 = arith.constant 0 : index
      %c0_325 = arith.constant 0 : index
      %897 = vector.load %arg6[%c0_324, %c0_325] : memref<8x256xf32, #tpu.memory_space<vmem>>, vector<8x256xf32>
      tpu.vector_store %arg6[%c0_324, %c0_325], %896 {strides = array<i32>} : memref<8x256xf32, #tpu.memory_space<vmem>>, vector<8x256xf32>,
      %898 = vector.shape_cast %798 : vector<1x1xi1> to vector<1x1xi1>
      %899 = vector.broadcast %898 : vector<1x1xi1> to vector<8x256xi1>
      %900 = arith.select %899, %883, %801 : vector<8x256xi1>, vector<8x256xf32>
      %c0_326 = arith.constant 0 : index
      %c0_327 = arith.constant 0 : index
      %901 = vector.load %arg9[%c0_326, %c0_327] : memref<8x256xf32, #tpu.memory_space<vmem>>, vector<8x256xf32>
      tpu.vector_store %arg9[%c0_326, %c0_327], %900 {strides = array<i32>} : memref<8x256xf32, #tpu.memory_space<vmem>>, vector<8x256xf32>,
      %902 = vector.shape_cast %798 : vector<1x1xi1> to vector<1x1xi1>
      %903 = vector.broadcast %902 : vector<1x1xi1> to vector<8x256xi1>
      %904 = arith.select %903, %889, %802 : vector<8x256xi1>, vector<8x256xi32>
      %c0_328 = arith.constant 0 : index
      %c0_329 = arith.constant 0 : index
      %905 = vector.load %arg10[%c0_328, %c0_329] : memref<8x256xi32, #tpu.memory_space<vmem>>, vector<8x256xi32>
      tpu.vector_store %arg10[%c0_328, %c0_329], %904 {strides = array<i32>} : memref<8x256xi32, #tpu.memory_space<vmem>>, vector<8x256xi32>,
      %cst_330 = arith.constant dense<0.000000e+00> : vector<1xf32>
      %906 = vector.multi_reduction <add>, %831, %cst_330 [0] : vector<8x1xf32> to vector<1xf32>
      %907 = vector.shape_cast %906 : vector<1xf32> to vector<1x1xf32>
      %cst_331 = arith.constant 5.000000e-01 : f32
      %908 = vector.broadcast %cst_331 : f32 to vector<1x1xf32>
      %909 = arith.cmpf olt, %907, %908 : vector<1x1xf32>
      %910 = arith.andi %798, %909 : vector<1x1xi1>
      %911 = arith.extui %910 : vector<1x1xi1> to vector<1x1xi32>
      %912 = arith.maxsi %791, %911 : vector<1x1xi32>
      %913 = arith.extui %798 : vector<1x1xi1> to vector<1x1xi32>
      %914 = arith.addi %793, %913 : vector<1x1xi32>
      %c0_i32_332 = arith.constant 0 : i32
      %915 = vector.broadcast %c0_i32_332 : i32 to vector<1x1xi32>
      %916 = arith.cmpi eq, %912, %915 : vector<1x1xi32>
      %c256_i32_333 = arith.constant 256 : i32
      %917 = vector.broadcast %c256_i32_333 : i32 to vector<1x1xi32>
      %918 = arith.cmpi slt, %914, %917 : vector<1x1xi32>
      %919 = arith.andi %916, %918 : vector<1x1xi1>
      %c0_334 = arith.constant 0 : index
      %c0_335 = arith.constant 0 : index
      %920 = vector.load %arg8[%c0_334, %c0_335] : memref<8x256xf32, #tpu.memory_space<vmem>>, vector<8x256xf32>
      %c0_336 = arith.constant 0 : index
      %c0_337 = arith.constant 0 : index
      %921 = vector.load %arg6[%c0_336, %c0_337] : memref<8x256xf32, #tpu.memory_space<vmem>>, vector<8x256xf32>
      %c0_338 = arith.constant 0 : index
      %c0_339 = arith.constant 0 : index
      %922 = vector.load %arg9[%c0_338, %c0_339] : memref<8x256xf32, #tpu.memory_space<vmem>>, vector<8x256xf32>
      %c0_340 = arith.constant 0 : index
      %c0_341 = arith.constant 0 : index
      %923 = vector.load %arg10[%c0_340, %c0_341] : memref<8x256xi32, #tpu.memory_space<vmem>>, vector<8x256xi32>
      %c0_342 = arith.constant 0 : index
      %c0_343 = arith.constant 0 : index
      %924 = vector.load %arg11[%c0_342, %c0_343] : memref<8x256xf32, #tpu.memory_space<vmem>>, vector<8x256xf32>
      %c0_344 = arith.constant 0 : index
      %c0_345 = arith.constant 0 : index
      %925 = vector.load %arg0[%c0_344, %c0_345] : memref<8x256xf32, #tpu.memory_space<vmem>>, vector<8x256xf32>
      %c0_346 = arith.constant 0 : index
      %c0_347 = arith.constant 0 : index
      %926 = vector.load %arg3[%c0_346, %c0_347] : memref<8x256xf32, #tpu.memory_space<vmem>>, vector<8x256xf32>
      %cst_348 = arith.constant 5.000000e-01 : f32
      %927 = vector.broadcast %cst_348 : f32 to vector<8x256xf32>
      %928 = arith.mulf %927, %922 : vector<8x256xf32>
      %929 = arith.addf %928, %924 : vector<8x256xf32>
      %930 = tpu.bitcast %929 : vector<8x256xf32> -> vector<8x256xi32>
      %c-256_i32_349 = arith.constant -256 : i32
      %931 = vector.broadcast %c-256_i32_349 : i32 to vector<8x256xi32>
      %932 = arith.andi %930, %931 : vector<8x256xi32>
      %933 = vector.broadcast %2 : vector<1x256xi32> to vector<8x256xi32>
      %934 = arith.ori %932, %933 : vector<8x256xi32>
      %cst_350 = arith.constant 5.000000e-01 : f32
      %935 = vector.broadcast %cst_350 : f32 to vector<8x256xf32>
      %936 = arith.cmpf ogt, %920, %935 : vector<8x256xf32>
      %937 = vector.broadcast %c2147483647_i32 : i32 to vector<8x256xi32>
      %938 = arith.select %936, %934, %937 : vector<8x256xi1>, vector<8x256xi32>
      %cst_351 = arith.constant dense<2147483647> : vector<8xi32>
      %939 = vector.multi_reduction <minsi>, %938, %cst_351 [1] : vector<8x256xi32> to vector<8xi32>
      %940 = vector.shape_cast %939 : vector<8xi32> to vector<8x1xi32>
      %c255_i32_352 = arith.constant 255 : i32
      %941 = vector.broadcast %c255_i32_352 : i32 to vector<8x1xi32>
      %942 = arith.andi %940, %941 : vector<8x1xi32>
      %c255_i32_353 = arith.constant 255 : i32
      %943 = vector.broadcast %c255_i32_353 : i32 to vector<8x1xi32>
      %944 = arith.minsi %942, %943 : vector<8x1xi32>
      %945 = vector.broadcast %2 : vector<1x256xi32> to vector<8x256xi32>
      %946 = vector.broadcast %944 : vector<8x1xi32> to vector<8x256xi32>
      %947 = arith.cmpi eq, %945, %946 : vector<8x256xi32>
      %948 = arith.extui %947 : vector<8x256xi1> to vector<8x256xi32>
      %949 = arith.sitofp %948 : vector<8x256xi32> to vector<8x256xf32>
      %950 = arith.cmpi ne, %944, %12 : vector<8x1xi32>
      %951 = arith.extui %950 : vector<8x1xi1> to vector<8x1xi32>
      %952 = arith.sitofp %951 : vector<8x1xi32> to vector<8x1xf32>
      %953 = arith.maximumf %921, %949 : vector<8x256xf32>
      %954 = vector.broadcast %952 : vector<8x1xf32> to vector<8x256xf32>
      %955 = arith.mulf %954, %949 : vector<8x256xf32>
      %956 = arith.subf %920, %955 : vector<8x256xf32>
      %cst_354 = arith.constant 0.000000e+00 : f32
      %957 = vector.broadcast %cst_354 : f32 to vector<8x256xf32>
      %958 = arith.maximumf %956, %957 : vector<8x256xf32>
      %c4_i32_355 = arith.constant 4 : i32
      %959 = vector.broadcast %c4_i32_355 : i32 to vector<8x1xi32>
      %960 = arith.shrsi %944, %959 : vector<8x1xi32>
      %961 = arith.sitofp %960 : vector<8x1xi32> to vector<8x1xf32>
      %c15_i32_356 = arith.constant 15 : i32
      %962 = vector.broadcast %c15_i32_356 : i32 to vector<8x1xi32>
      %963 = arith.andi %944, %962 : vector<8x1xi32>
      %964 = arith.sitofp %963 : vector<8x1xi32> to vector<8x1xf32>
      %965 = vector.broadcast %0 : vector<1x256xf32> to vector<8x256xf32>
      %966 = vector.broadcast %961 : vector<8x1xf32> to vector<8x256xf32>
      %967 = arith.subf %965, %966 : vector<8x256xf32>
      %968 = math.absf %967 : vector<8x256xf32>
      %cst_357 = arith.constant 1.000000e+00 : f32
      %969 = vector.broadcast %cst_357 : f32 to vector<8x256xf32>
      %970 = arith.cmpf ole, %968, %969 : vector<8x256xf32>
      %971 = vector.broadcast %1 : vector<1x256xf32> to vector<8x256xf32>
      %972 = vector.broadcast %964 : vector<8x1xf32> to vector<8x256xf32>
      %973 = arith.subf %971, %972 : vector<8x256xf32>
      %974 = math.absf %973 : vector<8x256xf32>
      %cst_358 = arith.constant 1.000000e+00 : f32
      %975 = vector.broadcast %cst_358 : f32 to vector<8x256xf32>
      %976 = arith.cmpf ole, %974, %975 : vector<8x256xf32>
      %977 = arith.andi %970, %976 : vector<8x256xi1>
      %cst_359 = arith.constant dense<true> : vector<8x256xi1>
      %978 = arith.xori %947, %cst_359 : vector<8x256xi1>
      %979 = arith.andi %977, %978 : vector<8x256xi1>
      %980 = arith.extui %979 : vector<8x256xi1> to vector<8x256xi32>
      %981 = arith.sitofp %980 : vector<8x256xi32> to vector<8x256xf32>
      %982 = arith.mulf %981, %926 : vector<8x256xf32>
      %983 = arith.addf %922, %925 : vector<8x256xf32>
      %984 = arith.mulf %983, %949 : vector<8x256xf32>
      %cst_360 = arith.constant dense<0.000000e+00> : vector<8xf32>
      %985 = vector.multi_reduction <add>, %984, %cst_360 [1] : vector<8x256xf32> to vector<8xf32>
      %986 = vector.shape_cast %985 : vector<8xf32> to vector<8x1xf32>
      %987 = vector.broadcast %986 : vector<8x1xf32> to vector<8x256xf32>
      %988 = arith.mulf %987, %981 : vector<8x256xf32>
      %cst_361 = arith.constant 1.000000e+00 : f32
      %989 = vector.broadcast %cst_361 : f32 to vector<8x256xf32>
      %990 = arith.subf %989, %958 : vector<8x256xf32>
      %cst_362 = arith.constant 1.000000e+00 : f32
      %991 = vector.broadcast %cst_362 : f32 to vector<8x256xf32>
      %992 = arith.subf %991, %953 : vector<8x256xf32>
      %993 = arith.mulf %990, %992 : vector<8x256xf32>
      %994 = arith.cmpf ogt, %922, %988 : vector<8x256xf32>
      %995 = arith.extui %994 : vector<8x256xi1> to vector<8x256xi32>
      %996 = arith.sitofp %995 : vector<8x256xi32> to vector<8x256xf32>
      %997 = arith.mulf %958, %996 : vector<8x256xf32>
      %998 = arith.addf %993, %997 : vector<8x256xf32>
      %999 = arith.mulf %998, %982 : vector<8x256xf32>
      %1000 = arith.mulf %988, %999 : vector<8x256xf32>
      %cst_363 = arith.constant 1.000000e+00 : f32
      %1001 = vector.broadcast %cst_363 : f32 to vector<8x256xf32>
      %1002 = arith.subf %1001, %999 : vector<8x256xf32>
      %1003 = arith.mulf %922, %1002 : vector<8x256xf32>
      %1004 = arith.addf %1000, %1003 : vector<8x256xf32>
      %1005 = arith.maximumf %958, %999 : vector<8x256xf32>
      %cst_364 = arith.constant 5.000000e-01 : f32
      %1006 = vector.broadcast %cst_364 : f32 to vector<8x256xf32>
      %1007 = arith.cmpf ogt, %999, %1006 : vector<8x256xf32>
      %1008 = vector.shape_cast %944 : vector<8x1xi32> to vector<8x1xi32>
      %1009 = vector.broadcast %1008 : vector<8x1xi32> to vector<8x256xi32>
      %1010 = arith.select %1007, %1009, %923 : vector<8x256xi1>, vector<8x256xi32>
      %1011 = vector.shape_cast %919 : vector<1x1xi1> to vector<1x1xi1>
      %1012 = vector.broadcast %1011 : vector<1x1xi1> to vector<8x256xi1>
      %1013 = arith.select %1012, %1005, %920 : vector<8x256xi1>, vector<8x256xf32>
      %c0_365 = arith.constant 0 : index
      %c0_366 = arith.constant 0 : index
      %1014 = vector.load %arg8[%c0_365, %c0_366] : memref<8x256xf32, #tpu.memory_space<vmem>>, vector<8x256xf32>
      tpu.vector_store %arg8[%c0_365, %c0_366], %1013 {strides = array<i32>} : memref<8x256xf32, #tpu.memory_space<vmem>>, vector<8x256xf32>,
      %1015 = vector.shape_cast %919 : vector<1x1xi1> to vector<1x1xi1>
      %1016 = vector.broadcast %1015 : vector<1x1xi1> to vector<8x256xi1>
      %1017 = arith.select %1016, %953, %921 : vector<8x256xi1>, vector<8x256xf32>
      %c0_367 = arith.constant 0 : index
      %c0_368 = arith.constant 0 : index
      %1018 = vector.load %arg6[%c0_367, %c0_368] : memref<8x256xf32, #tpu.memory_space<vmem>>, vector<8x256xf32>
      tpu.vector_store %arg6[%c0_367, %c0_368], %1017 {strides = array<i32>} : memref<8x256xf32, #tpu.memory_space<vmem>>, vector<8x256xf32>,
      %1019 = vector.shape_cast %919 : vector<1x1xi1> to vector<1x1xi1>
      %1020 = vector.broadcast %1019 : vector<1x1xi1> to vector<8x256xi1>
      %1021 = arith.select %1020, %1004, %922 : vector<8x256xi1>, vector<8x256xf32>
      %c0_369 = arith.constant 0 : index
      %c0_370 = arith.constant 0 : index
      %1022 = vector.load %arg9[%c0_369, %c0_370] : memref<8x256xf32, #tpu.memory_space<vmem>>, vector<8x256xf32>
      tpu.vector_store %arg9[%c0_369, %c0_370], %1021 {strides = array<i32>} : memref<8x256xf32, #tpu.memory_space<vmem>>, vector<8x256xf32>,
      %1023 = vector.shape_cast %919 : vector<1x1xi1> to vector<1x1xi1>
      %1024 = vector.broadcast %1023 : vector<1x1xi1> to vector<8x256xi1>
      %1025 = arith.select %1024, %1010, %923 : vector<8x256xi1>, vector<8x256xi32>
      %c0_371 = arith.constant 0 : index
      %c0_372 = arith.constant 0 : index
      %1026 = vector.load %arg10[%c0_371, %c0_372] : memref<8x256xi32, #tpu.memory_space<vmem>>, vector<8x256xi32>
      tpu.vector_store %arg10[%c0_371, %c0_372], %1025 {strides = array<i32>} : memref<8x256xi32, #tpu.memory_space<vmem>>, vector<8x256xi32>,
      %cst_373 = arith.constant dense<0.000000e+00> : vector<1xf32>
      %1027 = vector.multi_reduction <add>, %952, %cst_373 [0] : vector<8x1xf32> to vector<1xf32>
      %1028 = vector.shape_cast %1027 : vector<1xf32> to vector<1x1xf32>
      %cst_374 = arith.constant 5.000000e-01 : f32
      %1029 = vector.broadcast %cst_374 : f32 to vector<1x1xf32>
      %1030 = arith.cmpf olt, %1028, %1029 : vector<1x1xf32>
      %1031 = arith.andi %919, %1030 : vector<1x1xi1>
      %1032 = arith.extui %1031 : vector<1x1xi1> to vector<1x1xi32>
      %1033 = arith.maxsi %912, %1032 : vector<1x1xi32>
      %1034 = arith.extui %919 : vector<1x1xi1> to vector<1x1xi32>
      %1035 = arith.addi %914, %1034 : vector<1x1xi32>
      scf.yield %1035, %1033 : vector<1x1xi32>, vector<1x1xi32>
    }
    %c1_i32 = arith.constant 1 : i32
    %55 = vector.broadcast %c1_i32 : i32 to vector<1x1xi32>
    %56 = arith.subi %54#0, %55 : vector<1x1xi32>
    %cst_27 = arith.constant 5.000000e-01 : f32
    %57 = vector.broadcast %cst_27 : f32 to vector<8x256xf32>
    %58 = arith.cmpf ogt, %3, %57 : vector<8x256xf32>
    %59 = arith.extui %58 : vector<8x256xi1> to vector<8x256xi32>
    %c0_28 = arith.constant 0 : index
    %c0_29 = arith.constant 0 : index
    %60 = vector.load %arg7[%c0_28, %c0_29] : memref<8x256xi32, #tpu.memory_space<vmem>>, vector<8x256xi32>
    tpu.vector_store %arg7[%c0_28, %c0_29], %59 {strides = array<i32>} : memref<8x256xi32, #tpu.memory_space<vmem>>, vector<8x256xi32>,
    %c0_30 = arith.constant 0 : index
    %c0_31 = arith.constant 0 : index
    %61 = vector.load %arg10[%c0_30, %c0_31] : memref<8x256xi32, #tpu.memory_space<vmem>>, vector<8x256xi32>
    %c0_i32_32 = arith.constant 0 : i32
    %62 = vector.broadcast %c0_i32_32 : i32 to vector<8x256xi32>
    %63 = arith.select %58, %61, %62 : vector<8x256xi1>, vector<8x256xi32>
    %cst_33 = arith.constant dense<0> : vector<8xi32>
    %64 = vector.multi_reduction <add>, %63, %cst_33 [1] : vector<8x256xi32> to vector<8xi32>
    %65 = vector.shape_cast %64 : vector<8xi32> to vector<8x1xi32>
    %c0_i32_34 = arith.constant 0 : i32
    %66 = vector.broadcast %c0_i32_34 : i32 to vector<1x1xi32>
    %67:2 = scf.while (%arg12 = %66, %arg13 = %65) : (vector<1x1xi32>, vector<8x1xi32>) -> (vector<1x1xi32>, vector<8x1xi32>) {
      %68 = arith.cmpi slt, %arg12, %56 : vector<1x1xi32>
      %69 = arith.extui %68 : vector<1x1xi1> to vector<1x1xi32>
      %70 = vector.shape_cast %69 : vector<1x1xi32> to vector<1x1x1xi32>
      %cst_35 = arith.constant dense<0> : vector<1xi32>
      %71 = vector.multi_reduction <add>, %70, %cst_35 [1, 2] : vector<1x1x1xi32> to vector<1xi32>
      %72 = vector.shape_cast %71 : vector<1xi32> to vector<1x1x1xi32>
      %73 = vector.extract %72[0, 0, 0] : i32 from vector<1x1x1xi32>
      %c0_i32_36 = arith.constant 0 : i32
      %74 = arith.cmpi sgt, %73, %c0_i32_36 : i32
      scf.condition(%74) %arg12, %arg13 : vector<1x1xi32>, vector<8x1xi32>
    } do {
    ^bb0(%arg12: vector<1x1xi32>, %arg13: vector<8x1xi32>):
      %68 = vector.broadcast %2 : vector<1x256xi32> to vector<8x256xi32>
      %69 = vector.broadcast %arg13 : vector<8x1xi32> to vector<8x256xi32>
      %70 = arith.cmpi eq, %68, %69 : vector<8x256xi32>
      %c0_35 = arith.constant 0 : index
      %c0_36 = arith.constant 0 : index
      %71 = vector.load %arg7[%c0_35, %c0_36] : memref<8x256xi32, #tpu.memory_space<vmem>>, vector<8x256xi32>
      %c1_i32_37 = arith.constant 1 : i32
      %72 = vector.broadcast %c1_i32_37 : i32 to vector<8x256xi32>
      %73 = arith.select %70, %72, %71 : vector<8x256xi1>, vector<8x256xi32>
      %c0_38 = arith.constant 0 : index
      %c0_39 = arith.constant 0 : index
      %74 = vector.load %arg7[%c0_38, %c0_39] : memref<8x256xi32, #tpu.memory_space<vmem>>, vector<8x256xi32>
      tpu.vector_store %arg7[%c0_38, %c0_39], %73 {strides = array<i32>} : memref<8x256xi32, #tpu.memory_space<vmem>>, vector<8x256xi32>,
      %c0_40 = arith.constant 0 : index
      %c0_41 = arith.constant 0 : index
      %75 = vector.load %arg10[%c0_40, %c0_41] : memref<8x256xi32, #tpu.memory_space<vmem>>, vector<8x256xi32>
      %c0_i32_42 = arith.constant 0 : i32
      %76 = vector.broadcast %c0_i32_42 : i32 to vector<8x256xi32>
      %77 = arith.select %70, %75, %76 : vector<8x256xi1>, vector<8x256xi32>
      %cst_43 = arith.constant dense<0> : vector<8xi32>
      %78 = vector.multi_reduction <add>, %77, %cst_43 [1] : vector<8x256xi32> to vector<8xi32>
      %79 = vector.shape_cast %78 : vector<8xi32> to vector<8x1xi32>
      %c1_i32_44 = arith.constant 1 : i32
      %80 = vector.broadcast %c1_i32_44 : i32 to vector<1x1xi32>
      %81 = arith.addi %arg12, %80 : vector<1x1xi32>
      scf.yield %81, %79 : vector<1x1xi32>, vector<8x1xi32>
    }
    return
  }
}

</mosaic_0001>

<llo_original>
// kernel: tpu_custom_call.1
$region0: #{tpu_custom_call.1}
  #allocation0 [shape = 'u32[]', space=smem, size = 0x4, offset = 0x4, fixed_abs, tag = 'smem constant byte address 0x4 - core index']
  #allocation1 [shape = 'u32[144,128]{1,0:T(1,128)}', space=vmem, size = 0x12000, scoped, tag = 'internal scratch']
  #allocation2 [shape = 'f32[8,256]{1,0:T(8,128)}', space=vmem, size = 0x2000, scoped, tag = 'scratch operand']
  #allocation3 [shape = 'f32[8,256]{1,0:T(8,128)}', space=vmem, size = 0x2000, scoped, tag = 'scratch operand']
  #allocation4 [shape = 's32[8,256]{1,0:T(8,128)}', space=vmem, size = 0x2000, scoped, tag = 'scratch operand']
  #allocation5 [shape = 'f32[8,256]{1,0:T(8,128)}', space=vmem, size = 0x2000, scoped, tag = 'scratch operand']
  %s0 = inlined_call_operand.hbm [shape: f32[8,256], index: 0, kind: input, shape index: {}]
  %s1 = inlined_call_operand.hbm [shape: f32[8,256], index: 1, kind: input, shape index: {}]
  %s2 = inlined_call_operand.hbm [shape: f32[8,256], index: 2, kind: input, shape index: {}]
  %s3 = inlined_call_operand.hbm [shape: f32[8,256], index: 3, kind: input, shape index: {}]
  %s4 = inlined_call_operand.vmem [shape: f32[1,256], index: 4, kind: input, shape index: {}]
  %s5 = inlined_call_operand.vmem [shape: f32[1,256], index: 5, kind: input, shape index: {}]
  %s6 = inlined_call_operand.hbm [shape: f32[8,256], index: 6, kind: output, shape index: {0}]
  %s7 = inlined_call_operand.hbm [shape: s32[8,256], index: 7, kind: output, shape index: {1}]
  %8 = xla_tuple %s6, %s7
  %s9 = sld [smem:[#allocation0]]
  $region72: #{tpu_custom_call.1} parent=0
    _
  %s11 = ssub.s32 1, %s9
  %s12 = scalar_select 0, %s11, %s9
  $region1: #{tpu_custom_call.1} parent=0
    #allocation6 [shape = 'u8[8192]{0}', space=vmem, size = 0x2000, scoped, tag = 'input window, operand 0, single buffered']
    #allocation7 [shape = 's32[1]{0}', space=sflag, size = 0x4, scoped, tag = 'scoped memory for tpu_custom_call.1']
    #allocation8 [shape = 's32[1]{0}', space=sflag, size = 0x4, scoped, tag = 'scoped memory for tpu_custom_call.1']
    #allocation9 [shape = 'u8[8192]{0}', space=vmem, size = 0x2000, scoped, tag = 'input window, operand 1, single buffered']
    #allocation10 [shape = 's32[1]{0}', space=sflag, size = 0x4, scoped, tag = 'scoped memory for tpu_custom_call.1']
    #allocation11 [shape = 'u8[8192]{0}', space=vmem, size = 0x2000, scoped, tag = 'input window, operand 2, single buffered']
    #allocation12 [shape = 'u8[8192]{0}', space=vmem, size = 0x2000, scoped, tag = 'input window, operand 3, single buffered']
    #allocation13 [shape = 's32[1]{0}', space=sflag, size = 0x4, scoped, tag = 'scoped memory for tpu_custom_call.1']
    #allocation14 [shape = 'u8[8192]{0}', space=vmem, size = 0x2000, scoped, tag = 'output window, operand 0, single buffered']
    #allocation15 [shape = 'u8[8192]{0}', space=vmem, size = 0x2000, scoped, tag = 'output window, operand 1, single buffered']
    #allocation16 [shape = 's32[1]{0}', space=sflag, size = 0x4, scoped, tag = 'scoped memory for tpu_custom_call.1']
    %13 = vsyncpa [#allocation7], 0
    %14 = vsyncpa [#allocation10], 0
    %15 = vsyncpa [#allocation13], 0
    %16 = vsyncpa [#allocation8], 0
    %17 = vsyncpa [#allocation16], 0
    // Predicated region
    $region2: #{tpu_custom_call.1} parent=1 // pred_check
      _
    $region3: #{tpu_custom_call.1} parent=1 // pred_check_branch
      %19 = sbr.rel (0) target = $region5
    $region4: #{tpu_custom_call.1} parent=1 // pred_region
      %s21 = ssub.s32 256, 256
      %22 = vsyncadd [#allocation7], %s21
      %s24 = sshll.u32 [#allocation6], 4
      %s25 = int_to_ptr.vmem [resolvable:$true] %s24
      %27 = dma.hbm_to_vmem [thread:$0]  %s0, 256, %s25, [#allocation7]
    $region5: #{tpu_custom_call.1} parent=1 // pred_fallthru
      _
    // Predicated region
    $region6: #{tpu_custom_call.1} parent=1 // pred_check
      _
    $region7: #{tpu_custom_call.1} parent=1 // pred_check_branch
      %29 = sbr.rel (0) target = $region9
    $region8: #{tpu_custom_call.1} parent=1 // pred_region
      %s31 = ssub.s32 256, 256
      %32 = vsyncadd [#allocation10], %s31
      %s34 = sshll.u32 [#allocation9], 4
      %s35 = int_to_ptr.vmem [resolvable:$true] %s34
      %37 = dma.hbm_to_vmem [thread:$0]  %s1, 256, %s35, [#allocation10]
    $region9: #{tpu_custom_call.1} parent=1 // pred_fallthru
      _
    // Predicated region
    $region10: #{tpu_custom_call.1} parent=1 // pred_check
      _
    $region11: #{tpu_custom_call.1} parent=1 // pred_check_branch
      %39 = sbr.rel (0) target = $region13
    $region12: #{tpu_custom_call.1} parent=1 // pred_region
      %s41 = ssub.s32 256, 256
      %42 = vsyncadd [#allocation10], %s41
      %s44 = sshll.u32 [#allocation11], 4
      %s45 = int_to_ptr.vmem [resolvable:$true] %s44
      %47 = dma.hbm_to_vmem [thread:$0]  %s2, 256, %s45, [#allocation10]
    $region13: #{tpu_custom_call.1} parent=1 // pred_fallthru
      _
    // Predicated region
    $region14: #{tpu_custom_call.1} parent=1 // pred_check
      _
    $region15: #{tpu_custom_call.1} parent=1 // pred_check_branch
      %49 = sbr.rel (0) target = $region17
    $region16: #{tpu_custom_call.1} parent=1 // pred_region
      %s51 = ssub.s32 256, 256
      %52 = vsyncadd [#allocation13], %s51
      %s54 = sshll.u32 [#allocation12], 4
      %s55 = int_to_ptr.vmem [resolvable:$true] %s54
      %57 = dma.hbm_to_vmem [thread:$0]  %s3, 256, %s55, [#allocation13]
    $region17: #{tpu_custom_call.1} parent=1 // pred_fallthru
      _
    // Predicated region
    $region18: #{tpu_custom_call.1} parent=1 // pred_check
      _
    $region19: #{tpu_custom_call.1} parent=1 // pred_check_branch
      %59 = sbr.rel (0) target = $region21
    $region20: #{tpu_custom_call.1} parent=1 // pred_region
      _
    $region21: #{tpu_custom_call.1} parent=1 // pred_fallthru
      _
    // Predicated region
    $region22: #{tpu_custom_call.1} parent=1 // pred_check
      _
    $region23: #{tpu_custom_call.1} parent=1 // pred_check_branch
      %61 = sbr.rel (0) target = $region25
    $region24: #{tpu_custom_call.1} parent=1 // pred_region
      _
    $region25: #{tpu_custom_call.1} parent=1 // pred_fallthru
      _
    // Predicated region
    $region26: #{tpu_custom_call.1} parent=1 // pred_check
      _
    $region27: #{tpu_custom_call.1} parent=1 // pred_check_branch
      %63 = sbr.rel (0) target = $region29
    $region28: #{tpu_custom_call.1} parent=1 // pred_region
      %64 = dma.done [#allocation7], 256
    $region29: #{tpu_custom_call.1} parent=1 // pred_fallthru
      _
    // Predicated region
    $region30: #{tpu_custom_call.1} parent=1 // pred_check
      _
    $region31: #{tpu_custom_call.1} parent=1 // pred_check_branch
      %66 = sbr.rel (0) target = $region33
    $region32: #{tpu_custom_call.1} parent=1 // pred_region
      %67 = dma.done [#allocation10], 256
    $region33: #{tpu_custom_call.1} parent=1 // pred_fallthru
      _
    // Predicated region
    $region34: #{tpu_custom_call.1} parent=1 // pred_check
      _
    $region35: #{tpu_custom_call.1} parent=1 // pred_check_branch
      %69 = sbr.rel (0) target = $region37
    $region36: #{tpu_custom_call.1} parent=1 // pred_region
      %70 = dma.done [#allocation10], 256
    $region37: #{tpu_custom_call.1} parent=1 // pred_fallthru
      _
    // Predicated region
    $region38: #{tpu_custom_call.1} parent=1 // pred_check
      _
    $region39: #{tpu_custom_call.1} parent=1 // pred_check_branch
      %72 = sbr.rel (0) target = $region41
    $region40: #{tpu_custom_call.1} parent=1 // pred_region
      %73 = dma.done [#allocation13], 256
    $region41: #{tpu_custom_call.1} parent=1 // pred_fallthru
      _
    %v74 = vld [vmem:[%s4] sm:$0x3]
    %v75 = vld [vmem:[%s5] sm:$0x3]
    %v76 = vlaneseq
    %v77 = vand.u32 %v76, 127
    %v78 = vadd.s32 %v77, 128
    %v79 = vld [vmem:[#allocation11] sm:$0xff]
    %v80 = vld [vmem:[#allocation11 + $0x8] sm:$0xff]
    %v81 = vld [vmem:[#allocation6] sm:$0xff]
    %v82 = vld [vmem:[#allocation6 + $0x8] sm:$0xff]
    %vm83 = vcmp.gt.f32.partialorder %v79, 0.5
    %vm84 = vcmp.gt.f32.partialorder %v80, 0.5
    %v85 = vsel %vm83, %v77, 255
    %v86 = vsel %vm84, %v78, 255
    %vm87 = vcmp.lt.s32.totalorder %v85, %v86
    %v88 = vsel %vm87, %v85, %v86
    %v89 = vand.u32 %v88, 65535
    %v90 = vshra.s32 %v88, 16
    %v91 = vcvt.s32.f32 %v89
    %v92 = vcvt.s32.f32 %v90
    %93 = vmin.xlane.f32.xlu0 %v92
    %v94 = vpop.xlane.xlu0 %93
    %vm95 = vcmp.eq.f32.partialorder %v92, %v94
    %v96 = vsel %vm95, %v91, inf
    %97 = vmin.xlane.f32.xlu0 %v96
    %v98 = vpop.xlane.xlu0 %97
    %v99 = vcvt.f32.s32 %v98
    %v100 = vcvt.f32.s32 %v94
    %v101 = vshll.u32 %v100, 16
    %v102 = vadd.s32 %v101, %v99
    %v104 = vlaneseq
    %v105 = vshrl.u32 %v104, 7
    %v106 = vsub.s32 0, %v105
    %v107 = vrot.slane %v74, %v106
    %v108 = vlaneseq
    %v109 = vshrl.u32 %v108, 7
    %v110 = vsub.s32 1, %v109
    %v111 = vrot.slane %v74, %v110
    %v114 = vmul.f32 %v107, %v79
    %v115 = vmul.f32 %v111, %v80
    %v116 = vadd.f32 %v114, %v115
    %117 = vadd.xlane.f32.xlu0 %v116
    %v118 = vpop.xlane.xlu0 %117
    %v120 = vlaneseq
    %v121 = vshrl.u32 %v120, 7
    %v122 = vsub.s32 0, %v121
    %v123 = vrot.slane %v75, %v122
    %v124 = vlaneseq
    %v125 = vshrl.u32 %v124, 7
    %v126 = vsub.s32 1, %v125
    %v127 = vrot.slane %v75, %v126
    %v130 = vmul.f32 %v123, %v79
    %v131 = vmul.f32 %v127, %v80
    %v132 = vadd.f32 %v130, %v131
    %133 = vadd.xlane.f32.xlu0 %v132
    %v134 = vpop.xlane.xlu0 %133
    %v135 = vsub.f32 %v107, %v118
    %v136 = vsub.f32 %v111, %v118
    %v137 = vand.u32 2147483647, %v135
    %v138 = vand.u32 2147483647, %v136
    %v139 = vsub.f32 %v123, %v134
    %v140 = vsub.f32 %v127, %v134
    %v141 = vand.u32 2147483647, %v139
    %v142 = vand.u32 2147483647, %v140
    %v143 = vadd.f32 %v137, %v141
    %v144 = vadd.f32 %v138, %v142
    %v145 = vmin.f32 %v137, %v141
    %v146 = vmin.f32 %v138, %v142
    %v147 = vsub.f32 %v143, %v145
    %v148 = vsub.f32 %v144, %v146
    %v149 = vmul.f32 %v137, %v137
    %v150 = vmul.f32 %v138, %v138
    %v151 = vmul.f32 %v141, %v141
    %v152 = vmul.f32 %v142, %v142
    %v153 = vadd.f32 %v149, %v151
    %v154 = vadd.f32 %v150, %v152
    %v155 = vrsqrt.pop %v153
    %v156 = vmul.f32 %v153, %v155
    %vm157 = vcmp.eq.f32.partialorder %v153, inf
    %v158 = vsel %vm157, %v153, %v156
    %vm159 = vcmp.eq.f32.partialorder %v153, 0.0
    %v160 = vand.u32 %v153, 2147483648
    %v161 = vsel %vm159, %v160, %v158
    %v162 = vrsqrt.pop %v154
    %v163 = vmul.f32 %v154, %v162
    %vm164 = vcmp.eq.f32.partialorder %v154, inf
    %v165 = vsel %vm164, %v154, %v163
    %vm166 = vcmp.eq.f32.partialorder %v154, 0.0
    %v167 = vand.u32 %v154, 2147483648
    %v168 = vsel %vm166, %v167, %v165
    %v169 = vmul.f32 %v161, 0.001
    %v170 = vmul.f32 %v168, 0.001
    %v171 = vadd.f32 %v147, %v169
    %v172 = vadd.f32 %v148, %v170
    %v173 = vadd.f32 %v171, %v81
    %v174 = vadd.f32 %v172, %v82
    %v175 = vmul.f32 %v173, 0.5
    %v176 = vmul.f32 %v174, 0.5
    %177 = vst [vmem:[#allocation5] sm:$0xff] %v175
    %178 = vst [vmem:[#allocation5 + $0x8] sm:$0xff] %v176
    %v179 = vld [vmem:[#allocation9] sm:$0xff]
    %v180 = vld [vmem:[#allocation9 + $0x8] sm:$0xff]
    %181 = vst [vmem:[#allocation2] sm:$0xff] %v179
    %182 = vst [vmem:[#allocation2 + $0x8] sm:$0xff] %v180
    %183 = vst [vmem:[#allocation14] sm:$0xff] 0.0
    %184 = vst [vmem:[#allocation14 + $0x8] sm:$0xff] 0.0
    %185 = vst [vmem:[#allocation3] sm:$0xff] 0.0
    %186 = vst [vmem:[#allocation3 + $0x8] sm:$0xff] 0.0
    %187 = vst [vmem:[#allocation4] sm:$0xff] %v102
    %188 = vst [vmem:[#allocation4 + $0x8] sm:$0xff] %v102
    // While loop
    $region42: #{tpu_custom_call.1} parent=1 // loop_pre_header
      _
    $region43: #{tpu_custom_call.1} parent=1 // loop_header
      %v190 = vphi 0, %v1528
      %v191 = vphi 0, %v1527
      %vm192 = vcmp.lt.s32.totalorder %v190, 256
      %vm193 = vcmp.eq.s32.totalorder %v191, 0
      %vm194 = vmand %vm192, %vm193
      %v195 = vsel %vm194, 1, 0
      %s196 = vtos %v195
      %p197 = scmp.gt.s32.totalorder %s196, 0
      %p198 = pneg %p197
    $region44: #{tpu_custom_call.1} parent=1 // loop_header_branch
      %200 = sbr.rel (%p198) target = $region48
    $region45: #{tpu_custom_call.1} parent=1 // loop_body
      %vm201 = vcmp.eq.s32.totalorder %v191, 0
      %vm202 = vcmp.lt.s32.totalorder %v190, 256
      %vm203 = vmand %vm201, %vm202
      %v204 = vld [vmem:[#allocation2] sm:$0xff]
      %v205 = vld [vmem:[#allocation2 + $0x8] sm:$0xff]
      %v206 = vld [vmem:[#allocation14] sm:$0xff]
      %v207 = vld [vmem:[#allocation14 + $0x8] sm:$0xff]
      %v208 = vld [vmem:[#allocation3] sm:$0xff]
      %v209 = vld [vmem:[#allocation3 + $0x8] sm:$0xff]
      %v210 = vld [vmem:[#allocation4] sm:$0xff]
      %v211 = vld [vmem:[#allocation4 + $0x8] sm:$0xff]
      %v212 = vld [vmem:[#allocation5] sm:$0xff]
      %v213 = vld [vmem:[#allocation5 + $0x8] sm:$0xff]
      %v214 = vld [vmem:[#allocation6] sm:$0xff]
      %v215 = vld [vmem:[#allocation6 + $0x8] sm:$0xff]
      %v216 = vld [vmem:[#allocation12] sm:$0xff]
      %v217 = vld [vmem:[#allocation12 + $0x8] sm:$0xff]
      %v218 = vmul.f32 %v208, 0.5
      %v219 = vmul.f32 %v209, 0.5
      %v220 = vadd.f32 %v218, %v212
      %v221 = vadd.f32 %v219, %v213
      %v224 = vand.u32 %v220, 4294967040
      %v225 = vand.u32 %v221, 4294967040
      %v226 = vor.u32 %v224, %v77
      %v227 = vor.u32 %v225, %v78
      %vm228 = vcmp.gt.f32.partialorder %v204, 0.5
      %vm229 = vcmp.gt.f32.partialorder %v205, 0.5
      %v230 = vsel %vm228, %v226, 2147483647
      %v231 = vsel %vm229, %v227, 2147483647
      %vm232 = vcmp.lt.s32.totalorder %v230, %v231
      %v233 = vsel %vm232, %v230, %v231
      %v234 = vand.u32 %v233, 65535
      %v235 = vshra.s32 %v233, 16
      %v236 = vcvt.s32.f32 %v234
      %v237 = vcvt.s32.f32 %v235
      %238 = vmin.xlane.f32.xlu0 %v237
      %v239 = vpop.xlane.xlu0 %238
      %vm240 = vcmp.eq.f32.partialorder %v237, %v239
      %v241 = vsel %vm240, %v236, inf
      %242 = vmin.xlane.f32.xlu0 %v241
      %v243 = vpop.xlane.xlu0 %242
      %v244 = vcvt.f32.s32 %v243
      %v245 = vcvt.f32.s32 %v239
      %v246 = vshll.u32 %v245, 16
      %v247 = vadd.s32 %v246, %v244
      %v248 = vand.u32 %v247, 255
      %vm249 = vcmp.lt.s32.totalorder %v248, 255
      %v250 = vsel %vm249, %v248, 255
      %vm251 = vcmp.eq.s32.totalorder %v77, %v250
      %vm252 = vcmp.eq.s32.totalorder %v78, %v250
      %v253 = vsel %vm251, 1, 0
      %v254 = vsel %vm252, 1, 0
      %v255 = vcvt.s32.f32 %v253
      %v256 = vcvt.s32.f32 %v254
      %vm257 = vcmp.ne.s32.totalorder %v250, %v102
      %v258 = vsel %vm257, 1, 0
      %v259 = vcvt.s32.f32 %v258
      %v260 = vmax.f32 %v206, %v255
      %v261 = vmax.f32 %v207, %v256
      %v262 = vmul.f32 %v259, %v255
      %v263 = vmul.f32 %v259, %v256
      %v264 = vsub.f32 %v204, %v262
      %v265 = vsub.f32 %v205, %v263
      %v266 = vmax.f32 %v264, 0.0
      %v267 = vmax.f32 %v265, 0.0
      %v268 = vshra.s32 %v250, 4
      %v269 = vcvt.s32.f32 %v268
      %v270 = vand.u32 %v250, 15
      %v271 = vcvt.s32.f32 %v270
      %v272 = vsub.f32 %v107, %v269
      %v273 = vsub.f32 %v111, %v269
      %v274 = vand.u32 2147483647, %v272
      %v275 = vand.u32 2147483647, %v273
      %vm276 = vcmp.le.f32.partialorder %v274, 1.0
      %vm277 = vcmp.le.f32.partialorder %v275, 1.0
      %v278 = vsub.f32 %v123, %v271
      %v279 = vsub.f32 %v127, %v271
      %v280 = vand.u32 2147483647, %v278
      %v281 = vand.u32 2147483647, %v279
      %vm282 = vcmp.le.f32.partialorder %v280, 1.0
      %vm283 = vcmp.le.f32.partialorder %v281, 1.0
      %vm284 = vmand %vm276, %vm282
      %vm285 = vmand %vm277, %vm283
      %vm286 = vmxor %vm251, 1
      %vm287 = vmxor %vm252, 1
      %vm288 = vmand %vm284, %vm286
      %vm289 = vmand %vm285, %vm287
      %v290 = vsel %vm288, 1, 0
      %v291 = vsel %vm289, 1, 0
      %v292 = vcvt.s32.f32 %v290
      %v293 = vcvt.s32.f32 %v291
      %v294 = vmul.f32 %v292, %v216
      %v295 = vmul.f32 %v293, %v217
      %v296 = vadd.f32 %v208, %v214
      %v297 = vadd.f32 %v209, %v215
      %v298 = vmul.f32 %v296, %v255
      %v299 = vmul.f32 %v297, %v256
      %v300 = vadd.f32 %v298, %v299
      %301 = vadd.xlane.f32.xlu0 %v300
      %v302 = vpop.xlane.xlu0 %301
      %v303 = vmul.f32 %v302, %v292
      %v304 = vmul.f32 %v302, %v293
      %v305 = vsub.f32 1.0, %v266
      %v306 = vsub.f32 1.0, %v267
      %v307 = vsub.f32 1.0, %v260
      %v308 = vsub.f32 1.0, %v261
      %v309 = vmul.f32 %v305, %v307
      %v310 = vmul.f32 %v306, %v308
      %vm311 = vcmp.gt.f32.partialorder %v208, %v303
      %vm312 = vcmp.gt.f32.partialorder %v209, %v304
      %v313 = vsel %vm311, 1, 0
      %v314 = vsel %vm312, 1, 0
      %v315 = vcvt.s32.f32 %v313
      %v316 = vcvt.s32.f32 %v314
      %v317 = vmul.f32 %v266, %v315
      %v318 = vmul.f32 %v267, %v316
      %v319 = vadd.f32 %v309, %v317
      %v320 = vadd.f32 %v310, %v318
      %v321 = vmul.f32 %v319, %v294
      %v322 = vmul.f32 %v320, %v295
      %v323 = vmul.f32 %v303, %v321
      %v324 = vmul.f32 %v304, %v322
      %v325 = vsub.f32 1.0, %v321
      %v326 = vsub.f32 1.0, %v322
      %v327 = vmul.f32 %v208, %v325
      %v328 = vmul.f32 %v209, %v326
      %v329 = vadd.f32 %v323, %v327
      %v330 = vadd.f32 %v324, %v328
      %v331 = vmax.f32 %v266, %v321
      %v332 = vmax.f32 %v267, %v322
      %vm333 = vcmp.gt.f32.partialorder %v321, 0.5
      %vm334 = vcmp.gt.f32.partialorder %v322, 0.5
      %v335 = vsel %vm333, %v250, %v210
      %v336 = vsel %vm334, %v250, %v211
      %v337 = vsel %vm203, 1, 0
      %vm338 = vcmp.eq.s32.totalorder %v337, 1
      %v339 = vsel %vm338, %v331, %v204
      %v340 = vsel %vm338, %v332, %v205
      %341 = vst [vmem:[#allocation2] sm:$0xff] %v339
      %342 = vst [vmem:[#allocation2 + $0x8] sm:$0xff] %v340
      %v343 = vsel %vm338, %v260, %v206
      %v344 = vsel %vm338, %v261, %v207
      %345 = vst [vmem:[#allocation14] sm:$0xff] %v343
      %346 = vst [vmem:[#allocation14 + $0x8] sm:$0xff] %v344
      %v347 = vsel %vm338, %v329, %v208
      %v348 = vsel %vm338, %v330, %v209
      %349 = vst [vmem:[#allocation3] sm:$0xff] %v347
      %350 = vst [vmem:[#allocation3 + $0x8] sm:$0xff] %v348
      %v351 = vsel %vm338, %v335, %v210
      %v352 = vsel %vm338, %v336, %v211
      %353 = vst [vmem:[#allocation4] sm:$0xff] %v351
      %354 = vst [vmem:[#allocation4 + $0x8] sm:$0xff] %v352
      %v355 = vrot.slane %v259, 4
      %v356 = vadd.f32 %v259, %v355
      %v357 = vrot.slane %v356, 2
      %v358 = vadd.f32 %v356, %v357
      %v359 = vrot.slane %v358, 1
      %v360 = vadd.f32 %v358, %v359
      %vm361 = vcmp.lt.f32.partialorder %v360, 0.5
      %vm362 = vmand %vm203, %vm361
      %v363 = vsel %vm362, 1, 0
      %vm364 = vcmp.gt.s32.totalorder %v191, %v363
      %v365 = vsel %vm364, %v191, %v363
      %v366 = vadd.s32 %v190, %v337
      %vm367 = vcmp.eq.s32.totalorder %v365, 0
      %vm368 = vcmp.lt.s32.totalorder %v366, 256
      %vm369 = vmand %vm367, %vm368
      %v370 = vld [vmem:[#allocation2] sm:$0xff]
      %v371 = vld [vmem:[#allocation2 + $0x8] sm:$0xff]
      %v372 = vld [vmem:[#allocation14] sm:$0xff]
      %v373 = vld [vmem:[#allocation14 + $0x8] sm:$0xff]
      %v374 = vld [vmem:[#allocation3] sm:$0xff]
      %v375 = vld [vmem:[#allocation3 + $0x8] sm:$0xff]
      %v376 = vld [vmem:[#allocation4] sm:$0xff]
      %v377 = vld [vmem:[#allocation4 + $0x8] sm:$0xff]
      %v378 = vld [vmem:[#allocation5] sm:$0xff]
      %v379 = vld [vmem:[#allocation5 + $0x8] sm:$0xff]
      %v380 = vld [vmem:[#allocation6] sm:$0xff]
      %v381 = vld [vmem:[#allocation6 + $0x8] sm:$0xff]
      %v382 = vld [vmem:[#allocation12] sm:$0xff]
      %v383 = vld [vmem:[#allocation12 + $0x8] sm:$0xff]
      %v384 = vmul.f32 %v374, 0.5
      %v385 = vmul.f32 %v375, 0.5
      %v386 = vadd.f32 %v384, %v378
      %v387 = vadd.f32 %v385, %v379
      %v390 = vand.u32 %v386, 4294967040
      %v391 = vand.u32 %v387, 4294967040
      %v392 = vor.u32 %v390, %v77
      %v393 = vor.u32 %v391, %v78
      %vm394 = vcmp.gt.f32.partialorder %v370, 0.5
      %vm395 = vcmp.gt.f32.partialorder %v371, 0.5
      %v396 = vsel %vm394, %v392, 2147483647
      %v397 = vsel %vm395, %v393, 2147483647
      %vm398 = vcmp.lt.s32.totalorder %v396, %v397
      %v399 = vsel %vm398, %v396, %v397
      %v400 = vand.u32 %v399, 65535
      %v401 = vshra.s32 %v399, 16
      %v402 = vcvt.s32.f32 %v400
      %v403 = vcvt.s32.f32 %v401
      %404 = vmin.xlane.f32.xlu0 %v403
      %v405 = vpop.xlane.xlu0 %404
      %vm406 = vcmp.eq.f32.partialorder %v403, %v405
      %v407 = vsel %vm406, %v402, inf
      %408 = vmin.xlane.f32.xlu0 %v407
      %v409 = vpop.xlane.xlu0 %408
      %v410 = vcvt.f32.s32 %v409
      %v411 = vcvt.f32.s32 %v405
      %v412 = vshll.u32 %v411, 16
      %v413 = vadd.s32 %v412, %v410
      %v414 = vand.u32 %v413, 255
      %vm415 = vcmp.lt.s32.totalorder %v414, 255
      %v416 = vsel %vm415, %v414, 255
      %vm417 = vcmp.eq.s32.totalorder %v77, %v416
      %vm418 = vcmp.eq.s32.totalorder %v78, %v416
      %v419 = vsel %vm417, 1, 0
      %v420 = vsel %vm418, 1, 0
      %v421 = vcvt.s32.f32 %v419
      %v422 = vcvt.s32.f32 %v420
      %vm423 = vcmp.ne.s32.totalorder %v416, %v102
      %v424 = vsel %vm423, 1, 0
      %v425 = vcvt.s32.f32 %v424
      %v426 = vmax.f32 %v372, %v421
      %v427 = vmax.f32 %v373, %v422
      %v428 = vmul.f32 %v425, %v421
      %v429 = vmul.f32 %v425, %v422
      %v430 = vsub.f32 %v370, %v428
      %v431 = vsub.f32 %v371, %v429
      %v432 = vmax.f32 %v430, 0.0
      %v433 = vmax.f32 %v431, 0.0
      %v434 = vshra.s32 %v416, 4
      %v435 = vcvt.s32.f32 %v434
      %v436 = vand.u32 %v416, 15
      %v437 = vcvt.s32.f32 %v436
      %v438 = vsub.f32 %v107, %v435
      %v439 = vsub.f32 %v111, %v435
      %v440 = vand.u32 2147483647, %v438
      %v441 = vand.u32 2147483647, %v439
      %vm442 = vcmp.le.f32.partialorder %v440, 1.0
      %vm443 = vcmp.le.f32.partialorder %v441, 1.0
      %v444 = vsub.f32 %v123, %v437
      %v445 = vsub.f32 %v127, %v437
      %v446 = vand.u32 2147483647, %v444
      %v447 = vand.u32 2147483647, %v445
      %vm448 = vcmp.le.f32.partialorder %v446, 1.0
      %vm449 = vcmp.le.f32.partialorder %v447, 1.0
      %vm450 = vmand %vm442, %vm448
      %vm451 = vmand %vm443, %vm449
      %vm452 = vmxor %vm417, 1
      %vm453 = vmxor %vm418, 1
      %vm454 = vmand %vm450, %vm452
      %vm455 = vmand %vm451, %vm453
      %v456 = vsel %vm454, 1, 0
      %v457 = vsel %vm455, 1, 0
      %v458 = vcvt.s32.f32 %v456
      %v459 = vcvt.s32.f32 %v457
      %v460 = vmul.f32 %v458, %v382
      %v461 = vmul.f32 %v459, %v383
      %v462 = vadd.f32 %v374, %v380
      %v463 = vadd.f32 %v375, %v381
      %v464 = vmul.f32 %v462, %v421
      %v465 = vmul.f32 %v463, %v422
      %v466 = vadd.f32 %v464, %v465
      %467 = vadd.xlane.f32.xlu0 %v466
      %v468 = vpop.xlane.xlu0 %467
      %v469 = vmul.f32 %v468, %v458
      %v470 = vmul.f32 %v468, %v459
      %v471 = vsub.f32 1.0, %v432
      %v472 = vsub.f32 1.0, %v433
      %v473 = vsub.f32 1.0, %v426
      %v474 = vsub.f32 1.0, %v427
      %v475 = vmul.f32 %v471, %v473
      %v476 = vmul.f32 %v472, %v474
      %vm477 = vcmp.gt.f32.partialorder %v374, %v469
      %vm478 = vcmp.gt.f32.partialorder %v375, %v470
      %v479 = vsel %vm477, 1, 0
      %v480 = vsel %vm478, 1, 0
      %v481 = vcvt.s32.f32 %v479
      %v482 = vcvt.s32.f32 %v480
      %v483 = vmul.f32 %v432, %v481
      %v484 = vmul.f32 %v433, %v482
      %v485 = vadd.f32 %v475, %v483
      %v486 = vadd.f32 %v476, %v484
      %v487 = vmul.f32 %v485, %v460
      %v488 = vmul.f32 %v486, %v461
      %v489 = vmul.f32 %v469, %v487
      %v490 = vmul.f32 %v470, %v488
      %v491 = vsub.f32 1.0, %v487
      %v492 = vsub.f32 1.0, %v488
      %v493 = vmul.f32 %v374, %v491
      %v494 = vmul.f32 %v375, %v492
      %v495 = vadd.f32 %v489, %v493
      %v496 = vadd.f32 %v490, %v494
      %v497 = vmax.f32 %v432, %v487
      %v498 = vmax.f32 %v433, %v488
      %vm499 = vcmp.gt.f32.partialorder %v487, 0.5
      %vm500 = vcmp.gt.f32.partialorder %v488, 0.5
      %v501 = vsel %vm499, %v416, %v376
      %v502 = vsel %vm500, %v416, %v377
      %v503 = vsel %vm369, 1, 0
      %vm504 = vcmp.eq.s32.totalorder %v503, 1
      %v505 = vsel %vm504, %v497, %v370
      %v506 = vsel %vm504, %v498, %v371
      %507 = vst [vmem:[#allocation2] sm:$0xff] %v505
      %508 = vst [vmem:[#allocation2 + $0x8] sm:$0xff] %v506
      %v509 = vsel %vm504, %v426, %v372
      %v510 = vsel %vm504, %v427, %v373
      %511 = vst [vmem:[#allocation14] sm:$0xff] %v509
      %512 = vst [vmem:[#allocation14 + $0x8] sm:$0xff] %v510
      %v513 = vsel %vm504, %v495, %v374
      %v514 = vsel %vm504, %v496, %v375
      %515 = vst [vmem:[#allocation3] sm:$0xff] %v513
      %516 = vst [vmem:[#allocation3 + $0x8] sm:$0xff] %v514
      %v517 = vsel %vm504, %v501, %v376
      %v518 = vsel %vm504, %v502, %v377
      %519 = vst [vmem:[#allocation4] sm:$0xff] %v517
      %520 = vst [vmem:[#allocation4 + $0x8] sm:$0xff] %v518
      %v521 = vrot.slane %v425, 4
      %v522 = vadd.f32 %v425, %v521
      %v523 = vrot.slane %v522, 2
      %v524 = vadd.f32 %v522, %v523
      %v525 = vrot.slane %v524, 1
      %v526 = vadd.f32 %v524, %v525
      %vm527 = vcmp.lt.f32.partialorder %v526, 0.5
      %vm528 = vmand %vm369, %vm527
      %v529 = vsel %vm528, 1, 0
      %vm530 = vcmp.gt.s32.totalorder %v365, %v529
      %v531 = vsel %vm530, %v365, %v529
      %v532 = vadd.s32 %v366, %v503
      %vm533 = vcmp.eq.s32.totalorder %v531, 0
      %vm534 = vcmp.lt.s32.totalorder %v532, 256
      %vm535 = vmand %vm533, %vm534
      %v536 = vld [vmem:[#allocation2] sm:$0xff]
      %v537 = vld [vmem:[#allocation2 + $0x8] sm:$0xff]
      %v538 = vld [vmem:[#allocation14] sm:$0xff]
      %v539 = vld [vmem:[#allocation14 + $0x8] sm:$0xff]
      %v540 = vld [vmem:[#allocation3] sm:$0xff]
      %v541 = vld [vmem:[#allocation3 + $0x8] sm:$0xff]
      %v542 = vld [vmem:[#allocation4] sm:$0xff]
      %v543 = vld [vmem:[#allocation4 + $0x8] sm:$0xff]
      %v544 = vld [vmem:[#allocation5] sm:$0xff]
      %v545 = vld [vmem:[#allocation5 + $0x8] sm:$0xff]
      %v546 = vld [vmem:[#allocation6] sm:$0xff]
      %v547 = vld [vmem:[#allocation6 + $0x8] sm:$0xff]
      %v548 = vld [vmem:[#allocation12] sm:$0xff]
      %v549 = vld [vmem:[#allocation12 + $0x8] sm:$0xff]
      %v550 = vmul.f32 %v540, 0.5
      %v551 = vmul.f32 %v541, 0.5
      %v552 = vadd.f32 %v550, %v544
      %v553 = vadd.f32 %v551, %v545
      %v556 = vand.u32 %v552, 4294967040
      %v557 = vand.u32 %v553, 4294967040
      %v558 = vor.u32 %v556, %v77
      %v559 = vor.u32 %v557, %v78
      %vm560 = vcmp.gt.f32.partialorder %v536, 0.5
      %vm561 = vcmp.gt.f32.partialorder %v537, 0.5
      %v562 = vsel %vm560, %v558, 2147483647
      %v563 = vsel %vm561, %v559, 2147483647
      %vm564 = vcmp.lt.s32.totalorder %v562, %v563
      %v565 = vsel %vm564, %v562, %v563
      %v566 = vand.u32 %v565, 65535
      %v567 = vshra.s32 %v565, 16
      %v568 = vcvt.s32.f32 %v566
      %v569 = vcvt.s32.f32 %v567
      %570 = vmin.xlane.f32.xlu0 %v569
      %v571 = vpop.xlane.xlu0 %570
      %vm572 = vcmp.eq.f32.partialorder %v569, %v571
      %v573 = vsel %vm572, %v568, inf
      %574 = vmin.xlane.f32.xlu0 %v573
      %v575 = vpop.xlane.xlu0 %574
      %v576 = vcvt.f32.s32 %v575
      %v577 = vcvt.f32.s32 %v571
      %v578 = vshll.u32 %v577, 16
      %v579 = vadd.s32 %v578, %v576
      %v580 = vand.u32 %v579, 255
      %vm581 = vcmp.lt.s32.totalorder %v580, 255
      %v582 = vsel %vm581, %v580, 255
      %vm583 = vcmp.eq.s32.totalorder %v77, %v582
      %vm584 = vcmp.eq.s32.totalorder %v78, %v582
      %v585 = vsel %vm583, 1, 0
      %v586 = vsel %vm584, 1, 0
      %v587 = vcvt.s32.f32 %v585
      %v588 = vcvt.s32.f32 %v586
      %vm589 = vcmp.ne.s32.totalorder %v582, %v102
      %v590 = vsel %vm589, 1, 0
      %v591 = vcvt.s32.f32 %v590
      %v592 = vmax.f32 %v538, %v587
      %v593 = vmax.f32 %v539, %v588
      %v594 = vmul.f32 %v591, %v587
      %v595 = vmul.f32 %v591, %v588
      %v596 = vsub.f32 %v536, %v594
      %v597 = vsub.f32 %v537, %v595
      %v598 = vmax.f32 %v596, 0.0
      %v599 = vmax.f32 %v597, 0.0
      %v600 = vshra.s32 %v582, 4
      %v601 = vcvt.s32.f32 %v600
      %v602 = vand.u32 %v582, 15
      %v603 = vcvt.s32.f32 %v602
      %v604 = vsub.f32 %v107, %v601
      %v605 = vsub.f32 %v111, %v601
      %v606 = vand.u32 2147483647, %v604
      %v607 = vand.u32 2147483647, %v605
      %vm608 = vcmp.le.f32.partialorder %v606, 1.0
      %vm609 = vcmp.le.f32.partialorder %v607, 1.0
      %v610 = vsub.f32 %v123, %v603
      %v611 = vsub.f32 %v127, %v603
      %v612 = vand.u32 2147483647, %v610
      %v613 = vand.u32 2147483647, %v611
      %vm614 = vcmp.le.f32.partialorder %v612, 1.0
      %vm615 = vcmp.le.f32.partialorder %v613, 1.0
      %vm616 = vmand %vm608, %vm614
      %vm617 = vmand %vm609, %vm615
      %vm618 = vmxor %vm583, 1
      %vm619 = vmxor %vm584, 1
      %vm620 = vmand %vm616, %vm618
      %vm621 = vmand %vm617, %vm619
      %v622 = vsel %vm620, 1, 0
      %v623 = vsel %vm621, 1, 0
      %v624 = vcvt.s32.f32 %v622
      %v625 = vcvt.s32.f32 %v623
      %v626 = vmul.f32 %v624, %v548
      %v627 = vmul.f32 %v625, %v549
      %v628 = vadd.f32 %v540, %v546
      %v629 = vadd.f32 %v541, %v547
      %v630 = vmul.f32 %v628, %v587
      %v631 = vmul.f32 %v629, %v588
      %v632 = vadd.f32 %v630, %v631
      %633 = vadd.xlane.f32.xlu0 %v632
      %v634 = vpop.xlane.xlu0 %633
      %v635 = vmul.f32 %v634, %v624
      %v636 = vmul.f32 %v634, %v625
      %v637 = vsub.f32 1.0, %v598
      %v638 = vsub.f32 1.0, %v599
      %v639 = vsub.f32 1.0, %v592
      %v640 = vsub.f32 1.0, %v593
      %v641 = vmul.f32 %v637, %v639
      %v642 = vmul.f32 %v638, %v640
      %vm643 = vcmp.gt.f32.partialorder %v540, %v635
      %vm644 = vcmp.gt.f32.partialorder %v541, %v636
      %v645 = vsel %vm643, 1, 0
      %v646 = vsel %vm644, 1, 0
      %v647 = vcvt.s32.f32 %v645
      %v648 = vcvt.s32.f32 %v646
      %v649 = vmul.f32 %v598, %v647
      %v650 = vmul.f32 %v599, %v648
      %v651 = vadd.f32 %v641, %v649
      %v652 = vadd.f32 %v642, %v650
      %v653 = vmul.f32 %v651, %v626
      %v654 = vmul.f32 %v652, %v627
      %v655 = vmul.f32 %v635, %v653
      %v656 = vmul.f32 %v636, %v654
      %v657 = vsub.f32 1.0, %v653
      %v658 = vsub.f32 1.0, %v654
      %v659 = vmul.f32 %v540, %v657
      %v660 = vmul.f32 %v541, %v658
      %v661 = vadd.f32 %v655, %v659
      %v662 = vadd.f32 %v656, %v660
      %v663 = vmax.f32 %v598, %v653
      %v664 = vmax.f32 %v599, %v654
      %vm665 = vcmp.gt.f32.partialorder %v653, 0.5
      %vm666 = vcmp.gt.f32.partialorder %v654, 0.5
      %v667 = vsel %vm665, %v582, %v542
      %v668 = vsel %vm666, %v582, %v543
      %v669 = vsel %vm535, 1, 0
      %vm670 = vcmp.eq.s32.totalorder %v669, 1
      %v671 = vsel %vm670, %v663, %v536
      %v672 = vsel %vm670, %v664, %v537
      %673 = vst [vmem:[#allocation2] sm:$0xff] %v671
      %674 = vst [vmem:[#allocation2 + $0x8] sm:$0xff] %v672
      %v675 = vsel %vm670, %v592, %v538
      %v676 = vsel %vm670, %v593, %v539
      %677 = vst [vmem:[#allocation14] sm:$0xff] %v675
      %678 = vst [vmem:[#allocation14 + $0x8] sm:$0xff] %v676
      %v679 = vsel %vm670, %v661, %v540
      %v680 = vsel %vm670, %v662, %v541
      %681 = vst [vmem:[#allocation3] sm:$0xff] %v679
      %682 = vst [vmem:[#allocation3 + $0x8] sm:$0xff] %v680
      %v683 = vsel %vm670, %v667, %v542
      %v684 = vsel %vm670, %v668, %v543
      %685 = vst [vmem:[#allocation4] sm:$0xff] %v683
      %686 = vst [vmem:[#allocation4 + $0x8] sm:$0xff] %v684
      %v687 = vrot.slane %v591, 4
      %v688 = vadd.f32 %v591, %v687
      %v689 = vrot.slane %v688, 2
      %v690 = vadd.f32 %v688, %v689
      %v691 = vrot.slane %v690, 1
      %v692 = vadd.f32 %v690, %v691
      %vm693 = vcmp.lt.f32.partialorder %v692, 0.5
      %vm694 = vmand %vm535, %vm693
      %v695 = vsel %vm694, 1, 0
      %vm696 = vcmp.gt.s32.totalorder %v531, %v695
      %v697 = vsel %vm696, %v531, %v695
      %v698 = vadd.s32 %v532, %v669
      %vm699 = vcmp.eq.s32.totalorder %v697, 0
      %vm700 = vcmp.lt.s32.totalorder %v698, 256
      %vm701 = vmand %vm699, %vm700
      %v702 = vld [vmem:[#allocation2] sm:$0xff]
      %v703 = vld [vmem:[#allocation2 + $0x8] sm:$0xff]
      %v704 = vld [vmem:[#allocation14] sm:$0xff]
      %v705 = vld [vmem:[#allocation14 + $0x8] sm:$0xff]
      %v706 = vld [vmem:[#allocation3] sm:$0xff]
      %v707 = vld [vmem:[#allocation3 + $0x8] sm:$0xff]
      %v708 = vld [vmem:[#allocation4] sm:$0xff]
      %v709 = vld [vmem:[#allocation4 + $0x8] sm:$0xff]
      %v710 = vld [vmem:[#allocation5] sm:$0xff]
      %v711 = vld [vmem:[#allocation5 + $0x8] sm:$0xff]
      %v712 = vld [vmem:[#allocation6] sm:$0xff]
      %v713 = vld [vmem:[#allocation6 + $0x8] sm:$0xff]
      %v714 = vld [vmem:[#allocation12] sm:$0xff]
      %v715 = vld [vmem:[#allocation12 + $0x8] sm:$0xff]
      %v716 = vmul.f32 %v706, 0.5
      %v717 = vmul.f32 %v707, 0.5
      %v718 = vadd.f32 %v716, %v710
      %v719 = vadd.f32 %v717, %v711
      %v722 = vand.u32 %v718, 4294967040
      %v723 = vand.u32 %v719, 4294967040
      %v724 = vor.u32 %v722, %v77
      %v725 = vor.u32 %v723, %v78
      %vm726 = vcmp.gt.f32.partialorder %v702, 0.5
      %vm727 = vcmp.gt.f32.partialorder %v703, 0.5
      %v728 = vsel %vm726, %v724, 2147483647
      %v729 = vsel %vm727, %v725, 2147483647
      %vm730 = vcmp.lt.s32.totalorder %v728, %v729
      %v731 = vsel %vm730, %v728, %v729
      %v732 = vand.u32 %v731, 65535
      %v733 = vshra.s32 %v731, 16
      %v734 = vcvt.s32.f32 %v732
      %v735 = vcvt.s32.f32 %v733
      %736 = vmin.xlane.f32.xlu0 %v735
      %v737 = vpop.xlane.xlu0 %736
      %vm738 = vcmp.eq.f32.partialorder %v735, %v737
      %v739 = vsel %vm738, %v734, inf
      %740 = vmin.xlane.f32.xlu0 %v739
      %v741 = vpop.xlane.xlu0 %740
      %v742 = vcvt.f32.s32 %v741
      %v743 = vcvt.f32.s32 %v737
      %v744 = vshll.u32 %v743, 16
      %v745 = vadd.s32 %v744, %v742
      %v746 = vand.u32 %v745, 255
      %vm747 = vcmp.lt.s32.totalorder %v746, 255
      %v748 = vsel %vm747, %v746, 255
      %vm749 = vcmp.eq.s32.totalorder %v77, %v748
      %vm750 = vcmp.eq.s32.totalorder %v78, %v748
      %v751 = vsel %vm749, 1, 0
      %v752 = vsel %vm750, 1, 0
      %v753 = vcvt.s32.f32 %v751
      %v754 = vcvt.s32.f32 %v752
      %vm755 = vcmp.ne.s32.totalorder %v748, %v102
      %v756 = vsel %vm755, 1, 0
      %v757 = vcvt.s32.f32 %v756
      %v758 = vmax.f32 %v704, %v753
      %v759 = vmax.f32 %v705, %v754
      %v760 = vmul.f32 %v757, %v753
      %v761 = vmul.f32 %v757, %v754
      %v762 = vsub.f32 %v702, %v760
      %v763 = vsub.f32 %v703, %v761
      %v764 = vmax.f32 %v762, 0.0
      %v765 = vmax.f32 %v763, 0.0
      %v766 = vshra.s32 %v748, 4
      %v767 = vcvt.s32.f32 %v766
      %v768 = vand.u32 %v748, 15
      %v769 = vcvt.s32.f32 %v768
      %v770 = vsub.f32 %v107, %v767
      %v771 = vsub.f32 %v111, %v767
      %v772 = vand.u32 2147483647, %v770
      %v773 = vand.u32 2147483647, %v771
      %vm774 = vcmp.le.f32.partialorder %v772, 1.0
      %vm775 = vcmp.le.f32.partialorder %v773, 1.0
      %v776 = vsub.f32 %v123, %v769
      %v777 = vsub.f32 %v127, %v769
      %v778 = vand.u32 2147483647, %v776
      %v779 = vand.u32 2147483647, %v777
      %vm780 = vcmp.le.f32.partialorder %v778, 1.0
      %vm781 = vcmp.le.f32.partialorder %v779, 1.0
      %vm782 = vmand %vm774, %vm780
      %vm783 = vmand %vm775, %vm781
      %vm784 = vmxor %vm749, 1
      %vm785 = vmxor %vm750, 1
      %vm786 = vmand %vm782, %vm784
      %vm787 = vmand %vm783, %vm785
      %v788 = vsel %vm786, 1, 0
      %v789 = vsel %vm787, 1, 0
      %v790 = vcvt.s32.f32 %v788
      %v791 = vcvt.s32.f32 %v789
      %v792 = vmul.f32 %v790, %v714
      %v793 = vmul.f32 %v791, %v715
      %v794 = vadd.f32 %v706, %v712
      %v795 = vadd.f32 %v707, %v713
      %v796 = vmul.f32 %v794, %v753
      %v797 = vmul.f32 %v795, %v754
      %v798 = vadd.f32 %v796, %v797
      %799 = vadd.xlane.f32.xlu0 %v798
      %v800 = vpop.xlane.xlu0 %799
      %v801 = vmul.f32 %v800, %v790
      %v802 = vmul.f32 %v800, %v791
      %v803 = vsub.f32 1.0, %v764
      %v804 = vsub.f32 1.0, %v765
      %v805 = vsub.f32 1.0, %v758
      %v806 = vsub.f32 1.0, %v759
      %v807 = vmul.f32 %v803, %v805
      %v808 = vmul.f32 %v804, %v806
      %vm809 = vcmp.gt.f32.partialorder %v706, %v801
      %vm810 = vcmp.gt.f32.partialorder %v707, %v802
      %v811 = vsel %vm809, 1, 0
      %v812 = vsel %vm810, 1, 0
      %v813 = vcvt.s32.f32 %v811
      %v814 = vcvt.s32.f32 %v812
      %v815 = vmul.f32 %v764, %v813
      %v816 = vmul.f32 %v765, %v814
      %v817 = vadd.f32 %v807, %v815
      %v818 = vadd.f32 %v808, %v816
      %v819 = vmul.f32 %v817, %v792
      %v820 = vmul.f32 %v818, %v793
      %v821 = vmul.f32 %v801, %v819
      %v822 = vmul.f32 %v802, %v820
      %v823 = vsub.f32 1.0, %v819
      %v824 = vsub.f32 1.0, %v820
      %v825 = vmul.f32 %v706, %v823
      %v826 = vmul.f32 %v707, %v824
      %v827 = vadd.f32 %v821, %v825
      %v828 = vadd.f32 %v822, %v826
      %v829 = vmax.f32 %v764, %v819
      %v830 = vmax.f32 %v765, %v820
      %vm831 = vcmp.gt.f32.partialorder %v819, 0.5
      %vm832 = vcmp.gt.f32.partialorder %v820, 0.5
      %v833 = vsel %vm831, %v748, %v708
      %v834 = vsel %vm832, %v748, %v709
      %v835 = vsel %vm701, 1, 0
      %vm836 = vcmp.eq.s32.totalorder %v835, 1
      %v837 = vsel %vm836, %v829, %v702
      %v838 = vsel %vm836, %v830, %v703
      %839 = vst [vmem:[#allocation2] sm:$0xff] %v837
      %840 = vst [vmem:[#allocation2 + $0x8] sm:$0xff] %v838
      %v841 = vsel %vm836, %v758, %v704
      %v842 = vsel %vm836, %v759, %v705
      %843 = vst [vmem:[#allocation14] sm:$0xff] %v841
      %844 = vst [vmem:[#allocation14 + $0x8] sm:$0xff] %v842
      %v845 = vsel %vm836, %v827, %v706
      %v846 = vsel %vm836, %v828, %v707
      %847 = vst [vmem:[#allocation3] sm:$0xff] %v845
      %848 = vst [vmem:[#allocation3 + $0x8] sm:$0xff] %v846
      %v849 = vsel %vm836, %v833, %v708
      %v850 = vsel %vm836, %v834, %v709
      %851 = vst [vmem:[#allocation4] sm:$0xff] %v849
      %852 = vst [vmem:[#allocation4 + $0x8] sm:$0xff] %v850
      %v853 = vrot.slane %v757, 4
      %v854 = vadd.f32 %v757, %v853
      %v855 = vrot.slane %v854, 2
      %v856 = vadd.f32 %v854, %v855
      %v857 = vrot.slane %v856, 1
      %v858 = vadd.f32 %v856, %v857
      %vm859 = vcmp.lt.f32.partialorder %v858, 0.5
      %vm860 = vmand %vm701, %vm859
      %v861 = vsel %vm860, 1, 0
      %vm862 = vcmp.gt.s32.totalorder %v697, %v861
      %v863 = vsel %vm862, %v697, %v861
      %v864 = vadd.s32 %v698, %v835
      %vm865 = vcmp.eq.s32.totalorder %v863, 0
      %vm866 = vcmp.lt.s32.totalorder %v864, 256
      %vm867 = vmand %vm865, %vm866
      %v868 = vld [vmem:[#allocation2] sm:$0xff]
      %v869 = vld [vmem:[#allocation2 + $0x8] sm:$0xff]
      %v870 = vld [vmem:[#allocation14] sm:$0xff]
      %v871 = vld [vmem:[#allocation14 + $0x8] sm:$0xff]
      %v872 = vld [vmem:[#allocation3] sm:$0xff]
      %v873 = vld [vmem:[#allocation3 + $0x8] sm:$0xff]
      %v874 = vld [vmem:[#allocation4] sm:$0xff]
      %v875 = vld [vmem:[#allocation4 + $0x8] sm:$0xff]
      %v876 = vld [vmem:[#allocation5] sm:$0xff]
      %v877 = vld [vmem:[#allocation5 + $0x8] sm:$0xff]
      %v878 = vld [vmem:[#allocation6] sm:$0xff]
      %v879 = vld [vmem:[#allocation6 + $0x8] sm:$0xff]
      %v880 = vld [vmem:[#allocation12] sm:$0xff]
      %v881 = vld [vmem:[#allocation12 + $0x8] sm:$0xff]
      %v882 = vmul.f32 %v872, 0.5
      %v883 = vmul.f32 %v873, 0.5
      %v884 = vadd.f32 %v882, %v876
      %v885 = vadd.f32 %v883, %v877
      %v888 = vand.u32 %v884, 4294967040
      %v889 = vand.u32 %v885, 4294967040
      %v890 = vor.u32 %v888, %v77
      %v891 = vor.u32 %v889, %v78
      %vm892 = vcmp.gt.f32.partialorder %v868, 0.5
      %vm893 = vcmp.gt.f32.partialorder %v869, 0.5
      %v894 = vsel %vm892, %v890, 2147483647
      %v895 = vsel %vm893, %v891, 2147483647
      %vm896 = vcmp.lt.s32.totalorder %v894, %v895
      %v897 = vsel %vm896, %v894, %v895
      %v898 = vand.u32 %v897, 65535
      %v899 = vshra.s32 %v897, 16
      %v900 = vcvt.s32.f32 %v898
      %v901 = vcvt.s32.f32 %v899
      %902 = vmin.xlane.f32.xlu0 %v901
      %v903 = vpop.xlane.xlu0 %902
      %vm904 = vcmp.eq.f32.partialorder %v901, %v903
      %v905 = vsel %vm904, %v900, inf
      %906 = vmin.xlane.f32.xlu0 %v905
      %v907 = vpop.xlane.xlu0 %906
      %v908 = vcvt.f32.s32 %v907
      %v909 = vcvt.f32.s32 %v903
      %v910 = vshll.u32 %v909, 16
      %v911 = vadd.s32 %v910, %v908
      %v912 = vand.u32 %v911, 255
      %vm913 = vcmp.lt.s32.totalorder %v912, 255
      %v914 = vsel %vm913, %v912, 255
      %vm915 = vcmp.eq.s32.totalorder %v77, %v914
      %vm916 = vcmp.eq.s32.totalorder %v78, %v914
      %v917 = vsel %vm915, 1, 0
      %v918 = vsel %vm916, 1, 0
      %v919 = vcvt.s32.f32 %v917
      %v920 = vcvt.s32.f32 %v918
      %vm921 = vcmp.ne.s32.totalorder %v914, %v102
      %v922 = vsel %vm921, 1, 0
      %v923 = vcvt.s32.f32 %v922
      %v924 = vmax.f32 %v870, %v919
      %v925 = vmax.f32 %v871, %v920
      %v926 = vmul.f32 %v923, %v919
      %v927 = vmul.f32 %v923, %v920
      %v928 = vsub.f32 %v868, %v926
      %v929 = vsub.f32 %v869, %v927
      %v930 = vmax.f32 %v928, 0.0
      %v931 = vmax.f32 %v929, 0.0
      %v932 = vshra.s32 %v914, 4
      %v933 = vcvt.s32.f32 %v932
      %v934 = vand.u32 %v914, 15
      %v935 = vcvt.s32.f32 %v934
      %v936 = vsub.f32 %v107, %v933
      %v937 = vsub.f32 %v111, %v933
      %v938 = vand.u32 2147483647, %v936
      %v939 = vand.u32 2147483647, %v937
      %vm940 = vcmp.le.f32.partialorder %v938, 1.0
      %vm941 = vcmp.le.f32.partialorder %v939, 1.0
      %v942 = vsub.f32 %v123, %v935
      %v943 = vsub.f32 %v127, %v935
      %v944 = vand.u32 2147483647, %v942
      %v945 = vand.u32 2147483647, %v943
      %vm946 = vcmp.le.f32.partialorder %v944, 1.0
      %vm947 = vcmp.le.f32.partialorder %v945, 1.0
      %vm948 = vmand %vm940, %vm946
      %vm949 = vmand %vm941, %vm947
      %vm950 = vmxor %vm915, 1
      %vm951 = vmxor %vm916, 1
      %vm952 = vmand %vm948, %vm950
      %vm953 = vmand %vm949, %vm951
      %v954 = vsel %vm952, 1, 0
      %v955 = vsel %vm953, 1, 0
      %v956 = vcvt.s32.f32 %v954
      %v957 = vcvt.s32.f32 %v955
      %v958 = vmul.f32 %v956, %v880
      %v959 = vmul.f32 %v957, %v881
      %v960 = vadd.f32 %v872, %v878
      %v961 = vadd.f32 %v873, %v879
      %v962 = vmul.f32 %v960, %v919
      %v963 = vmul.f32 %v961, %v920
      %v964 = vadd.f32 %v962, %v963
      %965 = vadd.xlane.f32.xlu0 %v964
      %v966 = vpop.xlane.xlu0 %965
      %v967 = vmul.f32 %v966, %v956
      %v968 = vmul.f32 %v966, %v957
      %v969 = vsub.f32 1.0, %v930
      %v970 = vsub.f32 1.0, %v931
      %v971 = vsub.f32 1.0, %v924
      %v972 = vsub.f32 1.0, %v925
      %v973 = vmul.f32 %v969, %v971
      %v974 = vmul.f32 %v970, %v972
      %vm975 = vcmp.gt.f32.partialorder %v872, %v967
      %vm976 = vcmp.gt.f32.partialorder %v873, %v968
      %v977 = vsel %vm975, 1, 0
      %v978 = vsel %vm976, 1, 0
      %v979 = vcvt.s32.f32 %v977
      %v980 = vcvt.s32.f32 %v978
      %v981 = vmul.f32 %v930, %v979
      %v982 = vmul.f32 %v931, %v980
      %v983 = vadd.f32 %v973, %v981
      %v984 = vadd.f32 %v974, %v982
      %v985 = vmul.f32 %v983, %v958
      %v986 = vmul.f32 %v984, %v959
      %v987 = vmul.f32 %v967, %v985
      %v988 = vmul.f32 %v968, %v986
      %v989 = vsub.f32 1.0, %v985
      %v990 = vsub.f32 1.0, %v986
      %v991 = vmul.f32 %v872, %v989
      %v992 = vmul.f32 %v873, %v990
      %v993 = vadd.f32 %v987, %v991
      %v994 = vadd.f32 %v988, %v992
      %v995 = vmax.f32 %v930, %v985
      %v996 = vmax.f32 %v931, %v986
      %vm997 = vcmp.gt.f32.partialorder %v985, 0.5
      %vm998 = vcmp.gt.f32.partialorder %v986, 0.5
      %v999 = vsel %vm997, %v914, %v874
      %v1000 = vsel %vm998, %v914, %v875
      %v1001 = vsel %vm867, 1, 0
      %vm1002 = vcmp.eq.s32.totalorder %v1001, 1
      %v1003 = vsel %vm1002, %v995, %v868
      %v1004 = vsel %vm1002, %v996, %v869
      %1005 = vst [vmem:[#allocation2] sm:$0xff] %v1003
      %1006 = vst [vmem:[#allocation2 + $0x8] sm:$0xff] %v1004
      %v1007 = vsel %vm1002, %v924, %v870
      %v1008 = vsel %vm1002, %v925, %v871
      %1009 = vst [vmem:[#allocation14] sm:$0xff] %v1007
      %1010 = vst [vmem:[#allocation14 + $0x8] sm:$0xff] %v1008
      %v1011 = vsel %vm1002, %v993, %v872
      %v1012 = vsel %vm1002, %v994, %v873
      %1013 = vst [vmem:[#allocation3] sm:$0xff] %v1011
      %1014 = vst [vmem:[#allocation3 + $0x8] sm:$0xff] %v1012
      %v1015 = vsel %vm1002, %v999, %v874
      %v1016 = vsel %vm1002, %v1000, %v875
      %1017 = vst [vmem:[#allocation4] sm:$0xff] %v1015
      %1018 = vst [vmem:[#allocation4 + $0x8] sm:$0xff] %v1016
      %v1019 = vrot.slane %v923, 4
      %v1020 = vadd.f32 %v923, %v1019
      %v1021 = vrot.slane %v1020, 2
      %v1022 = vadd.f32 %v1020, %v1021
      %v1023 = vrot.slane %v1022, 1
      %v1024 = vadd.f32 %v1022, %v1023
      %vm1025 = vcmp.lt.f32.partialorder %v1024, 0.5
      %vm1026 = vmand %vm867, %vm1025
      %v1027 = vsel %vm1026, 1, 0
      %vm1028 = vcmp.gt.s32.totalorder %v863, %v1027
      %v1029 = vsel %vm1028, %v863, %v1027
      %v1030 = vadd.s32 %v864, %v1001
      %vm1031 = vcmp.eq.s32.totalorder %v1029, 0
      %vm1032 = vcmp.lt.s32.totalorder %v1030, 256
      %vm1033 = vmand %vm1031, %vm1032
      %v1034 = vld [vmem:[#allocation2] sm:$0xff]
      %v1035 = vld [vmem:[#allocation2 + $0x8] sm:$0xff]
      %v1036 = vld [vmem:[#allocation14] sm:$0xff]
      %v1037 = vld [vmem:[#allocation14 + $0x8] sm:$0xff]
      %v1038 = vld [vmem:[#allocation3] sm:$0xff]
      %v1039 = vld [vmem:[#allocation3 + $0x8] sm:$0xff]
      %v1040 = vld [vmem:[#allocation4] sm:$0xff]
      %v1041 = vld [vmem:[#allocation4 + $0x8] sm:$0xff]
      %v1042 = vld [vmem:[#allocation5] sm:$0xff]
      %v1043 = vld [vmem:[#allocation5 + $0x8] sm:$0xff]
      %v1044 = vld [vmem:[#allocation6] sm:$0xff]
      %v1045 = vld [vmem:[#allocation6 + $0x8] sm:$0xff]
      %v1046 = vld [vmem:[#allocation12] sm:$0xff]
      %v1047 = vld [vmem:[#allocation12 + $0x8] sm:$0xff]
      %v1048 = vmul.f32 %v1038, 0.5
      %v1049 = vmul.f32 %v1039, 0.5
      %v1050 = vadd.f32 %v1048, %v1042
      %v1051 = vadd.f32 %v1049, %v1043
      %v1054 = vand.u32 %v1050, 4294967040
      %v1055 = vand.u32 %v1051, 4294967040
      %v1056 = vor.u32 %v1054, %v77
      %v1057 = vor.u32 %v1055, %v78
      %vm1058 = vcmp.gt.f32.partialorder %v1034, 0.5
      %vm1059 = vcmp.gt.f32.partialorder %v1035, 0.5
      %v1060 = vsel %vm1058, %v1056, 2147483647
      %v1061 = vsel %vm1059, %v1057, 2147483647
      %vm1062 = vcmp.lt.s32.totalorder %v1060, %v1061
      %v1063 = vsel %vm1062, %v1060, %v1061
      %v1064 = vand.u32 %v1063, 65535
      %v1065 = vshra.s32 %v1063, 16
      %v1066 = vcvt.s32.f32 %v1064
      %v1067 = vcvt.s32.f32 %v1065
      %1068 = vmin.xlane.f32.xlu0 %v1067
      %v1069 = vpop.xlane.xlu0 %1068
      %vm1070 = vcmp.eq.f32.partialorder %v1067, %v1069
      %v1071 = vsel %vm1070, %v1066, inf
      %1072 = vmin.xlane.f32.xlu0 %v1071
      %v1073 = vpop.xlane.xlu0 %1072
      %v1074 = vcvt.f32.s32 %v1073
      %v1075 = vcvt.f32.s32 %v1069
      %v1076 = vshll.u32 %v1075, 16
      %v1077 = vadd.s32 %v1076, %v1074
      %v1078 = vand.u32 %v1077, 255
      %vm1079 = vcmp.lt.s32.totalorder %v1078, 255
      %v1080 = vsel %vm1079, %v1078, 255
      %vm1081 = vcmp.eq.s32.totalorder %v77, %v1080
      %vm1082 = vcmp.eq.s32.totalorder %v78, %v1080
      %v1083 = vsel %vm1081, 1, 0
      %v1084 = vsel %vm1082, 1, 0
      %v1085 = vcvt.s32.f32 %v1083
      %v1086 = vcvt.s32.f32 %v1084
      %vm1087 = vcmp.ne.s32.totalorder %v1080, %v102
      %v1088 = vsel %vm1087, 1, 0
      %v1089 = vcvt.s32.f32 %v1088
      %v1090 = vmax.f32 %v1036, %v1085
      %v1091 = vmax.f32 %v1037, %v1086
      %v1092 = vmul.f32 %v1089, %v1085
      %v1093 = vmul.f32 %v1089, %v1086
      %v1094 = vsub.f32 %v1034, %v1092
      %v1095 = vsub.f32 %v1035, %v1093
      %v1096 = vmax.f32 %v1094, 0.0
      %v1097 = vmax.f32 %v1095, 0.0
      %v1098 = vshra.s32 %v1080, 4
      %v1099 = vcvt.s32.f32 %v1098
      %v1100 = vand.u32 %v1080, 15
      %v1101 = vcvt.s32.f32 %v1100
      %v1102 = vsub.f32 %v107, %v1099
      %v1103 = vsub.f32 %v111, %v1099
      %v1104 = vand.u32 2147483647, %v1102
      %v1105 = vand.u32 2147483647, %v1103
      %vm1106 = vcmp.le.f32.partialorder %v1104, 1.0
      %vm1107 = vcmp.le.f32.partialorder %v1105, 1.0
      %v1108 = vsub.f32 %v123, %v1101
      %v1109 = vsub.f32 %v127, %v1101
      %v1110 = vand.u32 2147483647, %v1108
      %v1111 = vand.u32 2147483647, %v1109
      %vm1112 = vcmp.le.f32.partialorder %v1110, 1.0
      %vm1113 = vcmp.le.f32.partialorder %v1111, 1.0
      %vm1114 = vmand %vm1106, %vm1112
      %vm1115 = vmand %vm1107, %vm1113
      %vm1116 = vmxor %vm1081, 1
      %vm1117 = vmxor %vm1082, 1
      %vm1118 = vmand %vm1114, %vm1116
      %vm1119 = vmand %vm1115, %vm1117
      %v1120 = vsel %vm1118, 1, 0
      %v1121 = vsel %vm1119, 1, 0
      %v1122 = vcvt.s32.f32 %v1120
      %v1123 = vcvt.s32.f32 %v1121
      %v1124 = vmul.f32 %v1122, %v1046
      %v1125 = vmul.f32 %v1123, %v1047
      %v1126 = vadd.f32 %v1038, %v1044
      %v1127 = vadd.f32 %v1039, %v1045
      %v1128 = vmul.f32 %v1126, %v1085
      %v1129 = vmul.f32 %v1127, %v1086
      %v1130 = vadd.f32 %v1128, %v1129
      %1131 = vadd.xlane.f32.xlu0 %v1130
      %v1132 = vpop.xlane.xlu0 %1131
      %v1133 = vmul.f32 %v1132, %v1122
      %v1134 = vmul.f32 %v1132, %v1123
      %v1135 = vsub.f32 1.0, %v1096
      %v1136 = vsub.f32 1.0, %v1097
      %v1137 = vsub.f32 1.0, %v1090
      %v1138 = vsub.f32 1.0, %v1091
      %v1139 = vmul.f32 %v1135, %v1137
      %v1140 = vmul.f32 %v1136, %v1138
      %vm1141 = vcmp.gt.f32.partialorder %v1038, %v1133
      %vm1142 = vcmp.gt.f32.partialorder %v1039, %v1134
      %v1143 = vsel %vm1141, 1, 0
      %v1144 = vsel %vm1142, 1, 0
      %v1145 = vcvt.s32.f32 %v1143
      %v1146 = vcvt.s32.f32 %v1144
      %v1147 = vmul.f32 %v1096, %v1145
      %v1148 = vmul.f32 %v1097, %v1146
      %v1149 = vadd.f32 %v1139, %v1147
      %v1150 = vadd.f32 %v1140, %v1148
      %v1151 = vmul.f32 %v1149, %v1124
      %v1152 = vmul.f32 %v1150, %v1125
      %v1153 = vmul.f32 %v1133, %v1151
      %v1154 = vmul.f32 %v1134, %v1152
      %v1155 = vsub.f32 1.0, %v1151
      %v1156 = vsub.f32 1.0, %v1152
      %v1157 = vmul.f32 %v1038, %v1155
      %v1158 = vmul.f32 %v1039, %v1156
      %v1159 = vadd.f32 %v1153, %v1157
      %v1160 = vadd.f32 %v1154, %v1158
      %v1161 = vmax.f32 %v1096, %v1151
      %v1162 = vmax.f32 %v1097, %v1152
      %vm1163 = vcmp.gt.f32.partialorder %v1151, 0.5
      %vm1164 = vcmp.gt.f32.partialorder %v1152, 0.5
      %v1165 = vsel %vm1163, %v1080, %v1040
      %v1166 = vsel %vm1164, %v1080, %v1041
      %v1167 = vsel %vm1033, 1, 0
      %vm1168 = vcmp.eq.s32.totalorder %v1167, 1
      %v1169 = vsel %vm1168, %v1161, %v1034
      %v1170 = vsel %vm1168, %v1162, %v1035
      %1171 = vst [vmem:[#allocation2] sm:$0xff] %v1169
      %1172 = vst [vmem:[#allocation2 + $0x8] sm:$0xff] %v1170
      %v1173 = vsel %vm1168, %v1090, %v1036
      %v1174 = vsel %vm1168, %v1091, %v1037
      %1175 = vst [vmem:[#allocation14] sm:$0xff] %v1173
      %1176 = vst [vmem:[#allocation14 + $0x8] sm:$0xff] %v1174
      %v1177 = vsel %vm1168, %v1159, %v1038
      %v1178 = vsel %vm1168, %v1160, %v1039
      %1179 = vst [vmem:[#allocation3] sm:$0xff] %v1177
      %1180 = vst [vmem:[#allocation3 + $0x8] sm:$0xff] %v1178
      %v1181 = vsel %vm1168, %v1165, %v1040
      %v1182 = vsel %vm1168, %v1166, %v1041
      %1183 = vst [vmem:[#allocation4] sm:$0xff] %v1181
      %1184 = vst [vmem:[#allocation4 + $0x8] sm:$0xff] %v1182
      %v1185 = vrot.slane %v1089, 4
      %v1186 = vadd.f32 %v1089, %v1185
      %v1187 = vrot.slane %v1186, 2
      %v1188 = vadd.f32 %v1186, %v1187
      %v1189 = vrot.slane %v1188, 1
      %v1190 = vadd.f32 %v1188, %v1189
      %vm1191 = vcmp.lt.f32.partialorder %v1190, 0.5
      %vm1192 = vmand %vm1033, %vm1191
      %v1193 = vsel %vm1192, 1, 0
      %vm1194 = vcmp.gt.s32.totalorder %v1029, %v1193
      %v1195 = vsel %vm1194, %v1029, %v1193
      %v1196 = vadd.s32 %v1030, %v1167
      %vm1197 = vcmp.eq.s32.totalorder %v1195, 0
      %vm1198 = vcmp.lt.s32.totalorder %v1196, 256
      %vm1199 = vmand %vm1197, %vm1198
      %v1200 = vld [vmem:[#allocation2] sm:$0xff]
      %v1201 = vld [vmem:[#allocation2 + $0x8] sm:$0xff]
      %v1202 = vld [vmem:[#allocation14] sm:$0xff]
      %v1203 = vld [vmem:[#allocation14 + $0x8] sm:$0xff]
      %v1204 = vld [vmem:[#allocation3] sm:$0xff]
      %v1205 = vld [vmem:[#allocation3 + $0x8] sm:$0xff]
      %v1206 = vld [vmem:[#allocation4] sm:$0xff]
      %v1207 = vld [vmem:[#allocation4 + $0x8] sm:$0xff]
      %v1208 = vld [vmem:[#allocation5] sm:$0xff]
      %v1209 = vld [vmem:[#allocation5 + $0x8] sm:$0xff]
      %v1210 = vld [vmem:[#allocation6] sm:$0xff]
      %v1211 = vld [vmem:[#allocation6 + $0x8] sm:$0xff]
      %v1212 = vld [vmem:[#allocation12] sm:$0xff]
      %v1213 = vld [vmem:[#allocation12 + $0x8] sm:$0xff]
      %v1214 = vmul.f32 %v1204, 0.5
      %v1215 = vmul.f32 %v1205, 0.5
      %v1216 = vadd.f32 %v1214, %v1208
      %v1217 = vadd.f32 %v1215, %v1209
      %v1220 = vand.u32 %v1216, 4294967040
      %v1221 = vand.u32 %v1217, 4294967040
      %v1222 = vor.u32 %v1220, %v77
      %v1223 = vor.u32 %v1221, %v78
      %vm1224 = vcmp.gt.f32.partialorder %v1200, 0.5
      %vm1225 = vcmp.gt.f32.partialorder %v1201, 0.5
      %v1226 = vsel %vm1224, %v1222, 2147483647
      %v1227 = vsel %vm1225, %v1223, 2147483647
      %vm1228 = vcmp.lt.s32.totalorder %v1226, %v1227
      %v1229 = vsel %vm1228, %v1226, %v1227
      %v1230 = vand.u32 %v1229, 65535
      %v1231 = vshra.s32 %v1229, 16
      %v1232 = vcvt.s32.f32 %v1230
      %v1233 = vcvt.s32.f32 %v1231
      %1234 = vmin.xlane.f32.xlu0 %v1233
      %v1235 = vpop.xlane.xlu0 %1234
      %vm1236 = vcmp.eq.f32.partialorder %v1233, %v1235
      %v1237 = vsel %vm1236, %v1232, inf
      %1238 = vmin.xlane.f32.xlu0 %v1237
      %v1239 = vpop.xlane.xlu0 %1238
      %v1240 = vcvt.f32.s32 %v1239
      %v1241 = vcvt.f32.s32 %v1235
      %v1242 = vshll.u32 %v1241, 16
      %v1243 = vadd.s32 %v1242, %v1240
      %v1244 = vand.u32 %v1243, 255
      %vm1245 = vcmp.lt.s32.totalorder %v1244, 255
      %v1246 = vsel %vm1245, %v1244, 255
      %vm1247 = vcmp.eq.s32.totalorder %v77, %v1246
      %vm1248 = vcmp.eq.s32.totalorder %v78, %v1246
      %v1249 = vsel %vm1247, 1, 0
      %v1250 = vsel %vm1248, 1, 0
      %v1251 = vcvt.s32.f32 %v1249
      %v1252 = vcvt.s32.f32 %v1250
      %vm1253 = vcmp.ne.s32.totalorder %v1246, %v102
      %v1254 = vsel %vm1253, 1, 0
      %v1255 = vcvt.s32.f32 %v1254
      %v1256 = vmax.f32 %v1202, %v1251
      %v1257 = vmax.f32 %v1203, %v1252
      %v1258 = vmul.f32 %v1255, %v1251
      %v1259 = vmul.f32 %v1255, %v1252
      %v1260 = vsub.f32 %v1200, %v1258
      %v1261 = vsub.f32 %v1201, %v1259
      %v1262 = vmax.f32 %v1260, 0.0
      %v1263 = vmax.f32 %v1261, 0.0
      %v1264 = vshra.s32 %v1246, 4
      %v1265 = vcvt.s32.f32 %v1264
      %v1266 = vand.u32 %v1246, 15
      %v1267 = vcvt.s32.f32 %v1266
      %v1268 = vsub.f32 %v107, %v1265
      %v1269 = vsub.f32 %v111, %v1265
      %v1270 = vand.u32 2147483647, %v1268
      %v1271 = vand.u32 2147483647, %v1269
      %vm1272 = vcmp.le.f32.partialorder %v1270, 1.0
      %vm1273 = vcmp.le.f32.partialorder %v1271, 1.0
      %v1274 = vsub.f32 %v123, %v1267
      %v1275 = vsub.f32 %v127, %v1267
      %v1276 = vand.u32 2147483647, %v1274
      %v1277 = vand.u32 2147483647, %v1275
      %vm1278 = vcmp.le.f32.partialorder %v1276, 1.0
      %vm1279 = vcmp.le.f32.partialorder %v1277, 1.0
      %vm1280 = vmand %vm1272, %vm1278
      %vm1281 = vmand %vm1273, %vm1279
      %vm1282 = vmxor %vm1247, 1
      %vm1283 = vmxor %vm1248, 1
      %vm1284 = vmand %vm1280, %vm1282
      %vm1285 = vmand %vm1281, %vm1283
      %v1286 = vsel %vm1284, 1, 0
      %v1287 = vsel %vm1285, 1, 0
      %v1288 = vcvt.s32.f32 %v1286
      %v1289 = vcvt.s32.f32 %v1287
      %v1290 = vmul.f32 %v1288, %v1212
      %v1291 = vmul.f32 %v1289, %v1213
      %v1292 = vadd.f32 %v1204, %v1210
      %v1293 = vadd.f32 %v1205, %v1211
      %v1294 = vmul.f32 %v1292, %v1251
      %v1295 = vmul.f32 %v1293, %v1252
      %v1296 = vadd.f32 %v1294, %v1295
      %1297 = vadd.xlane.f32.xlu0 %v1296
      %v1298 = vpop.xlane.xlu0 %1297
      %v1299 = vmul.f32 %v1298, %v1288
      %v1300 = vmul.f32 %v1298, %v1289
      %v1301 = vsub.f32 1.0, %v1262
      %v1302 = vsub.f32 1.0, %v1263
      %v1303 = vsub.f32 1.0, %v1256
      %v1304 = vsub.f32 1.0, %v1257
      %v1305 = vmul.f32 %v1301, %v1303
      %v1306 = vmul.f32 %v1302, %v1304
      %vm1307 = vcmp.gt.f32.partialorder %v1204, %v1299
      %vm1308 = vcmp.gt.f32.partialorder %v1205, %v1300
      %v1309 = vsel %vm1307, 1, 0
      %v1310 = vsel %vm1308, 1, 0
      %v1311 = vcvt.s32.f32 %v1309
      %v1312 = vcvt.s32.f32 %v1310
      %v1313 = vmul.f32 %v1262, %v1311
      %v1314 = vmul.f32 %v1263, %v1312
      %v1315 = vadd.f32 %v1305, %v1313
      %v1316 = vadd.f32 %v1306, %v1314
      %v1317 = vmul.f32 %v1315, %v1290
      %v1318 = vmul.f32 %v1316, %v1291
      %v1319 = vmul.f32 %v1299, %v1317
      %v1320 = vmul.f32 %v1300, %v1318
      %v1321 = vsub.f32 1.0, %v1317
      %v1322 = vsub.f32 1.0, %v1318
      %v1323 = vmul.f32 %v1204, %v1321
      %v1324 = vmul.f32 %v1205, %v1322
      %v1325 = vadd.f32 %v1319, %v1323
      %v1326 = vadd.f32 %v1320, %v1324
      %v1327 = vmax.f32 %v1262, %v1317
      %v1328 = vmax.f32 %v1263, %v1318
      %vm1329 = vcmp.gt.f32.partialorder %v1317, 0.5
      %vm1330 = vcmp.gt.f32.partialorder %v1318, 0.5
      %v1331 = vsel %vm1329, %v1246, %v1206
      %v1332 = vsel %vm1330, %v1246, %v1207
      %v1333 = vsel %vm1199, 1, 0
      %vm1334 = vcmp.eq.s32.totalorder %v1333, 1
      %v1335 = vsel %vm1334, %v1327, %v1200
      %v1336 = vsel %vm1334, %v1328, %v1201
      %1337 = vst [vmem:[#allocation2] sm:$0xff] %v1335
      %1338 = vst [vmem:[#allocation2 + $0x8] sm:$0xff] %v1336
      %v1339 = vsel %vm1334, %v1256, %v1202
      %v1340 = vsel %vm1334, %v1257, %v1203
      %1341 = vst [vmem:[#allocation14] sm:$0xff] %v1339
      %1342 = vst [vmem:[#allocation14 + $0x8] sm:$0xff] %v1340
      %v1343 = vsel %vm1334, %v1325, %v1204
      %v1344 = vsel %vm1334, %v1326, %v1205
      %1345 = vst [vmem:[#allocation3] sm:$0xff] %v1343
      %1346 = vst [vmem:[#allocation3 + $0x8] sm:$0xff] %v1344
      %v1347 = vsel %vm1334, %v1331, %v1206
      %v1348 = vsel %vm1334, %v1332, %v1207
      %1349 = vst [vmem:[#allocation4] sm:$0xff] %v1347
      %1350 = vst [vmem:[#allocation4 + $0x8] sm:$0xff] %v1348
      %v1351 = vrot.slane %v1255, 4
      %v1352 = vadd.f32 %v1255, %v1351
      %v1353 = vrot.slane %v1352, 2
      %v1354 = vadd.f32 %v1352, %v1353
      %v1355 = vrot.slane %v1354, 1
      %v1356 = vadd.f32 %v1354, %v1355
      %vm1357 = vcmp.lt.f32.partialorder %v1356, 0.5
      %vm1358 = vmand %vm1199, %vm1357
      %v1359 = vsel %vm1358, 1, 0
      %vm1360 = vcmp.gt.s32.totalorder %v1195, %v1359
      %v1361 = vsel %vm1360, %v1195, %v1359
      %v1362 = vadd.s32 %v1196, %v1333
      %vm1363 = vcmp.eq.s32.totalorder %v1361, 0
      %vm1364 = vcmp.lt.s32.totalorder %v1362, 256
      %vm1365 = vmand %vm1363, %vm1364
      %v1366 = vld [vmem:[#allocation2] sm:$0xff]
      %v1367 = vld [vmem:[#allocation2 + $0x8] sm:$0xff]
      %v1368 = vld [vmem:[#allocation14] sm:$0xff]
      %v1369 = vld [vmem:[#allocation14 + $0x8] sm:$0xff]
      %v1370 = vld [vmem:[#allocation3] sm:$0xff]
      %v1371 = vld [vmem:[#allocation3 + $0x8] sm:$0xff]
      %v1372 = vld [vmem:[#allocation4] sm:$0xff]
      %v1373 = vld [vmem:[#allocation4 + $0x8] sm:$0xff]
      %v1374 = vld [vmem:[#allocation5] sm:$0xff]
      %v1375 = vld [vmem:[#allocation5 + $0x8] sm:$0xff]
      %v1376 = vld [vmem:[#allocation6] sm:$0xff]
      %v1377 = vld [vmem:[#allocation6 + $0x8] sm:$0xff]
      %v1378 = vld [vmem:[#allocation12] sm:$0xff]
      %v1379 = vld [vmem:[#allocation12 + $0x8] sm:$0xff]
      %v1380 = vmul.f32 %v1370, 0.5
      %v1381 = vmul.f32 %v1371, 0.5
      %v1382 = vadd.f32 %v1380, %v1374
      %v1383 = vadd.f32 %v1381, %v1375
      %v1386 = vand.u32 %v1382, 4294967040
      %v1387 = vand.u32 %v1383, 4294967040
      %v1388 = vor.u32 %v1386, %v77
      %v1389 = vor.u32 %v1387, %v78
      %vm1390 = vcmp.gt.f32.partialorder %v1366, 0.5
      %vm1391 = vcmp.gt.f32.partialorder %v1367, 0.5
      %v1392 = vsel %vm1390, %v1388, 2147483647
      %v1393 = vsel %vm1391, %v1389, 2147483647
      %vm1394 = vcmp.lt.s32.totalorder %v1392, %v1393
      %v1395 = vsel %vm1394, %v1392, %v1393
      %v1396 = vand.u32 %v1395, 65535
      %v1397 = vshra.s32 %v1395, 16
      %v1398 = vcvt.s32.f32 %v1396
      %v1399 = vcvt.s32.f32 %v1397
      %1400 = vmin.xlane.f32.xlu0 %v1399
      %v1401 = vpop.xlane.xlu0 %1400
      %vm1402 = vcmp.eq.f32.partialorder %v1399, %v1401
      %v1403 = vsel %vm1402, %v1398, inf
      %1404 = vmin.xlane.f32.xlu0 %v1403
      %v1405 = vpop.xlane.xlu0 %1404
      %v1406 = vcvt.f32.s32 %v1405
      %v1407 = vcvt.f32.s32 %v1401
      %v1408 = vshll.u32 %v1407, 16
      %v1409 = vadd.s32 %v1408, %v1406
      %v1410 = vand.u32 %v1409, 255
      %vm1411 = vcmp.lt.s32.totalorder %v1410, 255
      %v1412 = vsel %vm1411, %v1410, 255
      %vm1413 = vcmp.eq.s32.totalorder %v77, %v1412
      %vm1414 = vcmp.eq.s32.totalorder %v78, %v1412
      %v1415 = vsel %vm1413, 1, 0
      %v1416 = vsel %vm1414, 1, 0
      %v1417 = vcvt.s32.f32 %v1415
      %v1418 = vcvt.s32.f32 %v1416
      %vm1419 = vcmp.ne.s32.totalorder %v1412, %v102
      %v1420 = vsel %vm1419, 1, 0
      %v1421 = vcvt.s32.f32 %v1420
      %v1422 = vmax.f32 %v1368, %v1417
      %v1423 = vmax.f32 %v1369, %v1418
      %v1424 = vmul.f32 %v1421, %v1417
      %v1425 = vmul.f32 %v1421, %v1418
      %v1426 = vsub.f32 %v1366, %v1424
      %v1427 = vsub.f32 %v1367, %v1425
      %v1428 = vmax.f32 %v1426, 0.0
      %v1429 = vmax.f32 %v1427, 0.0
      %v1430 = vshra.s32 %v1412, 4
      %v1431 = vcvt.s32.f32 %v1430
      %v1432 = vand.u32 %v1412, 15
      %v1433 = vcvt.s32.f32 %v1432
      %v1434 = vsub.f32 %v107, %v1431
      %v1435 = vsub.f32 %v111, %v1431
      %v1436 = vand.u32 2147483647, %v1434
      %v1437 = vand.u32 2147483647, %v1435
      %vm1438 = vcmp.le.f32.partialorder %v1436, 1.0
      %vm1439 = vcmp.le.f32.partialorder %v1437, 1.0
      %v1440 = vsub.f32 %v123, %v1433
      %v1441 = vsub.f32 %v127, %v1433
      %v1442 = vand.u32 2147483647, %v1440
      %v1443 = vand.u32 2147483647, %v1441
      %vm1444 = vcmp.le.f32.partialorder %v1442, 1.0
      %vm1445 = vcmp.le.f32.partialorder %v1443, 1.0
      %vm1446 = vmand %vm1438, %vm1444
      %vm1447 = vmand %vm1439, %vm1445
      %vm1448 = vmxor %vm1413, 1
      %vm1449 = vmxor %vm1414, 1
      %vm1450 = vmand %vm1446, %vm1448
      %vm1451 = vmand %vm1447, %vm1449
      %v1452 = vsel %vm1450, 1, 0
      %v1453 = vsel %vm1451, 1, 0
      %v1454 = vcvt.s32.f32 %v1452
      %v1455 = vcvt.s32.f32 %v1453
      %v1456 = vmul.f32 %v1454, %v1378
      %v1457 = vmul.f32 %v1455, %v1379
      %v1458 = vadd.f32 %v1370, %v1376
      %v1459 = vadd.f32 %v1371, %v1377
      %v1460 = vmul.f32 %v1458, %v1417
      %v1461 = vmul.f32 %v1459, %v1418
      %v1462 = vadd.f32 %v1460, %v1461
      %1463 = vadd.xlane.f32.xlu0 %v1462
      %v1464 = vpop.xlane.xlu0 %1463
      %v1465 = vmul.f32 %v1464, %v1454
      %v1466 = vmul.f32 %v1464, %v1455
      %v1467 = vsub.f32 1.0, %v1428
      %v1468 = vsub.f32 1.0, %v1429
      %v1469 = vsub.f32 1.0, %v1422
      %v1470 = vsub.f32 1.0, %v1423
      %v1471 = vmul.f32 %v1467, %v1469
      %v1472 = vmul.f32 %v1468, %v1470
      %vm1473 = vcmp.gt.f32.partialorder %v1370, %v1465
      %vm1474 = vcmp.gt.f32.partialorder %v1371, %v1466
      %v1475 = vsel %vm1473, 1, 0
      %v1476 = vsel %vm1474, 1, 0
      %v1477 = vcvt.s32.f32 %v1475
      %v1478 = vcvt.s32.f32 %v1476
      %v1479 = vmul.f32 %v1428, %v1477
      %v1480 = vmul.f32 %v1429, %v1478
      %v1481 = vadd.f32 %v1471, %v1479
      %v1482 = vadd.f32 %v1472, %v1480
      %v1483 = vmul.f32 %v1481, %v1456
      %v1484 = vmul.f32 %v1482, %v1457
      %v1485 = vmul.f32 %v1465, %v1483
      %v1486 = vmul.f32 %v1466, %v1484
      %v1487 = vsub.f32 1.0, %v1483
      %v1488 = vsub.f32 1.0, %v1484
      %v1489 = vmul.f32 %v1370, %v1487
      %v1490 = vmul.f32 %v1371, %v1488
      %v1491 = vadd.f32 %v1485, %v1489
      %v1492 = vadd.f32 %v1486, %v1490
      %v1493 = vmax.f32 %v1428, %v1483
      %v1494 = vmax.f32 %v1429, %v1484
      %vm1495 = vcmp.gt.f32.partialorder %v1483, 0.5
      %vm1496 = vcmp.gt.f32.partialorder %v1484, 0.5
      %v1497 = vsel %vm1495, %v1412, %v1372
      %v1498 = vsel %vm1496, %v1412, %v1373
      %v1499 = vsel %vm1365, 1, 0
      %vm1500 = vcmp.eq.s32.totalorder %v1499, 1
      %v1501 = vsel %vm1500, %v1493, %v1366
      %v1502 = vsel %vm1500, %v1494, %v1367
      %1503 = vst [vmem:[#allocation2] sm:$0xff] %v1501
      %1504 = vst [vmem:[#allocation2 + $0x8] sm:$0xff] %v1502
      %v1505 = vsel %vm1500, %v1422, %v1368
      %v1506 = vsel %vm1500, %v1423, %v1369
      %1507 = vst [vmem:[#allocation14] sm:$0xff] %v1505
      %1508 = vst [vmem:[#allocation14 + $0x8] sm:$0xff] %v1506
      %v1509 = vsel %vm1500, %v1491, %v1370
      %v1510 = vsel %vm1500, %v1492, %v1371
      %1511 = vst [vmem:[#allocation3] sm:$0xff] %v1509
      %1512 = vst [vmem:[#allocation3 + $0x8] sm:$0xff] %v1510
      %v1513 = vsel %vm1500, %v1497, %v1372
      %v1514 = vsel %vm1500, %v1498, %v1373
      %1515 = vst [vmem:[#allocation4] sm:$0xff] %v1513
      %1516 = vst [vmem:[#allocation4 + $0x8] sm:$0xff] %v1514
      %v1517 = vrot.slane %v1421, 4
      %v1518 = vadd.f32 %v1421, %v1517
      %v1519 = vrot.slane %v1518, 2
      %v1520 = vadd.f32 %v1518, %v1519
      %v1521 = vrot.slane %v1520, 1
      %v1522 = vadd.f32 %v1520, %v1521
      %vm1523 = vcmp.lt.f32.partialorder %v1522, 0.5
      %vm1524 = vmand %vm1365, %vm1523
      %v1525 = vsel %vm1524, 1, 0
      %vm1526 = vcmp.gt.s32.totalorder %v1361, %v1525
      %v1527 = vsel %vm1526, %v1361, %v1525
      %v1528 = vadd.s32 %v1362, %v1499
    $region46: #{tpu_custom_call.1} parent=1 // loop_footer
      _
    $region47: #{tpu_custom_call.1} parent=1 // loop_footer_branch
      %189 = sbr.rel target = $region43
    $region48: #{tpu_custom_call.1} parent=1 // loop_exit
      _
    %v1529 = vsub.s32 %v190, 1
    %v1530 = vsel %vm83, 1, 0
    %v1531 = vsel %vm84, 1, 0
    %1532 = vst [vmem:[#allocation15] sm:$0xff] %v1530
    %1533 = vst [vmem:[#allocation15 + $0x8] sm:$0xff] %v1531
    %v1534 = vld [vmem:[#allocation4] sm:$0xff]
    %v1535 = vld [vmem:[#allocation4 + $0x8] sm:$0xff]
    %v1536 = vsel %vm83, %v1534, 0
    %v1537 = vsel %vm84, %v1535, 0
    %v1538 = vadd.s32 %v1536, %v1537
    %v1539 = vand.u32 %v1538, 65535
    %v1540 = vshrl.u32 %v1538, 16
    %v1541 = vcvt.s32.f32 %v1539
    %v1542 = vcvt.s32.f32 %v1540
    %1543 = vadd.xlane.f32.xlu0 %v1541
    %v1544 = vpop.xlane.xlu0 %1543
    %1545 = vadd.xlane.f32.xlu0 %v1542
    %v1546 = vpop.xlane.xlu0 %1545
    %v1547 = vcvt.f32.s32 %v1544
    %v1548 = vcvt.f32.s32 %v1546
    %v1549 = vshll.u32 %v1548, 16
    %v1550 = vadd.s32 %v1549, %v1547
    // While loop
    $region49: #{tpu_custom_call.1} parent=1 // loop_pre_header
      _
    $region50: #{tpu_custom_call.1} parent=1 // loop_header
      %v1552 = vphi 0, %v1586
      %v1553 = vphi %v1550, %v1585
      %vm1554 = vcmp.lt.s32.totalorder %v1552, %v1529
      %v1555 = vsel %vm1554, 1, 0
      %s1556 = vtos %v1555
      %p1557 = scmp.gt.s32.totalorder %s1556, 0
      %p1558 = pneg %p1557
    $region51: #{tpu_custom_call.1} parent=1 // loop_header_branch
      %1560 = sbr.rel (%p1558) target = $region55
    $region52: #{tpu_custom_call.1} parent=1 // loop_body
      %vm1561 = vcmp.eq.s32.totalorder %v77, %v1553
      %vm1562 = vcmp.eq.s32.totalorder %v78, %v1553
      %v1563 = vld [vmem:[#allocation15] sm:$0xff]
      %v1564 = vld [vmem:[#allocation15 + $0x8] sm:$0xff]
      %v1565 = vsel %vm1561, 1, %v1563
      %v1566 = vsel %vm1562, 1, %v1564
      %1567 = vst [vmem:[#allocation15] sm:$0xff] %v1565
      %1568 = vst [vmem:[#allocation15 + $0x8] sm:$0xff] %v1566
      %v1569 = vld [vmem:[#allocation4] sm:$0xff]
      %v1570 = vld [vmem:[#allocation4 + $0x8] sm:$0xff]
      %v1571 = vsel %vm1561, %v1569, 0
      %v1572 = vsel %vm1562, %v1570, 0
      %v1573 = vadd.s32 %v1571, %v1572
      %v1574 = vand.u32 %v1573, 65535
      %v1575 = vshrl.u32 %v1573, 16
      %v1576 = vcvt.s32.f32 %v1574
      %v1577 = vcvt.s32.f32 %v1575
      %1578 = vadd.xlane.f32.xlu0 %v1576
      %v1579 = vpop.xlane.xlu0 %1578
      %1580 = vadd.xlane.f32.xlu0 %v1577
      %v1581 = vpop.xlane.xlu0 %1580
      %v1582 = vcvt.f32.s32 %v1579
      %v1583 = vcvt.f32.s32 %v1581
      %v1584 = vshll.u32 %v1583, 16
      %v1585 = vadd.s32 %v1584, %v1582
      %v1586 = vadd.s32 %v1552, 1
    $region53: #{tpu_custom_call.1} parent=1 // loop_footer
      _
    $region54: #{tpu_custom_call.1} parent=1 // loop_footer_branch
      %1551 = sbr.rel target = $region50
    $region55: #{tpu_custom_call.1} parent=1 // loop_exit
      _
    // Predicated region
    $region56: #{tpu_custom_call.1} parent=1 // pred_check
      _
    $region57: #{tpu_custom_call.1} parent=1 // pred_check_branch
      %1588 = sbr.rel (0) target = $region59
    $region58: #{tpu_custom_call.1} parent=1 // pred_region
      %s1590 = ssub.s32 256, 256
      %1591 = vsyncadd [#allocation8], %s1590
      %s1593 = sshll.u32 [#allocation14], 4
      %s1594 = int_to_ptr.vmem [resolvable:$true] %s1593
      %1596 = dma.vmem_to_hbm [thread:$0]  %s1594, 256, %s6, [#allocation8]
    $region59: #{tpu_custom_call.1} parent=1 // pred_fallthru
      _
    // Predicated region
    $region60: #{tpu_custom_call.1} parent=1 // pred_check
      _
    $region61: #{tpu_custom_call.1} parent=1 // pred_check_branch
      %1598 = sbr.rel (0) target = $region63
    $region62: #{tpu_custom_call.1} parent=1 // pred_region
      %s1600 = ssub.s32 256, 256
      %1601 = vsyncadd [#allocation16], %s1600
      %s1603 = sshll.u32 [#allocation15], 4
      %s1604 = int_to_ptr.vmem [resolvable:$true] %s1603
      %1606 = dma.vmem_to_hbm [thread:$0]  %s1604, 256, %s7, [#allocation16]
    $region63: #{tpu_custom_call.1} parent=1 // pred_fallthru
      _
    // Predicated region
    $region64: #{tpu_custom_call.1} parent=1 // pred_check
      _
    $region65: #{tpu_custom_call.1} parent=1 // pred_check_branch
      %1608 = sbr.rel (0) target = $region67
    $region66: #{tpu_custom_call.1} parent=1 // pred_region
      %1609 = dma.done [#allocation8], 256
    $region67: #{tpu_custom_call.1} parent=1 // pred_fallthru
      _
    // Predicated region
    $region68: #{tpu_custom_call.1} parent=1 // pred_check
      _
    $region69: #{tpu_custom_call.1} parent=1 // pred_check_branch
      %1611 = sbr.rel (0) target = $region71
    $region70: #{tpu_custom_call.1} parent=1 // pred_region
      %1612 = dma.done [#allocation16], 256
    $region71: #{tpu_custom_call.1} parent=1 // pred_fallthru
      _
    %1613 = vsyncpa [#allocation7], 1
    %1614 = vsyncpa [#allocation10], 1
    %1615 = vsyncpa [#allocation13], 1
    %1616 = vsyncpa [#allocation8], 1
    %1617 = vsyncpa [#allocation16], 1

</llo_original>
